<compile_context>
chip_gen: v6e
topology: v6e:2x2x1
jax: 0.10.0
libtpu: 0.0.40
codegen_flags: <defaults>
</compile_context>

<pallas_src>
import jax
import jax.numpy as jnp
import numpy as np
from jax.experimental import pallas as pl
from jax.experimental.pallas import tpu as pltpu

H, W = 14, 12                 # spatial size implied by nn.Linear(8*14*12, 124)
C_IN, C1, C2 = 1, 3, 8
K = 3
IN_FLAT = C_IN * H * W        # 168
MID_FLAT = C1 * H * W         # 504
FLAT = C2 * H * W             # 1344
HID = 124
HID_PAD = 128                 # MXU-friendly padding of the hidden layer
OUT = 27
MAX_TB = 128                  # batch tile per grid step


# ---------------------------------------------------------------------------
# Fused kernel: x(TB,168) -> conv1 -> conv2 -> fc1 -> fc2 -> softmax (TB,27)
# All four layers are MXU matmuls; BN (eval) + conv bias are folded into the
# dense conv matrices / bias vectors on the host.
# ---------------------------------------------------------------------------
def fused_kernel(x_ref, a1_ref, t1_ref, a2_ref, t2_ref,
                 w1_ref, b1_ref, w2_ref, b2_ref, out_ref):
    x = x_ref[...]                                                    # (TB, 168)

    # conv1 (as dense matmul, BN scale folded into a1, bias+BN shift in t1) + ReLU
    h = jnp.dot(x, a1_ref[...], preferred_element_type=jnp.float32)  # (TB, 504)
    h = jnp.maximum(h + t1_ref[...], 0.0)

    # conv2 + BN + ReLU
    h = jnp.dot(h, a2_ref[...], preferred_element_type=jnp.float32)  # (TB, 1344)
    h = jnp.maximum(h + t2_ref[...], 0.0)

    # Dropout(p=0.1) -> identity at inference; Flatten order (c,h,w) is already
    # the column order of a2 / the row order of w1.

    # fc1 + ReLU (hidden padded 124 -> 128 with zeros; exact)
    h = jnp.dot(h, w1_ref[...], preferred_element_type=jnp.float32)  # (TB, 128)
    h = jnp.maximum(h + b1_ref[...], 0.0)

    # fc2 + softmax(dim=1)
    logits = jnp.dot(h, w2_ref[...], preferred_element_type=jnp.float32)
    logits = logits + b2_ref[...]                                     # (TB, 27)
    m = jnp.max(logits, axis=-1, keepdims=True)
    e = jnp.exp(logits - m)
    d = jnp.sum(e, axis=-1, keepdims=True)
    r = pl.reciprocal(d, approx=True)      # EUP slot (idle here)
    r = r * (2.0 - d * r)                  # one Newton step -> f32-accurate
    out_ref[...] = e * r


def model2_forward(x, params):
    B = x.shape[0]
    xf = x.reshape(B, IN_FLAT)             # free metadata reshape (NCHW flatten)
    TB = B if B <= MAX_TB else MAX_TB      # block == full dim when B <= 128
    grid = (pl.cdiv(B, TB),)

    def wspec(arr):
        shape = arr.shape
        nd = len(shape)
        return pl.BlockSpec(shape, lambda b: (0,) * nd)   # resident weights

    return pl.pallas_call(
        fused_kernel,
        out_shape=jax.ShapeDtypeStruct((B, OUT), jnp.float32),
        grid=grid,
        in_specs=[
            pl.BlockSpec((TB, IN_FLAT), lambda b: (b, 0)),
            wspec(params["A1"]), wspec(params["t1"]),
            wspec(params["A2"]), wspec(params["t2"]),
            wspec(params["fc1_wt"]), wspec(params["fc1_b"]),
            wspec(params["fc2_wt"]), wspec(params["fc2_b"]),
        ],
        out_specs=pl.BlockSpec((TB, OUT), lambda b: (b, 0)),
        compiler_params=pltpu.CompilerParams(
            dimension_semantics=("parallel",),
            vmem_limit_bytes=32 * 1024 * 1024),
    )(xf, params["A1"], params["t1"], params["A2"], params["t2"],
      params["fc1_wt"], params["fc1_b"], params["fc2_wt"], params["fc2_b"])


# ---------------------------------------------------------------------------
# Host-side weight preparation
# ---------------------------------------------------------------------------
def conv_to_dense_folded(w, scale, height, width):
    """Dense matrix A (C_in*H*W, C_out*H*W) so that x_flat @ A equals the
    NCHW-flattened output of Conv2d(3x3, stride 1, pad 1) with the per-channel
    BN scale folded into the columns (bias handled separately)."""
    w = np.asarray(w, np.float32)
    scale = np.asarray(scale, np.float32)
    c_out, c_in, kh, kw = w.shape
    A = np.zeros((c_in, height, width, c_out, height, width), np.float32)
    for di in range(kh):
        for dj in range(kw):
            oh, ow = di - 1, dj - 1
            h_lo, h_hi = max(0, -oh), min(height, height - oh)
            w_lo, w_hi = max(0, -ow), min(width, width - ow)
            hh = np.arange(h_lo, h_hi)[:, None]
            ww = np.arange(w_lo, w_hi)[None, :]
            for co in range(c_out):
                for ci in range(c_in):
                    A[ci, hh + oh, ww + ow, co, hh, ww] = w[co, ci, di, dj] * scale[co]
    return A.reshape(c_in * height * width, c_out * height * width)


def init_params(key):
    ks = jax.random.split(key, 8)

    def u(k, shape, fan_in):
        bound = 1.0 / np.sqrt(fan_in)
        return jax.random.uniform(k, shape, jnp.float32, -bound, bound)

    # PyTorch-style Conv2d / Linear params (deterministic)
    raw = dict(
        w1=u(ks[0], (C1, C_IN, K, K), C_IN * K * K),
        b1=u(ks[1], (C1,), C_IN * K * K),
        w2=u(ks[2], (C2, C1, K, K), C1 * K * K),
        b2=u(ks[3], (C2,), C1 * K * K),
        fc1_w=u(ks[4], (HID, FLAT), FLAT),
        fc1_b=u(ks[5], (HID,), FLAT),
        fc2_w=u(ks[6], (OUT, HID), HID),
        fc2_b=u(ks[7], (OUT,), HID),
    )

    # BatchNorm2d eval defaults: gamma=1, beta=0, running_mean=0, running_var=1
    eps = 1e-5
    s1 = np.ones(C1, np.float32) / np.sqrt(1.0 + eps)
    s2 = np.ones(C2, np.float32) / np.sqrt(1.0 + eps)
    t1 = np.asarray(raw["b1"], np.float32) * s1     # (b - mean) * s + beta
    t2 = np.asarray(raw["b2"], np.float32) * s2

    A1 = conv_to_dense_folded(raw["w1"], s1, H, W)            # (168, 504)
    A2 = conv_to_dense_folded(raw["w2"], s2, H, W)            # (504, 1344)
    t1v = np.repeat(t1, H * W)[None, :]                        # (1, 504)
    t2v = np.repeat(t2, H * W)[None, :]                        # (1, 1344)

    # fc1: pad hidden 124 -> 128 (zero columns / zero bias), fc2: zero rows.
    fc1_wt = np.zeros((FLAT, HID_PAD), np.float32)
    fc1_wt[:, :HID] = np.asarray(raw["fc1_w"], np.float32).T
    fc1_b = np.zeros((1, HID_PAD), np.float32)
    fc1_b[0, :HID] = np.asarray(raw["fc1_b"], np.float32)
    fc2_wt = np.zeros((HID_PAD, OUT), np.float32)
    fc2_wt[:HID, :] = np.asarray(raw["fc2_w"], np.float32).T
    fc2_b = np.asarray(raw["fc2_b"], np.float32)[None, :]

    params = dict(
        A1=jnp.asarray(A1), t1=jnp.asarray(t1v),
        A2=jnp.asarray(A2), t2=jnp.asarray(t2v),
        fc1_wt=jnp.asarray(fc1_wt), fc1_b=jnp.asarray(fc1_b),
        fc2_wt=jnp.asarray(fc2_wt), fc2_b=jnp.asarray(fc2_b),
    )
    return params, raw


# ---------------------------------------------------------------------------
# Pure-JAX reference (for in-script correctness check)
# ---------------------------------------------------------------------------
def reference_forward(x, raw):
    eps = 1e-5

    def block(z, w, b):
        y = jax.lax.conv_general_dilated(
            z, w, window_strides=(1, 1), padding=((1, 1), (1, 1)),
            dimension_numbers=("NCHW", "OIHW", "NCHW"))
        y = y + b[None, :, None, None]
        y = y / jnp.sqrt(1.0 + eps)         # BN eval with default stats
        return jnp.maximum(y, 0.0)

    h = block(x, raw["w1"], raw["b1"])
    h = block(h, raw["w2"], raw["b2"])
    h = h.reshape(x.shape[0], -1)
    h = jnp.maximum(h @ raw["fc1_w"].T + raw["fc1_b"], 0.0)
    logits = h @ raw["fc2_w"].T + raw["fc2_b"]
    return jax.nn.softmax(logits, axis=-1)


if __name__ == "__main__":
    key = jax.random.PRNGKey(0)
    pkey, xkey = jax.random.split(key)
    params, raw = init_params(pkey)
    x = jax.random.normal(xkey, (2, C_IN, H, W), jnp.float32)

    fwd = jax.jit(lambda xx: model2_forward(xx, params))
    out = jax.block_until_ready(fwd(x))

    assert out.shape == (2, OUT)
    ref = jax.block_until_ready(reference_forward(x, raw))
    np.testing.assert_allclose(np.asarray(out), np.asarray(ref),
                               atol=1e-4, rtol=1e-4)
    row_sums = np.asarray(jnp.sum(out, axis=-1))
    assert np.allclose(row_sums, 1.0, atol=1e-3), row_sums
    print("KERNEL_OK")
</pallas_src>

<mosaic_0001>
module attributes {stable_mosaic.version = 11 : i64} {
  func.func @fused_kernel(%arg0: i32, %arg1: memref<2x168xf32, #tpu.memory_space<vmem>>, %arg2: memref<168x504xf32, #tpu.memory_space<vmem>>, %arg3: memref<1x504xf32, #tpu.memory_space<vmem>>, %arg4: memref<504x1344xf32, #tpu.memory_space<vmem>>, %arg5: memref<1x1344xf32, #tpu.memory_space<vmem>>, %arg6: memref<1344x128xf32, #tpu.memory_space<vmem>>, %arg7: memref<1x128xf32, #tpu.memory_space<vmem>>, %arg8: memref<128x27xf32, #tpu.memory_space<vmem>>, %arg9: memref<1x27xf32, #tpu.memory_space<vmem>>, %arg10: memref<2x27xf32, #tpu.memory_space<vmem>>) attributes {dimension_semantics = [#tpu.dimension_semantics<parallel>], iteration_bounds = array<i64: 1>, scalar_prefetch = 0 : i64, scratch_operands = 0 : i64, tpu.core_type = #tpu.core_type<tc>, window_params = [{transform_indices = @transform_0, window_bounds = array<i64: 2, 168>}, {pipeline_mode = #tpu.pipeline_mode<synchronous>, transform_indices = @transform_1, window_bounds = array<i64: 168, 504>}, {pipeline_mode = #tpu.pipeline_mode<synchronous>, transform_indices = @transform_2, window_bounds = array<i64: 1, 504>}, {pipeline_mode = #tpu.pipeline_mode<synchronous>, transform_indices = @transform_3, window_bounds = array<i64: 504, 1344>}, {pipeline_mode = #tpu.pipeline_mode<synchronous>, transform_indices = @transform_4, window_bounds = array<i64: 1, 1344>}, {pipeline_mode = #tpu.pipeline_mode<synchronous>, transform_indices = @transform_5, window_bounds = array<i64: 1344, 128>}, {pipeline_mode = #tpu.pipeline_mode<synchronous>, transform_indices = @transform_6, window_bounds = array<i64: 1, 128>}, {pipeline_mode = #tpu.pipeline_mode<synchronous>, transform_indices = @transform_7, window_bounds = array<i64: 128, 27>}, {pipeline_mode = #tpu.pipeline_mode<synchronous>, transform_indices = @transform_8, window_bounds = array<i64: 1, 27>}, {transform_indices = @transform_9, window_bounds = array<i64: 2, 27>}]} {
    %c0 = arith.constant 0 : index
    %c0_0 = arith.constant 0 : index
    %0 = vector.load %arg1[%c0, %c0_0] : memref<2x168xf32, #tpu.memory_space<vmem>>, vector<2x168xf32>
    %c0_1 = arith.constant 0 : index
    %c0_2 = arith.constant 0 : index
    %1 = vector.load %arg2[%c0_1, %c0_2] : memref<168x504xf32, #tpu.memory_space<vmem>>, vector<168x504xf32>
    %cst = arith.constant dense<0.000000e+00> : vector<2x504xf32>
    %2 = tpu.matmul %0, %1, %cst {dimension_numbers = #tpu.dot_dimension_numbers<[1], [0], [0], [1], [0, 0, 1, 1], [], []>} : vector<2x168xf32>, vector<168x504xf32>, vector<2x504xf32> -> vector<2x504xf32>
    %c0_3 = arith.constant 0 : index
    %c0_4 = arith.constant 0 : index
    %3 = vector.load %arg3[%c0_3, %c0_4] : memref<1x504xf32, #tpu.memory_space<vmem>>, vector<1x504xf32>
    %4 = vector.broadcast %3 : vector<1x504xf32> to vector<2x504xf32>
    %5 = arith.addf %2, %4 : vector<2x504xf32>
    %cst_5 = arith.constant 0.000000e+00 : f32
    %6 = vector.broadcast %cst_5 : f32 to vector<2x504xf32>
    %7 = arith.maximumf %5, %6 : vector<2x504xf32>
    %c0_6 = arith.constant 0 : index
    %c0_7 = arith.constant 0 : index
    %8 = vector.load %arg4[%c0_6, %c0_7] : memref<504x1344xf32, #tpu.memory_space<vmem>>, vector<504x1344xf32>
    %cst_8 = arith.constant dense<0.000000e+00> : vector<2x1344xf32>
    %9 = tpu.matmul %7, %8, %cst_8 {dimension_numbers = #tpu.dot_dimension_numbers<[1], [0], [0], [1], [0, 0, 1, 1], [], []>} : vector<2x504xf32>, vector<504x1344xf32>, vector<2x1344xf32> -> vector<2x1344xf32>
    %c0_9 = arith.constant 0 : index
    %c0_10 = arith.constant 0 : index
    %10 = vector.load %arg5[%c0_9, %c0_10] : memref<1x1344xf32, #tpu.memory_space<vmem>>, vector<1x1344xf32>
    %11 = vector.broadcast %10 : vector<1x1344xf32> to vector<2x1344xf32>
    %12 = arith.addf %9, %11 : vector<2x1344xf32>
    %cst_11 = arith.constant 0.000000e+00 : f32
    %13 = vector.broadcast %cst_11 : f32 to vector<2x1344xf32>
    %14 = arith.maximumf %12, %13 : vector<2x1344xf32>
    %c0_12 = arith.constant 0 : index
    %c0_13 = arith.constant 0 : index
    %15 = vector.load %arg6[%c0_12, %c0_13] : memref<1344x128xf32, #tpu.memory_space<vmem>>, vector<1344x128xf32>
    %cst_14 = arith.constant dense<0.000000e+00> : vector<2x128xf32>
    %16 = tpu.matmul %14, %15, %cst_14 {dimension_numbers = #tpu.dot_dimension_numbers<[1], [0], [0], [1], [0, 0, 1, 1], [], []>} : vector<2x1344xf32>, vector<1344x128xf32>, vector<2x128xf32> -> vector<2x128xf32>
    %c0_15 = arith.constant 0 : index
    %c0_16 = arith.constant 0 : index
    %17 = vector.load %arg7[%c0_15, %c0_16] : memref<1x128xf32, #tpu.memory_space<vmem>>, vector<1x128xf32>
    %18 = vector.broadcast %17 : vector<1x128xf32> to vector<2x128xf32>
    %19 = arith.addf %16, %18 : vector<2x128xf32>
    %cst_17 = arith.constant 0.000000e+00 : f32
    %20 = vector.broadcast %cst_17 : f32 to vector<2x128xf32>
    %21 = arith.maximumf %19, %20 : vector<2x128xf32>
    %c0_18 = arith.constant 0 : index
    %c0_19 = arith.constant 0 : index
    %22 = vector.load %arg8[%c0_18, %c0_19] : memref<128x27xf32, #tpu.memory_space<vmem>>, vector<128x27xf32>
    %cst_20 = arith.constant dense<0.000000e+00> : vector<2x27xf32>
    %23 = tpu.matmul %21, %22, %cst_20 {dimension_numbers = #tpu.dot_dimension_numbers<[1], [0], [0], [1], [0, 0, 1, 1], [], []>} : vector<2x128xf32>, vector<128x27xf32>, vector<2x27xf32> -> vector<2x27xf32>
    %c0_21 = arith.constant 0 : index
    %c0_22 = arith.constant 0 : index
    %24 = vector.load %arg9[%c0_21, %c0_22] : memref<1x27xf32, #tpu.memory_space<vmem>>, vector<1x27xf32>
    %25 = vector.broadcast %24 : vector<1x27xf32> to vector<2x27xf32>
    %26 = arith.addf %23, %25 : vector<2x27xf32>
    %cst_23 = arith.constant dense<0xFF800000> : vector<2xf32>
    %27 = vector.multi_reduction <maximumf>, %26, %cst_23 [1] : vector<2x27xf32> to vector<2xf32>
    %28 = vector.shape_cast %27 : vector<2xf32> to vector<2x1xf32>
    %29 = vector.broadcast %28 : vector<2x1xf32> to vector<2x27xf32>
    %30 = arith.subf %26, %29 : vector<2x27xf32>
    %31 = math.exp %30 : vector<2x27xf32>
    %cst_24 = arith.constant dense<0.000000e+00> : vector<2xf32>
    %32 = vector.multi_reduction <add>, %31, %cst_24 [1] : vector<2x27xf32> to vector<2xf32>
    %33 = vector.shape_cast %32 : vector<2xf32> to vector<2x1xf32>
    %34 = tpu.reciprocal %33 {approx = true} : vector<2x1xf32> -> vector<2x1xf32>
    %35 = arith.mulf %33, %34 : vector<2x1xf32>
    %cst_25 = arith.constant 2.000000e+00 : f32
    %36 = vector.broadcast %cst_25 : f32 to vector<2x1xf32>
    %37 = arith.subf %36, %35 : vector<2x1xf32>
    %38 = arith.mulf %34, %37 : vector<2x1xf32>
    %39 = vector.broadcast %38 : vector<2x1xf32> to vector<2x27xf32>
    %40 = arith.mulf %31, %39 : vector<2x27xf32>
    %c0_26 = arith.constant 0 : index
    %c0_27 = arith.constant 0 : index
    %41 = vector.load %arg10[%c0_26, %c0_27] : memref<2x27xf32, #tpu.memory_space<vmem>>, vector<2x27xf32>
    tpu.vector_store %arg10[%c0_26, %c0_27], %40 {strides = array<i32>} : memref<2x27xf32, #tpu.memory_space<vmem>>, vector<2x27xf32>,
    return
  }
  func.func @transform_0(%arg0: i32) -> (i32, i32) {
    %c0_i32 = arith.constant 0 : i32
    %c0_i32_0 = arith.constant 0 : i32
    return %arg0, %c0_i32 : i32, i32
  }
  func.func @transform_1(%arg0: i32) -> (i32, i32) {
    %c0_i32 = arith.constant 0 : i32
    %c0_i32_0 = arith.constant 0 : i32
    %c0_i32_1 = arith.constant 0 : i32
    return %c0_i32, %c0_i32_0 : i32, i32
  }
  func.func @transform_2(%arg0: i32) -> (i32, i32) {
    %c0_i32 = arith.constant 0 : i32
    %c0_i32_0 = arith.constant 0 : i32
    %c0_i32_1 = arith.constant 0 : i32
    return %c0_i32, %c0_i32_0 : i32, i32
  }
  func.func @transform_3(%arg0: i32) -> (i32, i32) {
    %c0_i32 = arith.constant 0 : i32
    %c0_i32_0 = arith.constant 0 : i32
    %c0_i32_1 = arith.constant 0 : i32
    return %c0_i32, %c0_i32_0 : i32, i32
  }
  func.func @transform_4(%arg0: i32) -> (i32, i32) {
    %c0_i32 = arith.constant 0 : i32
    %c0_i32_0 = arith.constant 0 : i32
    %c0_i32_1 = arith.constant 0 : i32
    return %c0_i32, %c0_i32_0 : i32, i32
  }
  func.func @transform_5(%arg0: i32) -> (i32, i32) {
    %c0_i32 = arith.constant 0 : i32
    %c0_i32_0 = arith.constant 0 : i32
    %c0_i32_1 = arith.constant 0 : i32
    return %c0_i32, %c0_i32_0 : i32, i32
  }
  func.func @transform_6(%arg0: i32) -> (i32, i32) {
    %c0_i32 = arith.constant 0 : i32
    %c0_i32_0 = arith.constant 0 : i32
    %c0_i32_1 = arith.constant 0 : i32
    return %c0_i32, %c0_i32_0 : i32, i32
  }
  func.func @transform_7(%arg0: i32) -> (i32, i32) {
    %c0_i32 = arith.constant 0 : i32
    %c0_i32_0 = arith.constant 0 : i32
    %c0_i32_1 = arith.constant 0 : i32
    return %c0_i32, %c0_i32_0 : i32, i32
  }
  func.func @transform_8(%arg0: i32) -> (i32, i32) {
    %c0_i32 = arith.constant 0 : i32
    %c0_i32_0 = arith.constant 0 : i32
    %c0_i32_1 = arith.constant 0 : i32
    return %c0_i32, %c0_i32_0 : i32, i32
  }
  func.func @transform_9(%arg0: i32) -> (i32, i32) {
    %c0_i32 = arith.constant 0 : i32
    %c0_i32_0 = arith.constant 0 : i32
    return %arg0, %c0_i32 : i32, i32
  }
}

</mosaic_0001>

<llo_original>
// kernel: _lambda_.1
$region0: #{_lambda_.1}
  #allocation0 [shape = 'u32[]', space=smem, size = 0x4, offset = 0x4, fixed_abs, tag = 'smem constant byte address 0x4 - core index']
  #allocation1 [shape = 'u32[144,128]{1,0:T(1,128)}', space=vmem, size = 0x12000, scoped, tag = 'internal scratch']
  %s0 = inlined_call_operand.vmem [shape: f32[2,168], index: 0, kind: input, shape index: {}]
  %s1 = inlined_call_operand.hbm [shape: f32[168,504], index: 1, kind: input, shape index: {}]
  %s2 = inlined_call_operand.hbm [shape: f32[1,504], index: 2, kind: input, shape index: {}]
  %s3 = inlined_call_operand.hbm [shape: f32[504,1344], index: 3, kind: input, shape index: {}]
  %s4 = inlined_call_operand.hbm [shape: f32[1,1344], index: 4, kind: input, shape index: {}]
  %s5 = inlined_call_operand.hbm [shape: f32[1344,128], index: 5, kind: input, shape index: {}]
  %s6 = inlined_call_operand.hbm [shape: f32[1,128], index: 6, kind: input, shape index: {}]
  %s7 = inlined_call_operand.hbm [shape: f32[128,27], index: 7, kind: input, shape index: {}]
  %s8 = inlined_call_operand.hbm [shape: f32[1,27], index: 8, kind: input, shape index: {}]
  %s9 = inlined_call_operand.hbm [shape: f32[2,27], index: 9, kind: output, shape index: {}]
  %s10 = sld [smem:[#allocation0]]
  $region78: #{_lambda_.1} parent=0
    _
  %s12 = ssub.s32 1, %s10
  %s13 = scalar_select 0, %s12, %s10
  $region1: #{_lambda_.1} parent=0
    #allocation2 [shape = 'u8[344064]{0}', space=vmem, size = 0x54000, scoped, tag = 'input window, operand 1, single buffered']
    #allocation3 [shape = 's32[1]{0}', space=sflag, size = 0x4, scoped, tag = 'scoped memory for _lambda_.1']
    #allocation4 [shape = 's32[1]{0}', space=sflag, size = 0x4, scoped, tag = 'scoped memory for _lambda_.1']
    #allocation5 [shape = 'u8[2048]{0}', space=vmem, size = 0x800, scoped, tag = 'input window, operand 2, single buffered']
    #allocation6 [shape = 's32[1]{0}', space=sflag, size = 0x4, scoped, tag = 'scoped memory for _lambda_.1']
    #allocation7 [shape = 'u8[2838528]{0}', space=vmem, size = 0x2b5000, scoped, tag = 'input window, operand 3, single buffered']
    #allocation8 [shape = 'u8[5632]{0}', space=vmem, size = 0x1800, scoped, tag = 'input window, operand 4, single buffered']
    #allocation9 [shape = 's32[1]{0}', space=sflag, size = 0x4, scoped, tag = 'scoped memory for _lambda_.1']
    #allocation10 [shape = 'u8[688128]{0}', space=vmem, size = 0xa8000, scoped, tag = 'input window, operand 5, single buffered']
    #allocation11 [shape = 'u8[512]{0}', space=vmem, size = 0x400, scoped, tag = 'input window, operand 6, single buffered']
    #allocation12 [shape = 's32[1]{0}', space=sflag, size = 0x4, scoped, tag = 'scoped memory for _lambda_.1']
    #allocation13 [shape = 'u8[65536]{0}', space=vmem, size = 0x10000, scoped, tag = 'input window, operand 7, single buffered']
    #allocation14 [shape = 'u8[512]{0}', space=vmem, size = 0x400, scoped, tag = 'input window, operand 8, single buffered']
    #allocation15 [shape = 's32[1]{0}', space=sflag, size = 0x4, scoped, tag = 'scoped memory for _lambda_.1']
    #allocation16 [shape = 'u8[1024]{0}', space=vmem, size = 0x400, scoped, tag = 'output window, operand 0, single buffered']
    %14 = vsyncpa [#allocation3], 0
    %15 = vsyncpa [#allocation6], 0
    %16 = vsyncpa [#allocation9], 0
    %17 = vsyncpa [#allocation12], 0
    %18 = vsyncpa [#allocation15], 0
    %19 = vsyncpa [#allocation4], 0
    // Predicated region
    $region2: #{_lambda_.1} parent=1 // pred_check
      _
    $region3: #{_lambda_.1} parent=1 // pred_check_branch
      %21 = sbr.rel (0) target = $region5
    $region4: #{_lambda_.1} parent=1 // pred_region
      _
    $region5: #{_lambda_.1} parent=1 // pred_fallthru
      _
    // Predicated region
    $region6: #{_lambda_.1} parent=1 // pred_check
      _
    $region7: #{_lambda_.1} parent=1 // pred_check_branch
      %23 = sbr.rel (0) target = $region9
    $region8: #{_lambda_.1} parent=1 // pred_region
      %s25 = ssub.s32 10752, 10752
      %26 = vsyncadd [#allocation3], %s25
      %s27 = sshll.u32 [#allocation2], 4
      %s28 = int_to_ptr.vmem [resolvable:$true] %s27
      %33 = dma.hbm_to_vmem [thread:$0]  %s1, 10752, %s28, [#allocation3], 512, 512, 32
    $region9: #{_lambda_.1} parent=1 // pred_fallthru
      _
    // Predicated region
    $region10: #{_lambda_.1} parent=1 // pred_check
      _
    $region11: #{_lambda_.1} parent=1 // pred_check_branch
      %35 = sbr.rel (0) target = $region13
    $region12: #{_lambda_.1} parent=1 // pred_region
      %s37 = ssub.s32 64, 64
      %38 = vsyncadd [#allocation6], %s37
      %s40 = sshll.u32 [#allocation5], 4
      %s41 = int_to_ptr.vmem [resolvable:$true] %s40
      %43 = dma.hbm_to_vmem [thread:$0]  %s2, 64, %s41, [#allocation6]
    $region13: #{_lambda_.1} parent=1 // pred_fallthru
      _
    // Predicated region
    $region14: #{_lambda_.1} parent=1 // pred_check
      _
    $region15: #{_lambda_.1} parent=1 // pred_check_branch
      %45 = sbr.rel (0) target = $region17
    $region16: #{_lambda_.1} parent=1 // pred_region
      %s47 = ssub.s32 88704, 88704
      %48 = vsyncadd [#allocation6], %s47
      %s49 = sshll.u32 [#allocation7], 4
      %s50 = int_to_ptr.vmem [resolvable:$true] %s49
      %55 = dma.hbm_to_vmem [thread:$0]  %s3, 88704, %s50, [#allocation6], 1408, 1408, 88
    $region17: #{_lambda_.1} parent=1 // pred_fallthru
      _
    // Predicated region
    $region18: #{_lambda_.1} parent=1 // pred_check
      _
    $region19: #{_lambda_.1} parent=1 // pred_check_branch
      %57 = sbr.rel (0) target = $region21
    $region20: #{_lambda_.1} parent=1 // pred_region
      %s59 = ssub.s32 176, 176
      %60 = vsyncadd [#allocation9], %s59
      %s62 = sshll.u32 [#allocation8], 4
      %s63 = int_to_ptr.vmem [resolvable:$true] %s62
      %65 = dma.hbm_to_vmem [thread:$0]  %s4, 176, %s63, [#allocation9]
    $region21: #{_lambda_.1} parent=1 // pred_fallthru
      _
    // Predicated region
    $region22: #{_lambda_.1} parent=1 // pred_check
      _
    $region23: #{_lambda_.1} parent=1 // pred_check_branch
      %67 = sbr.rel (0) target = $region25
    $region24: #{_lambda_.1} parent=1 // pred_region
      %s69 = ssub.s32 21504, 21504
      %70 = vsyncadd [#allocation9], %s69
      %s71 = sshll.u32 [#allocation10], 4
      %s72 = int_to_ptr.vmem [resolvable:$true] %s71
      %77 = dma.hbm_to_vmem [thread:$0]  %s5, 21504, %s72, [#allocation9], 128, 128, 8
    $region25: #{_lambda_.1} parent=1 // pred_fallthru
      _
    // Predicated region
    $region26: #{_lambda_.1} parent=1 // pred_check
      _
    $region27: #{_lambda_.1} parent=1 // pred_check_branch
      %79 = sbr.rel (0) target = $region29
    $region28: #{_lambda_.1} parent=1 // pred_region
      %s81 = ssub.s32 16, 16
      %82 = vsyncadd [#allocation12], %s81
      %s84 = sshll.u32 [#allocation11], 4
      %s85 = int_to_ptr.vmem [resolvable:$true] %s84
      %87 = dma.hbm_to_vmem [thread:$0]  %s6, 16, %s85, [#allocation12]
    $region29: #{_lambda_.1} parent=1 // pred_fallthru
      _
    // Predicated region
    $region30: #{_lambda_.1} parent=1 // pred_check
      _
    $region31: #{_lambda_.1} parent=1 // pred_check_branch
      %89 = sbr.rel (0) target = $region33
    $region32: #{_lambda_.1} parent=1 // pred_region
      %s91 = ssub.s32 2048, 2048
      %92 = vsyncadd [#allocation12], %s91
      %s93 = sshll.u32 [#allocation13], 4
      %s94 = int_to_ptr.vmem [resolvable:$true] %s93
      %99 = dma.hbm_to_vmem [thread:$0]  %s7, 2048, %s94, [#allocation12], 128, 128, 8
    $region33: #{_lambda_.1} parent=1 // pred_fallthru
      _
    // Predicated region
    $region34: #{_lambda_.1} parent=1 // pred_check
      _
    $region35: #{_lambda_.1} parent=1 // pred_check_branch
      %101 = sbr.rel (0) target = $region37
    $region36: #{_lambda_.1} parent=1 // pred_region
      %s103 = ssub.s32 16, 16
      %104 = vsyncadd [#allocation15], %s103
      %s106 = sshll.u32 [#allocation14], 4
      %s107 = int_to_ptr.vmem [resolvable:$true] %s106
      %109 = dma.hbm_to_vmem [thread:$0]  %s8, 16, %s107, [#allocation15]
    $region37: #{_lambda_.1} parent=1 // pred_fallthru
      _
    // Predicated region
    $region38: #{_lambda_.1} parent=1 // pred_check
      _
    $region39: #{_lambda_.1} parent=1 // pred_check_branch
      %111 = sbr.rel (0) target = $region41
    $region40: #{_lambda_.1} parent=1 // pred_region
      %112 = dma.done [#allocation3], 10752
    $region41: #{_lambda_.1} parent=1 // pred_fallthru
      _
    // Predicated region
    $region42: #{_lambda_.1} parent=1 // pred_check
      _
    $region43: #{_lambda_.1} parent=1 // pred_check_branch
      %114 = sbr.rel (0) target = $region45
    $region44: #{_lambda_.1} parent=1 // pred_region
      %115 = dma.done [#allocation6], 64
    $region45: #{_lambda_.1} parent=1 // pred_fallthru
      _
    // Predicated region
    $region46: #{_lambda_.1} parent=1 // pred_check
      _
    $region47: #{_lambda_.1} parent=1 // pred_check_branch
      %117 = sbr.rel (0) target = $region49
    $region48: #{_lambda_.1} parent=1 // pred_region
      %118 = dma.done [#allocation6], 88704
    $region49: #{_lambda_.1} parent=1 // pred_fallthru
      _
    // Predicated region
    $region50: #{_lambda_.1} parent=1 // pred_check
      _
    $region51: #{_lambda_.1} parent=1 // pred_check_branch
      %120 = sbr.rel (0) target = $region53
    $region52: #{_lambda_.1} parent=1 // pred_region
      %121 = dma.done [#allocation9], 176
    $region53: #{_lambda_.1} parent=1 // pred_fallthru
      _
    // Predicated region
    $region54: #{_lambda_.1} parent=1 // pred_check
      _
    $region55: #{_lambda_.1} parent=1 // pred_check_branch
      %123 = sbr.rel (0) target = $region57
    $region56: #{_lambda_.1} parent=1 // pred_region
      %124 = dma.done [#allocation9], 21504
    $region57: #{_lambda_.1} parent=1 // pred_fallthru
      _
    // Predicated region
    $region58: #{_lambda_.1} parent=1 // pred_check
      _
    $region59: #{_lambda_.1} parent=1 // pred_check_branch
      %126 = sbr.rel (0) target = $region61
    $region60: #{_lambda_.1} parent=1 // pred_region
      %127 = dma.done [#allocation12], 16
    $region61: #{_lambda_.1} parent=1 // pred_fallthru
      _
    // Predicated region
    $region62: #{_lambda_.1} parent=1 // pred_check
      _
    $region63: #{_lambda_.1} parent=1 // pred_check_branch
      %129 = sbr.rel (0) target = $region65
    $region64: #{_lambda_.1} parent=1 // pred_region
      %130 = dma.done [#allocation12], 2048
    $region65: #{_lambda_.1} parent=1 // pred_fallthru
      _
    // Predicated region
    $region66: #{_lambda_.1} parent=1 // pred_check
      _
    $region67: #{_lambda_.1} parent=1 // pred_check_branch
      %132 = sbr.rel (0) target = $region69
    $region68: #{_lambda_.1} parent=1 // pred_region
      %133 = dma.done [#allocation15], 16
    $region69: #{_lambda_.1} parent=1 // pred_fallthru
      _
    %v134 = vld [vmem:[%s0] sm:$0xf]
    %v135 = vld [vmem:[#allocation2] sm:$0xff]
    %v136 = vld [vmem:[#allocation2 + $0x8] sm:$0xff]
    %v137 = vld [vmem:[#allocation2 + $0x10] sm:$0xff]
    %v138 = vld [vmem:[#allocation2 + $0x18] sm:$0xff]
    %v139 = vld [vmem:[#allocation2 + $0x20] sm:$0xff]
    %v140 = vld [vmem:[#allocation2 + $0x28] sm:$0xff]
    %v141 = vld [vmem:[#allocation2 + $0x30] sm:$0xff]
    %v142 = vld [vmem:[#allocation2 + $0x38] sm:$0xff]
    %v143 = vld [vmem:[#allocation2 + $0x40] sm:$0xff]
    %v144 = vld [vmem:[#allocation2 + $0x48] sm:$0xff]
    %v145 = vld [vmem:[#allocation2 + $0x50] sm:$0xff]
    %v146 = vld [vmem:[#allocation2 + $0x58] sm:$0xff]
    %v147 = vld [vmem:[#allocation2 + $0x60] sm:$0xff]
    %v148 = vld [vmem:[#allocation2 + $0x68] sm:$0xff]
    %v149 = vld [vmem:[#allocation2 + $0x70] sm:$0xff]
    %v150 = vld [vmem:[#allocation2 + $0x78] sm:$0xff]
    %v151 = vld [vmem:[#allocation2 + $0x80] sm:$0xff]
    %v152 = vld [vmem:[#allocation2 + $0x88] sm:$0xff]
    %v153 = vld [vmem:[#allocation2 + $0x90] sm:$0xff]
    %v154 = vld [vmem:[#allocation2 + $0x98] sm:$0xff]
    %v155 = vld [vmem:[#allocation2 + $0xa0] sm:$0xff]
    %v156 = vld [vmem:[#allocation2 + $0xa8] sm:$0xff]
    %v157 = vld [vmem:[#allocation2 + $0xb0] sm:$0xff]
    %v158 = vld [vmem:[#allocation2 + $0xb8] sm:$0xff]
    %v159 = vld [vmem:[#allocation2 + $0xc0] sm:$0xff]
    %v160 = vld [vmem:[#allocation2 + $0xc8] sm:$0xff]
    %v161 = vld [vmem:[#allocation2 + $0xd0] sm:$0xff]
    %v162 = vld [vmem:[#allocation2 + $0xd8] sm:$0xff]
    %v163 = vld [vmem:[#allocation2 + $0xe0] sm:$0xff]
    %v164 = vld [vmem:[#allocation2 + $0xe8] sm:$0xff]
    %v165 = vld [vmem:[#allocation2 + $0xf0] sm:$0xff]
    %v166 = vld [vmem:[#allocation2 + $0xf8] sm:$0xff]
    %v167 = vld [vmem:[#allocation2 + $0x100] sm:$0xff]
    %v168 = vld [vmem:[#allocation2 + $0x108] sm:$0xff]
    %v169 = vld [vmem:[#allocation2 + $0x110] sm:$0xff]
    %v170 = vld [vmem:[#allocation2 + $0x118] sm:$0xff]
    %v171 = vld [vmem:[#allocation2 + $0x120] sm:$0xff]
    %v172 = vld [vmem:[#allocation2 + $0x128] sm:$0xff]
    %v173 = vld [vmem:[#allocation2 + $0x130] sm:$0xff]
    %v174 = vld [vmem:[#allocation2 + $0x138] sm:$0xff]
    %v175 = vld [vmem:[#allocation2 + $0x140] sm:$0xff]
    %v176 = vld [vmem:[#allocation2 + $0x148] sm:$0xff]
    %v177 = vld [vmem:[#allocation2 + $0x150] sm:$0xff]
    %v178 = vld [vmem:[#allocation2 + $0x158] sm:$0xff]
    %v179 = vld [vmem:[#allocation2 + $0x160] sm:$0xff]
    %v180 = vld [vmem:[#allocation2 + $0x168] sm:$0xff]
    %v181 = vld [vmem:[#allocation2 + $0x170] sm:$0xff]
    %v182 = vld [vmem:[#allocation2 + $0x178] sm:$0xff]
    %v183 = vld [vmem:[#allocation2 + $0x180] sm:$0xff]
    %v184 = vld [vmem:[#allocation2 + $0x188] sm:$0xff]
    %v185 = vld [vmem:[#allocation2 + $0x190] sm:$0xff]
    %v186 = vld [vmem:[#allocation2 + $0x198] sm:$0xff]
    %v187 = vld [vmem:[#allocation2 + $0x1a0] sm:$0xff]
    %v188 = vld [vmem:[#allocation2 + $0x1a8] sm:$0xff]
    %v189 = vld [vmem:[#allocation2 + $0x1b0] sm:$0xff]
    %v190 = vld [vmem:[#allocation2 + $0x1b8] sm:$0xff]
    %v191 = vld [vmem:[#allocation2 + $0x1c0] sm:$0xff]
    %v192 = vld [vmem:[#allocation2 + $0x1c8] sm:$0xff]
    %v193 = vld [vmem:[#allocation2 + $0x1d0] sm:$0xff]
    %v194 = vld [vmem:[#allocation2 + $0x1d8] sm:$0xff]
    %v195 = vld [vmem:[#allocation2 + $0x1e0] sm:$0xff]
    %v196 = vld [vmem:[#allocation2 + $0x1e8] sm:$0xff]
    %v197 = vld [vmem:[#allocation2 + $0x1f0] sm:$0xff]
    %v198 = vld [vmem:[#allocation2 + $0x1f8] sm:$0xff]
    %v199 = vld [vmem:[#allocation2 + $0x200] sm:$0xff]
    %v200 = vld [vmem:[#allocation2 + $0x208] sm:$0xff]
    %v201 = vld [vmem:[#allocation2 + $0x210] sm:$0xff]
    %v202 = vld [vmem:[#allocation2 + $0x218] sm:$0xff]
    %v203 = vld [vmem:[#allocation2 + $0x220] sm:$0xff]
    %v204 = vld [vmem:[#allocation2 + $0x228] sm:$0xff]
    %v205 = vld [vmem:[#allocation2 + $0x230] sm:$0xff]
    %v206 = vld [vmem:[#allocation2 + $0x238] sm:$0xff]
    %v207 = vld [vmem:[#allocation2 + $0x240] sm:$0xff]
    %v208 = vld [vmem:[#allocation2 + $0x248] sm:$0xff]
    %v209 = vld [vmem:[#allocation2 + $0x250] sm:$0xff]
    %v210 = vld [vmem:[#allocation2 + $0x258] sm:$0xff]
    %v211 = vld [vmem:[#allocation2 + $0x260] sm:$0xff]
    %v212 = vld [vmem:[#allocation2 + $0x268] sm:$0xff]
    %v213 = vld [vmem:[#allocation2 + $0x270] sm:$0xff]
    %v214 = vld [vmem:[#allocation2 + $0x278] sm:$0xff]
    %v215 = vld [vmem:[#allocation2 + $0x280] sm:$0xff]
    %v216 = vld [vmem:[#allocation2 + $0x288] sm:$0xff]
    %v217 = vld [vmem:[#allocation2 + $0x290] sm:$0xff]
    %v218 = vld [vmem:[#allocation2 + $0x298] sm:$0xff]
    %v219 = vld [vmem:[#allocation5] sm:$0xf]
    %v221 = vlaneseq
    %v222 = vshrl.u32 %v221, 7
    %v223 = vsub.s32 0, %v222
    %v224 = vrot.slane %v219, %v223
    %v225 = vlaneseq
    %v226 = vshrl.u32 %v225, 7
    %v227 = vsub.s32 1, %v226
    %v228 = vrot.slane %v219, %v227
    %v229 = vlaneseq
    %v230 = vshrl.u32 %v229, 7
    %v231 = vsub.s32 2, %v230
    %v232 = vrot.slane %v219, %v231
    %v233 = vlaneseq
    %v234 = vshrl.u32 %v233, 7
    %v235 = vsub.s32 3, %v234
    %v236 = vrot.slane %v219, %v235
    %v243 = vunpack.c.l.s4 1983009808
    %v244 = vunpack.c.0.s8 %v243
    %v245 = vlaneseq
    %v246 = vshrl.u32 %v245, 7
    %v247 = vsub.s32 %v244, %v246
    %v248 = vrot.slane %v134, %v247
    %v249 = vcombine.high %v248, %v248
    %vm251 = vcmask 326656
    %v252 = vsel %vm251, %v249, 0
    %254 = vmatprep.subr.mxu0 %v196
    %255 = vmatpush1.msra.mxu0 %v195
    %256 = vmatprep.subr.mxu0 %v192
    %257 = vmatpush1.msra.mxu0 %v191
    %258 = vmatprep.subr.mxu0 %v188
    %259 = vmatpush1.msra.mxu0 %v187
    %260 = vmatprep.subr.mxu0 %v184
    %261 = vmatpush1.msra.mxu0 %v183
    %262 = vmatprep.subr.mxu0 %v180
    %263 = vmatpush1.msra.mxu0 %v179
    %264 = vmatprep.subr.mxu0 %v176
    %265 = vmatpush1.msra.mxu0 %v175
    %266 = vmatprep.subr.mxu0 %v172
    %267 = vmatpush1.msra.mxu0 %v171
    %268 = vmatprep.subr.mxu0 %v168
    %269 = vmatpush1.msra.mxu0 %v167
    %270 = vmatprep.subr.mxu0 %v164
    %271 = vmatpush1.msra.mxu0 %v163
    %272 = vmatprep.subr.mxu0 %v160
    %273 = vmatpush1.msra.mxu0 %v159
    %274 = vmatprep.subr.mxu0 %v156
    %275 = vmatpush1.msra.mxu0 %v155
    %276 = vmatprep.subr.mxu0 %v152
    %277 = vmatpush1.msra.mxu0 %v151
    %278 = vmatprep.subr.mxu0 %v148
    %279 = vmatpush1.msra.mxu0 %v147
    %280 = vmatprep.subr.mxu0 %v144
    %281 = vmatpush1.msra.mxu0 %v143
    %282 = vmatprep.subr.mxu0 %v140
    %283 = vmatpush1.msra.mxu0 %v139
    %284 = vmatprep.subr.mxu0 %v136
    %285 = vmatpush1.msra.mxu0 %v135
    %286 = vmatprep.subr.mxu0 0.0
    %287 = vmatpush2.msra.mxu0 0.0
    %288 = vmatprep.subr.mxu0 0.0
    %289 = vmatpush2.msra.mxu0 0.0
    %290 = vmatprep.subr.mxu0 0.0
    %291 = vmatpush2.msra.mxu0 0.0
    %292 = vmatprep.subr.mxu0 0.0
    %293 = vmatpush2.msra.mxu0 0.0
    %294 = vmatprep.subr.mxu0 0.0
    %295 = vmatpush2.msra.mxu0 0.0
    %296 = vmatprep.subr.mxu0 0.0
    %297 = vmatpush2.msra.mxu0 0.0
    %298 = vmatprep.subr.mxu0 0.0
    %299 = vmatpush2.msra.mxu0 0.0
    %300 = vmatprep.subr.mxu0 0.0
    %301 = vmatpush2.msra.mxu0 0.0
    %302 = vmatprep.subr.mxu0 0.0
    %303 = vmatpush2.msra.mxu0 0.0
    %304 = vmatprep.subr.mxu0 0.0
    %305 = vmatpush2.msra.mxu0 0.0
    %306 = vmatprep.subr.mxu0 0.0
    %307 = vmatpush2.msra.mxu0 0.0
    %308 = vmatprep.subr.mxu0 %v216
    %309 = vmatpush2.msra.mxu0 %v215
    %310 = vmatprep.subr.mxu0 %v212
    %311 = vmatpush2.msra.mxu0 %v211
    %312 = vmatprep.subr.mxu0 %v208
    %313 = vmatpush2.msra.mxu0 %v207
    %314 = vmatprep.subr.mxu0 %v204
    %315 = vmatpush2.msra.mxu0 %v203
    %316 = vmatprep.subr.mxu0 %v200
    %317 = vmatpush2.msra.mxu0 %v199
    %318 = vmatprep.mubr.f32.mxu0 %v252
    %319 = vmatmul.mubr.f32.gmra.mxu0 %v248
    %v320 = vpop.f32.mrf.mxu0
    %v321 = vadd.f32 %v224, %v320
    %v322 = vpop.f32.mrf.mxu0
    %v323 = vadd.f32 %v228, %v322
    %324 = vdwg.mxu0
    %325 = vmatprep.subr.mxu0 %v198
    %326 = vmatpush1.msra.mxu0 %v197
    %327 = vmatprep.subr.mxu0 %v194
    %328 = vmatpush1.msra.mxu0 %v193
    %329 = vmatprep.subr.mxu0 %v190
    %330 = vmatpush1.msra.mxu0 %v189
    %331 = vmatprep.subr.mxu0 %v186
    %332 = vmatpush1.msra.mxu0 %v185
    %333 = vmatprep.subr.mxu0 %v182
    %334 = vmatpush1.msra.mxu0 %v181
    %335 = vmatprep.subr.mxu0 %v178
    %336 = vmatpush1.msra.mxu0 %v177
    %337 = vmatprep.subr.mxu0 %v174
    %338 = vmatpush1.msra.mxu0 %v173
    %339 = vmatprep.subr.mxu0 %v170
    %340 = vmatpush1.msra.mxu0 %v169
    %341 = vmatprep.subr.mxu0 %v166
    %342 = vmatpush1.msra.mxu0 %v165
    %343 = vmatprep.subr.mxu0 %v162
    %344 = vmatpush1.msra.mxu0 %v161
    %345 = vmatprep.subr.mxu0 %v158
    %346 = vmatpush1.msra.mxu0 %v157
    %347 = vmatprep.subr.mxu0 %v154
    %348 = vmatpush1.msra.mxu0 %v153
    %349 = vmatprep.subr.mxu0 %v150
    %350 = vmatpush1.msra.mxu0 %v149
    %351 = vmatprep.subr.mxu0 %v146
    %352 = vmatpush1.msra.mxu0 %v145
    %353 = vmatprep.subr.mxu0 %v142
    %354 = vmatpush1.msra.mxu0 %v141
    %355 = vmatprep.subr.mxu0 %v138
    %356 = vmatpush1.msra.mxu0 %v137
    %357 = vmatprep.subr.mxu0 0.0
    %358 = vmatpush2.msra.mxu0 0.0
    %359 = vmatprep.subr.mxu0 0.0
    %360 = vmatpush2.msra.mxu0 0.0
    %361 = vmatprep.subr.mxu0 0.0
    %362 = vmatpush2.msra.mxu0 0.0
    %363 = vmatprep.subr.mxu0 0.0
    %364 = vmatpush2.msra.mxu0 0.0
    %365 = vmatprep.subr.mxu0 0.0
    %366 = vmatpush2.msra.mxu0 0.0
    %367 = vmatprep.subr.mxu0 0.0
    %368 = vmatpush2.msra.mxu0 0.0
    %369 = vmatprep.subr.mxu0 0.0
    %370 = vmatpush2.msra.mxu0 0.0
    %371 = vmatprep.subr.mxu0 0.0
    %372 = vmatpush2.msra.mxu0 0.0
    %373 = vmatprep.subr.mxu0 0.0
    %374 = vmatpush2.msra.mxu0 0.0
    %375 = vmatprep.subr.mxu0 0.0
    %376 = vmatpush2.msra.mxu0 0.0
    %377 = vmatprep.subr.mxu0 0.0
    %378 = vmatpush2.msra.mxu0 0.0
    %379 = vmatprep.subr.mxu0 %v218
    %380 = vmatpush2.msra.mxu0 %v217
    %381 = vmatprep.subr.mxu0 %v214
    %382 = vmatpush2.msra.mxu0 %v213
    %383 = vmatprep.subr.mxu0 %v210
    %384 = vmatpush2.msra.mxu0 %v209
    %385 = vmatprep.subr.mxu0 %v206
    %386 = vmatpush2.msra.mxu0 %v205
    %387 = vmatprep.subr.mxu0 %v202
    %388 = vmatpush2.msra.mxu0 %v201
    %389 = vmatprep.mubr.f32.mxu0 %v252
    %390 = vmatmul.mubr.f32.gmra.mxu0 %v248
    %v391 = vpop.f32.mrf.mxu0
    %v392 = vadd.f32 %v232, %v391
    %v393 = vpop.f32.mrf.mxu0
    %v394 = vadd.f32 %v236, %v393
    %395 = vdwg.mxu0
    %v396 = vmax.f32 %v321, 0.0
    %v397 = vmax.f32 %v323, 0.0
    %v398 = vmax.f32 %v392, 0.0
    %v399 = vmax.f32 %v394, 0.0
    %v400 = vld [vmem:[#allocation7] sm:$0xff]
    %v401 = vld [vmem:[#allocation7 + $0x8] sm:$0xff]
    %v402 = vld [vmem:[#allocation7 + $0x10] sm:$0xff]
    %v403 = vld [vmem:[#allocation7 + $0x18] sm:$0xff]
    %v404 = vld [vmem:[#allocation7 + $0x20] sm:$0xff]
    %v405 = vld [vmem:[#allocation7 + $0x28] sm:$0xff]
    %v406 = vld [vmem:[#allocation7 + $0x30] sm:$0xff]
    %v407 = vld [vmem:[#allocation7 + $0x38] sm:$0xff]
    %v408 = vld [vmem:[#allocation7 + $0x40] sm:$0xff]
    %v409 = vld [vmem:[#allocation7 + $0x48] sm:$0xff]
    %v410 = vld [vmem:[#allocation7 + $0x50] sm:$0xff]
    %v411 = vld [vmem:[#allocation7 + $0x58] sm:$0xff]
    %v412 = vld [vmem:[#allocation7 + $0x60] sm:$0xff]
    %v413 = vld [vmem:[#allocation7 + $0x68] sm:$0xff]
    %v414 = vld [vmem:[#allocation7 + $0x70] sm:$0xff]
    %v415 = vld [vmem:[#allocation7 + $0x78] sm:$0xff]
    %v416 = vld [vmem:[#allocation7 + $0x80] sm:$0xff]
    %v417 = vld [vmem:[#allocation7 + $0x88] sm:$0xff]
    %v418 = vld [vmem:[#allocation7 + $0x90] sm:$0xff]
    %v419 = vld [vmem:[#allocation7 + $0x98] sm:$0xff]
    %v420 = vld [vmem:[#allocation7 + $0xa0] sm:$0xff]
    %v421 = vld [vmem:[#allocation7 + $0xa8] sm:$0xff]
    %v422 = vld [vmem:[#allocation7 + $0xb0] sm:$0xff]
    %v423 = vld [vmem:[#allocation7 + $0xb8] sm:$0xff]
    %v424 = vld [vmem:[#allocation7 + $0xc0] sm:$0xff]
    %v425 = vld [vmem:[#allocation7 + $0xc8] sm:$0xff]
    %v426 = vld [vmem:[#allocation7 + $0xd0] sm:$0xff]
    %v427 = vld [vmem:[#allocation7 + $0xd8] sm:$0xff]
    %v428 = vld [vmem:[#allocation7 + $0xe0] sm:$0xff]
    %v429 = vld [vmem:[#allocation7 + $0xe8] sm:$0xff]
    %v430 = vld [vmem:[#allocation7 + $0xf0] sm:$0xff]
    %v431 = vld [vmem:[#allocation7 + $0xf8] sm:$0xff]
    %v432 = vld [vmem:[#allocation7 + $0x100] sm:$0xff]
    %v433 = vld [vmem:[#allocation7 + $0x108] sm:$0xff]
    %v434 = vld [vmem:[#allocation7 + $0x110] sm:$0xff]
    %v435 = vld [vmem:[#allocation7 + $0x118] sm:$0xff]
    %v436 = vld [vmem:[#allocation7 + $0x120] sm:$0xff]
    %v437 = vld [vmem:[#allocation7 + $0x128] sm:$0xff]
    %v438 = vld [vmem:[#allocation7 + $0x130] sm:$0xff]
    %v439 = vld [vmem:[#allocation7 + $0x138] sm:$0xff]
    %v440 = vld [vmem:[#allocation7 + $0x140] sm:$0xff]
    %v441 = vld [vmem:[#allocation7 + $0x148] sm:$0xff]
    %v442 = vld [vmem:[#allocation7 + $0x150] sm:$0xff]
    %v443 = vld [vmem:[#allocation7 + $0x158] sm:$0xff]
    %v444 = vld [vmem:[#allocation7 + $0x160] sm:$0xff]
    %v445 = vld [vmem:[#allocation7 + $0x168] sm:$0xff]
    %v446 = vld [vmem:[#allocation7 + $0x170] sm:$0xff]
    %v447 = vld [vmem:[#allocation7 + $0x178] sm:$0xff]
    %v448 = vld [vmem:[#allocation7 + $0x180] sm:$0xff]
    %v449 = vld [vmem:[#allocation7 + $0x188] sm:$0xff]
    %v450 = vld [vmem:[#allocation7 + $0x190] sm:$0xff]
    %v451 = vld [vmem:[#allocation7 + $0x198] sm:$0xff]
    %v452 = vld [vmem:[#allocation7 + $0x1a0] sm:$0xff]
    %v453 = vld [vmem:[#allocation7 + $0x1a8] sm:$0xff]
    %v454 = vld [vmem:[#allocation7 + $0x1b0] sm:$0xff]
    %v455 = vld [vmem:[#allocation7 + $0x1b8] sm:$0xff]
    %v456 = vld [vmem:[#allocation7 + $0x1c0] sm:$0xff]
    %v457 = vld [vmem:[#allocation7 + $0x1c8] sm:$0xff]
    %v458 = vld [vmem:[#allocation7 + $0x1d0] sm:$0xff]
    %v459 = vld [vmem:[#allocation7 + $0x1d8] sm:$0xff]
    %v460 = vld [vmem:[#allocation7 + $0x1e0] sm:$0xff]
    %v461 = vld [vmem:[#allocation7 + $0x1e8] sm:$0xff]
    %v462 = vld [vmem:[#allocation7 + $0x1f0] sm:$0xff]
    %v463 = vld [vmem:[#allocation7 + $0x1f8] sm:$0xff]
    %v464 = vld [vmem:[#allocation7 + $0x200] sm:$0xff]
    %v465 = vld [vmem:[#allocation7 + $0x208] sm:$0xff]
    %v466 = vld [vmem:[#allocation7 + $0x210] sm:$0xff]
    %v467 = vld [vmem:[#allocation7 + $0x218] sm:$0xff]
    %v468 = vld [vmem:[#allocation7 + $0x220] sm:$0xff]
    %v469 = vld [vmem:[#allocation7 + $0x228] sm:$0xff]
    %v470 = vld [vmem:[#allocation7 + $0x230] sm:$0xff]
    %v471 = vld [vmem:[#allocation7 + $0x238] sm:$0xff]
    %v472 = vld [vmem:[#allocation7 + $0x240] sm:$0xff]
    %v473 = vld [vmem:[#allocation7 + $0x248] sm:$0xff]
    %v474 = vld [vmem:[#allocation7 + $0x250] sm:$0xff]
    %v475 = vld [vmem:[#allocation7 + $0x258] sm:$0xff]
    %v476 = vld [vmem:[#allocation7 + $0x260] sm:$0xff]
    %v477 = vld [vmem:[#allocation7 + $0x268] sm:$0xff]
    %v478 = vld [vmem:[#allocation7 + $0x270] sm:$0xff]
    %v479 = vld [vmem:[#allocation7 + $0x278] sm:$0xff]
    %v480 = vld [vmem:[#allocation7 + $0x280] sm:$0xff]
    %v481 = vld [vmem:[#allocation7 + $0x288] sm:$0xff]
    %v482 = vld [vmem:[#allocation7 + $0x290] sm:$0xff]
    %v483 = vld [vmem:[#allocation7 + $0x298] sm:$0xff]
    %v484 = vld [vmem:[#allocation7 + $0x2a0] sm:$0xff]
    %v485 = vld [vmem:[#allocation7 + $0x2a8] sm:$0xff]
    %v486 = vld [vmem:[#allocation7 + $0x2b0] sm:$0xff]
    %v487 = vld [vmem:[#allocation7 + $0x2b8] sm:$0xff]
    %v488 = vld [vmem:[#allocation7 + $0x2c0] sm:$0xff]
    %v489 = vld [vmem:[#allocation7 + $0x2c8] sm:$0xff]
    %v490 = vld [vmem:[#allocation7 + $0x2d0] sm:$0xff]
    %v491 = vld [vmem:[#allocation7 + $0x2d8] sm:$0xff]
    %v492 = vld [vmem:[#allocation7 + $0x2e0] sm:$0xff]
    %v493 = vld [vmem:[#allocation7 + $0x2e8] sm:$0xff]
    %v494 = vld [vmem:[#allocation7 + $0x2f0] sm:$0xff]
    %v495 = vld [vmem:[#allocation7 + $0x2f8] sm:$0xff]
    %v496 = vld [vmem:[#allocation7 + $0x300] sm:$0xff]
    %v497 = vld [vmem:[#allocation7 + $0x308] sm:$0xff]
    %v498 = vld [vmem:[#allocation7 + $0x310] sm:$0xff]
    %v499 = vld [vmem:[#allocation7 + $0x318] sm:$0xff]
    %v500 = vld [vmem:[#allocation7 + $0x320] sm:$0xff]
    %v501 = vld [vmem:[#allocation7 + $0x328] sm:$0xff]
    %v502 = vld [vmem:[#allocation7 + $0x330] sm:$0xff]
    %v503 = vld [vmem:[#allocation7 + $0x338] sm:$0xff]
    %v504 = vld [vmem:[#allocation7 + $0x340] sm:$0xff]
    %v505 = vld [vmem:[#allocation7 + $0x348] sm:$0xff]
    %v506 = vld [vmem:[#allocation7 + $0x350] sm:$0xff]
    %v507 = vld [vmem:[#allocation7 + $0x358] sm:$0xff]
    %v508 = vld [vmem:[#allocation7 + $0x360] sm:$0xff]
    %v509 = vld [vmem:[#allocation7 + $0x368] sm:$0xff]
    %v510 = vld [vmem:[#allocation7 + $0x370] sm:$0xff]
    %v511 = vld [vmem:[#allocation7 + $0x378] sm:$0xff]
    %v512 = vld [vmem:[#allocation7 + $0x380] sm:$0xff]
    %v513 = vld [vmem:[#allocation7 + $0x388] sm:$0xff]
    %v514 = vld [vmem:[#allocation7 + $0x390] sm:$0xff]
    %v515 = vld [vmem:[#allocation7 + $0x398] sm:$0xff]
    %v516 = vld [vmem:[#allocation7 + $0x3a0] sm:$0xff]
    %v517 = vld [vmem:[#allocation7 + $0x3a8] sm:$0xff]
    %v518 = vld [vmem:[#allocation7 + $0x3b0] sm:$0xff]
    %v519 = vld [vmem:[#allocation7 + $0x3b8] sm:$0xff]
    %v520 = vld [vmem:[#allocation7 + $0x3c0] sm:$0xff]
    %v521 = vld [vmem:[#allocation7 + $0x3c8] sm:$0xff]
    %v522 = vld [vmem:[#allocation7 + $0x3d0] sm:$0xff]
    %v523 = vld [vmem:[#allocation7 + $0x3d8] sm:$0xff]
    %v524 = vld [vmem:[#allocation7 + $0x3e0] sm:$0xff]
    %v525 = vld [vmem:[#allocation7 + $0x3e8] sm:$0xff]
    %v526 = vld [vmem:[#allocation7 + $0x3f0] sm:$0xff]
    %v527 = vld [vmem:[#allocation7 + $0x3f8] sm:$0xff]
    %v528 = vld [vmem:[#allocation7 + $0x400] sm:$0xff]
    %v529 = vld [vmem:[#allocation7 + $0x408] sm:$0xff]
    %v530 = vld [vmem:[#allocation7 + $0x410] sm:$0xff]
    %v531 = vld [vmem:[#allocation7 + $0x418] sm:$0xff]
    %v532 = vld [vmem:[#allocation7 + $0x420] sm:$0xff]
    %v533 = vld [vmem:[#allocation7 + $0x428] sm:$0xff]
    %v534 = vld [vmem:[#allocation7 + $0x430] sm:$0xff]
    %v535 = vld [vmem:[#allocation7 + $0x438] sm:$0xff]
    %v536 = vld [vmem:[#allocation7 + $0x440] sm:$0xff]
    %v537 = vld [vmem:[#allocation7 + $0x448] sm:$0xff]
    %v538 = vld [vmem:[#allocation7 + $0x450] sm:$0xff]
    %v539 = vld [vmem:[#allocation7 + $0x458] sm:$0xff]
    %v540 = vld [vmem:[#allocation7 + $0x460] sm:$0xff]
    %v541 = vld [vmem:[#allocation7 + $0x468] sm:$0xff]
    %v542 = vld [vmem:[#allocation7 + $0x470] sm:$0xff]
    %v543 = vld [vmem:[#allocation7 + $0x478] sm:$0xff]
    %v544 = vld [vmem:[#allocation7 + $0x480] sm:$0xff]
    %v545 = vld [vmem:[#allocation7 + $0x488] sm:$0xff]
    %v546 = vld [vmem:[#allocation7 + $0x490] sm:$0xff]
    %v547 = vld [vmem:[#allocation7 + $0x498] sm:$0xff]
    %v548 = vld [vmem:[#allocation7 + $0x4a0] sm:$0xff]
    %v549 = vld [vmem:[#allocation7 + $0x4a8] sm:$0xff]
    %v550 = vld [vmem:[#allocation7 + $0x4b0] sm:$0xff]
    %v551 = vld [vmem:[#allocation7 + $0x4b8] sm:$0xff]
    %v552 = vld [vmem:[#allocation7 + $0x4c0] sm:$0xff]
    %v553 = vld [vmem:[#allocation7 + $0x4c8] sm:$0xff]
    %v554 = vld [vmem:[#allocation7 + $0x4d0] sm:$0xff]
    %v555 = vld [vmem:[#allocation7 + $0x4d8] sm:$0xff]
    %v556 = vld [vmem:[#allocation7 + $0x4e0] sm:$0xff]
    %v557 = vld [vmem:[#allocation7 + $0x4e8] sm:$0xff]
    %v558 = vld [vmem:[#allocation7 + $0x4f0] sm:$0xff]
    %v559 = vld [vmem:[#allocation7 + $0x4f8] sm:$0xff]
    %v560 = vld [vmem:[#allocation7 + $0x500] sm:$0xff]
    %v561 = vld [vmem:[#allocation7 + $0x508] sm:$0xff]
    %v562 = vld [vmem:[#allocation7 + $0x510] sm:$0xff]
    %v563 = vld [vmem:[#allocation7 + $0x518] sm:$0xff]
    %v564 = vld [vmem:[#allocation7 + $0x520] sm:$0xff]
    %v565 = vld [vmem:[#allocation7 + $0x528] sm:$0xff]
    %v566 = vld [vmem:[#allocation7 + $0x530] sm:$0xff]
    %v567 = vld [vmem:[#allocation7 + $0x538] sm:$0xff]
    %v568 = vld [vmem:[#allocation7 + $0x540] sm:$0xff]
    %v569 = vld [vmem:[#allocation7 + $0x548] sm:$0xff]
    %v570 = vld [vmem:[#allocation7 + $0x550] sm:$0xff]
    %v571 = vld [vmem:[#allocation7 + $0x558] sm:$0xff]
    %v572 = vld [vmem:[#allocation7 + $0x560] sm:$0xff]
    %v573 = vld [vmem:[#allocation7 + $0x568] sm:$0xff]
    %v574 = vld [vmem:[#allocation7 + $0x570] sm:$0xff]
    %v575 = vld [vmem:[#allocation7 + $0x578] sm:$0xff]
    %v576 = vld [vmem:[#allocation7 + $0x580] sm:$0xff]
    %v577 = vld [vmem:[#allocation7 + $0x588] sm:$0xff]
    %v578 = vld [vmem:[#allocation7 + $0x590] sm:$0xff]
    %v579 = vld [vmem:[#allocation7 + $0x598] sm:$0xff]
    %v580 = vld [vmem:[#allocation7 + $0x5a0] sm:$0xff]
    %v581 = vld [vmem:[#allocation7 + $0x5a8] sm:$0xff]
    %v582 = vld [vmem:[#allocation7 + $0x5b0] sm:$0xff]
    %v583 = vld [vmem:[#allocation7 + $0x5b8] sm:$0xff]
    %v584 = vld [vmem:[#allocation7 + $0x5c0] sm:$0xff]
    %v585 = vld [vmem:[#allocation7 + $0x5c8] sm:$0xff]
    %v586 = vld [vmem:[#allocation7 + $0x5d0] sm:$0xff]
    %v587 = vld [vmem:[#allocation7 + $0x5d8] sm:$0xff]
    %v588 = vld [vmem:[#allocation7 + $0x5e0] sm:$0xff]
    %v589 = vld [vmem:[#allocation7 + $0x5e8] sm:$0xff]
    %v590 = vld [vmem:[#allocation7 + $0x5f0] sm:$0xff]
    %v591 = vld [vmem:[#allocation7 + $0x5f8] sm:$0xff]
    %v592 = vld [vmem:[#allocation7 + $0x600] sm:$0xff]
    %v593 = vld [vmem:[#allocation7 + $0x608] sm:$0xff]
    %v594 = vld [vmem:[#allocation7 + $0x610] sm:$0xff]
    %v595 = vld [vmem:[#allocation7 + $0x618] sm:$0xff]
    %v596 = vld [vmem:[#allocation7 + $0x620] sm:$0xff]
    %v597 = vld [vmem:[#allocation7 + $0x628] sm:$0xff]
    %v598 = vld [vmem:[#allocation7 + $0x630] sm:$0xff]
    %v599 = vld [vmem:[#allocation7 + $0x638] sm:$0xff]
    %v600 = vld [vmem:[#allocation7 + $0x640] sm:$0xff]
    %v601 = vld [vmem:[#allocation7 + $0x648] sm:$0xff]
    %v602 = vld [vmem:[#allocation7 + $0x650] sm:$0xff]
    %v603 = vld [vmem:[#allocation7 + $0x658] sm:$0xff]
    %v604 = vld [vmem:[#allocation7 + $0x660] sm:$0xff]
    %v605 = vld [vmem:[#allocation7 + $0x668] sm:$0xff]
    %v606 = vld [vmem:[#allocation7 + $0x670] sm:$0xff]
    %v607 = vld [vmem:[#allocation7 + $0x678] sm:$0xff]
    %v608 = vld [vmem:[#allocation7 + $0x680] sm:$0xff]
    %v609 = vld [vmem:[#allocation7 + $0x688] sm:$0xff]
    %v610 = vld [vmem:[#allocation7 + $0x690] sm:$0xff]
    %v611 = vld [vmem:[#allocation7 + $0x698] sm:$0xff]
    %v612 = vld [vmem:[#allocation7 + $0x6a0] sm:$0xff]
    %v613 = vld [vmem:[#allocation7 + $0x6a8] sm:$0xff]
    %v614 = vld [vmem:[#allocation7 + $0x6b0] sm:$0xff]
    %v615 = vld [vmem:[#allocation7 + $0x6b8] sm:$0xff]
    %v616 = vld [vmem:[#allocation7 + $0x6c0] sm:$0xff]
    %v617 = vld [vmem:[#allocation7 + $0x6c8] sm:$0xff]
    %v618 = vld [vmem:[#allocation7 + $0x6d0] sm:$0xff]
    %v619 = vld [vmem:[#allocation7 + $0x6d8] sm:$0xff]
    %v620 = vld [vmem:[#allocation7 + $0x6e0] sm:$0xff]
    %v621 = vld [vmem:[#allocation7 + $0x6e8] sm:$0xff]
    %v622 = vld [vmem:[#allocation7 + $0x6f0] sm:$0xff]
    %v623 = vld [vmem:[#allocation7 + $0x6f8] sm:$0xff]
    %v624 = vld [vmem:[#allocation7 + $0x700] sm:$0xff]
    %v625 = vld [vmem:[#allocation7 + $0x708] sm:$0xff]
    %v626 = vld [vmem:[#allocation7 + $0x710] sm:$0xff]
    %v627 = vld [vmem:[#allocation7 + $0x718] sm:$0xff]
    %v628 = vld [vmem:[#allocation7 + $0x720] sm:$0xff]
    %v629 = vld [vmem:[#allocation7 + $0x728] sm:$0xff]
    %v630 = vld [vmem:[#allocation7 + $0x730] sm:$0xff]
    %v631 = vld [vmem:[#allocation7 + $0x738] sm:$0xff]
    %v632 = vld [vmem:[#allocation7 + $0x740] sm:$0xff]
    %v633 = vld [vmem:[#allocation7 + $0x748] sm:$0xff]
    %v634 = vld [vmem:[#allocation7 + $0x750] sm:$0xff]
    %v635 = vld [vmem:[#allocation7 + $0x758] sm:$0xff]
    %v636 = vld [vmem:[#allocation7 + $0x760] sm:$0xff]
    %v637 = vld [vmem:[#allocation7 + $0x768] sm:$0xff]
    %v638 = vld [vmem:[#allocation7 + $0x770] sm:$0xff]
    %v639 = vld [vmem:[#allocation7 + $0x778] sm:$0xff]
    %v640 = vld [vmem:[#allocation7 + $0x780] sm:$0xff]
    %v641 = vld [vmem:[#allocation7 + $0x788] sm:$0xff]
    %v642 = vld [vmem:[#allocation7 + $0x790] sm:$0xff]
    %v643 = vld [vmem:[#allocation7 + $0x798] sm:$0xff]
    %v644 = vld [vmem:[#allocation7 + $0x7a0] sm:$0xff]
    %v645 = vld [vmem:[#allocation7 + $0x7a8] sm:$0xff]
    %v646 = vld [vmem:[#allocation7 + $0x7b0] sm:$0xff]
    %v647 = vld [vmem:[#allocation7 + $0x7b8] sm:$0xff]
    %v648 = vld [vmem:[#allocation7 + $0x7c0] sm:$0xff]
    %v649 = vld [vmem:[#allocation7 + $0x7c8] sm:$0xff]
    %v650 = vld [vmem:[#allocation7 + $0x7d0] sm:$0xff]
    %v651 = vld [vmem:[#allocation7 + $0x7d8] sm:$0xff]
    %v652 = vld [vmem:[#allocation7 + $0x7e0] sm:$0xff]
    %v653 = vld [vmem:[#allocation7 + $0x7e8] sm:$0xff]
    %v654 = vld [vmem:[#allocation7 + $0x7f0] sm:$0xff]
    %v655 = vld [vmem:[#allocation7 + $0x7f8] sm:$0xff]
    %v656 = vld [vmem:[#allocation7 + $0x800] sm:$0xff]
    %v657 = vld [vmem:[#allocation7 + $0x808] sm:$0xff]
    %v658 = vld [vmem:[#allocation7 + $0x810] sm:$0xff]
    %v659 = vld [vmem:[#allocation7 + $0x818] sm:$0xff]
    %v660 = vld [vmem:[#allocation7 + $0x820] sm:$0xff]
    %v661 = vld [vmem:[#allocation7 + $0x828] sm:$0xff]
    %v662 = vld [vmem:[#allocation7 + $0x830] sm:$0xff]
    %v663 = vld [vmem:[#allocation7 + $0x838] sm:$0xff]
    %v664 = vld [vmem:[#allocation7 + $0x840] sm:$0xff]
    %v665 = vld [vmem:[#allocation7 + $0x848] sm:$0xff]
    %v666 = vld [vmem:[#allocation7 + $0x850] sm:$0xff]
    %v667 = vld [vmem:[#allocation7 + $0x858] sm:$0xff]
    %v668 = vld [vmem:[#allocation7 + $0x860] sm:$0xff]
    %v669 = vld [vmem:[#allocation7 + $0x868] sm:$0xff]
    %v670 = vld [vmem:[#allocation7 + $0x870] sm:$0xff]
    %v671 = vld [vmem:[#allocation7 + $0x878] sm:$0xff]
    %v672 = vld [vmem:[#allocation7 + $0x880] sm:$0xff]
    %v673 = vld [vmem:[#allocation7 + $0x888] sm:$0xff]
    %v674 = vld [vmem:[#allocation7 + $0x890] sm:$0xff]
    %v675 = vld [vmem:[#allocation7 + $0x898] sm:$0xff]
    %v676 = vld [vmem:[#allocation7 + $0x8a0] sm:$0xff]
    %v677 = vld [vmem:[#allocation7 + $0x8a8] sm:$0xff]
    %v678 = vld [vmem:[#allocation7 + $0x8b0] sm:$0xff]
    %v679 = vld [vmem:[#allocation7 + $0x8b8] sm:$0xff]
    %v680 = vld [vmem:[#allocation7 + $0x8c0] sm:$0xff]
    %v681 = vld [vmem:[#allocation7 + $0x8c8] sm:$0xff]
    %v682 = vld [vmem:[#allocation7 + $0x8d0] sm:$0xff]
    %v683 = vld [vmem:[#allocation7 + $0x8d8] sm:$0xff]
    %v684 = vld [vmem:[#allocation7 + $0x8e0] sm:$0xff]
    %v685 = vld [vmem:[#allocation7 + $0x8e8] sm:$0xff]
    %v686 = vld [vmem:[#allocation7 + $0x8f0] sm:$0xff]
    %v687 = vld [vmem:[#allocation7 + $0x8f8] sm:$0xff]
    %v688 = vld [vmem:[#allocation7 + $0x900] sm:$0xff]
    %v689 = vld [vmem:[#allocation7 + $0x908] sm:$0xff]
    %v690 = vld [vmem:[#allocation7 + $0x910] sm:$0xff]
    %v691 = vld [vmem:[#allocation7 + $0x918] sm:$0xff]
    %v692 = vld [vmem:[#allocation7 + $0x920] sm:$0xff]
    %v693 = vld [vmem:[#allocation7 + $0x928] sm:$0xff]
    %v694 = vld [vmem:[#allocation7 + $0x930] sm:$0xff]
    %v695 = vld [vmem:[#allocation7 + $0x938] sm:$0xff]
    %v696 = vld [vmem:[#allocation7 + $0x940] sm:$0xff]
    %v697 = vld [vmem:[#allocation7 + $0x948] sm:$0xff]
    %v698 = vld [vmem:[#allocation7 + $0x950] sm:$0xff]
    %v699 = vld [vmem:[#allocation7 + $0x958] sm:$0xff]
    %v700 = vld [vmem:[#allocation7 + $0x960] sm:$0xff]
    %v701 = vld [vmem:[#allocation7 + $0x968] sm:$0xff]
    %v702 = vld [vmem:[#allocation7 + $0x970] sm:$0xff]
    %v703 = vld [vmem:[#allocation7 + $0x978] sm:$0xff]
    %v704 = vld [vmem:[#allocation7 + $0x980] sm:$0xff]
    %v705 = vld [vmem:[#allocation7 + $0x988] sm:$0xff]
    %v706 = vld [vmem:[#allocation7 + $0x990] sm:$0xff]
    %v707 = vld [vmem:[#allocation7 + $0x998] sm:$0xff]
    %v708 = vld [vmem:[#allocation7 + $0x9a0] sm:$0xff]
    %v709 = vld [vmem:[#allocation7 + $0x9a8] sm:$0xff]
    %v710 = vld [vmem:[#allocation7 + $0x9b0] sm:$0xff]
    %v711 = vld [vmem:[#allocation7 + $0x9b8] sm:$0xff]
    %v712 = vld [vmem:[#allocation7 + $0x9c0] sm:$0xff]
    %v713 = vld [vmem:[#allocation7 + $0x9c8] sm:$0xff]
    %v714 = vld [vmem:[#allocation7 + $0x9d0] sm:$0xff]
    %v715 = vld [vmem:[#allocation7 + $0x9d8] sm:$0xff]
    %v716 = vld [vmem:[#allocation7 + $0x9e0] sm:$0xff]
    %v717 = vld [vmem:[#allocation7 + $0x9e8] sm:$0xff]
    %v718 = vld [vmem:[#allocation7 + $0x9f0] sm:$0xff]
    %v719 = vld [vmem:[#allocation7 + $0x9f8] sm:$0xff]
    %v720 = vld [vmem:[#allocation7 + $0xa00] sm:$0xff]
    %v721 = vld [vmem:[#allocation7 + $0xa08] sm:$0xff]
    %v722 = vld [vmem:[#allocation7 + $0xa10] sm:$0xff]
    %v723 = vld [vmem:[#allocation7 + $0xa18] sm:$0xff]
    %v724 = vld [vmem:[#allocation7 + $0xa20] sm:$0xff]
    %v725 = vld [vmem:[#allocation7 + $0xa28] sm:$0xff]
    %v726 = vld [vmem:[#allocation7 + $0xa30] sm:$0xff]
    %v727 = vld [vmem:[#allocation7 + $0xa38] sm:$0xff]
    %v728 = vld [vmem:[#allocation7 + $0xa40] sm:$0xff]
    %v729 = vld [vmem:[#allocation7 + $0xa48] sm:$0xff]
    %v730 = vld [vmem:[#allocation7 + $0xa50] sm:$0xff]
    %v731 = vld [vmem:[#allocation7 + $0xa58] sm:$0xff]
    %v732 = vld [vmem:[#allocation7 + $0xa60] sm:$0xff]
    %v733 = vld [vmem:[#allocation7 + $0xa68] sm:$0xff]
    %v734 = vld [vmem:[#allocation7 + $0xa70] sm:$0xff]
    %v735 = vld [vmem:[#allocation7 + $0xa78] sm:$0xff]
    %v736 = vld [vmem:[#allocation7 + $0xa80] sm:$0xff]
    %v737 = vld [vmem:[#allocation7 + $0xa88] sm:$0xff]
    %v738 = vld [vmem:[#allocation7 + $0xa90] sm:$0xff]
    %v739 = vld [vmem:[#allocation7 + $0xa98] sm:$0xff]
    %v740 = vld [vmem:[#allocation7 + $0xaa0] sm:$0xff]
    %v741 = vld [vmem:[#allocation7 + $0xaa8] sm:$0xff]
    %v742 = vld [vmem:[#allocation7 + $0xab0] sm:$0xff]
    %v743 = vld [vmem:[#allocation7 + $0xab8] sm:$0xff]
    %v744 = vld [vmem:[#allocation7 + $0xac0] sm:$0xff]
    %v745 = vld [vmem:[#allocation7 + $0xac8] sm:$0xff]
    %v746 = vld [vmem:[#allocation7 + $0xad0] sm:$0xff]
    %v747 = vld [vmem:[#allocation7 + $0xad8] sm:$0xff]
    %v748 = vld [vmem:[#allocation7 + $0xae0] sm:$0xff]
    %v749 = vld [vmem:[#allocation7 + $0xae8] sm:$0xff]
    %v750 = vld [vmem:[#allocation7 + $0xaf0] sm:$0xff]
    %v751 = vld [vmem:[#allocation7 + $0xaf8] sm:$0xff]
    %v752 = vld [vmem:[#allocation7 + $0xb00] sm:$0xff]
    %v753 = vld [vmem:[#allocation7 + $0xb08] sm:$0xff]
    %v754 = vld [vmem:[#allocation7 + $0xb10] sm:$0xff]
    %v755 = vld [vmem:[#allocation7 + $0xb18] sm:$0xff]
    %v756 = vld [vmem:[#allocation7 + $0xb20] sm:$0xff]
    %v757 = vld [vmem:[#allocation7 + $0xb28] sm:$0xff]
    %v758 = vld [vmem:[#allocation7 + $0xb30] sm:$0xff]
    %v759 = vld [vmem:[#allocation7 + $0xb38] sm:$0xff]
    %v760 = vld [vmem:[#allocation7 + $0xb40] sm:$0xff]
    %v761 = vld [vmem:[#allocation7 + $0xb48] sm:$0xff]
    %v762 = vld [vmem:[#allocation7 + $0xb50] sm:$0xff]
    %v763 = vld [vmem:[#allocation7 + $0xb58] sm:$0xff]
    %v764 = vld [vmem:[#allocation7 + $0xb60] sm:$0xff]
    %v765 = vld [vmem:[#allocation7 + $0xb68] sm:$0xff]
    %v766 = vld [vmem:[#allocation7 + $0xb70] sm:$0xff]
    %v767 = vld [vmem:[#allocation7 + $0xb78] sm:$0xff]
    %v768 = vld [vmem:[#allocation7 + $0xb80] sm:$0xff]
    %v769 = vld [vmem:[#allocation7 + $0xb88] sm:$0xff]
    %v770 = vld [vmem:[#allocation7 + $0xb90] sm:$0xff]
    %v771 = vld [vmem:[#allocation7 + $0xb98] sm:$0xff]
    %v772 = vld [vmem:[#allocation7 + $0xba0] sm:$0xff]
    %v773 = vld [vmem:[#allocation7 + $0xba8] sm:$0xff]
    %v774 = vld [vmem:[#allocation7 + $0xbb0] sm:$0xff]
    %v775 = vld [vmem:[#allocation7 + $0xbb8] sm:$0xff]
    %v776 = vld [vmem:[#allocation7 + $0xbc0] sm:$0xff]
    %v777 = vld [vmem:[#allocation7 + $0xbc8] sm:$0xff]
    %v778 = vld [vmem:[#allocation7 + $0xbd0] sm:$0xff]
    %v779 = vld [vmem:[#allocation7 + $0xbd8] sm:$0xff]
    %v780 = vld [vmem:[#allocation7 + $0xbe0] sm:$0xff]
    %v781 = vld [vmem:[#allocation7 + $0xbe8] sm:$0xff]
    %v782 = vld [vmem:[#allocation7 + $0xbf0] sm:$0xff]
    %v783 = vld [vmem:[#allocation7 + $0xbf8] sm:$0xff]
    %v784 = vld [vmem:[#allocation7 + $0xc00] sm:$0xff]
    %v785 = vld [vmem:[#allocation7 + $0xc08] sm:$0xff]
    %v786 = vld [vmem:[#allocation7 + $0xc10] sm:$0xff]
    %v787 = vld [vmem:[#allocation7 + $0xc18] sm:$0xff]
    %v788 = vld [vmem:[#allocation7 + $0xc20] sm:$0xff]
    %v789 = vld [vmem:[#allocation7 + $0xc28] sm:$0xff]
    %v790 = vld [vmem:[#allocation7 + $0xc30] sm:$0xff]
    %v791 = vld [vmem:[#allocation7 + $0xc38] sm:$0xff]
    %v792 = vld [vmem:[#allocation7 + $0xc40] sm:$0xff]
    %v793 = vld [vmem:[#allocation7 + $0xc48] sm:$0xff]
    %v794 = vld [vmem:[#allocation7 + $0xc50] sm:$0xff]
    %v795 = vld [vmem:[#allocation7 + $0xc58] sm:$0xff]
    %v796 = vld [vmem:[#allocation7 + $0xc60] sm:$0xff]
    %v797 = vld [vmem:[#allocation7 + $0xc68] sm:$0xff]
    %v798 = vld [vmem:[#allocation7 + $0xc70] sm:$0xff]
    %v799 = vld [vmem:[#allocation7 + $0xc78] sm:$0xff]
    %v800 = vld [vmem:[#allocation7 + $0xc80] sm:$0xff]
    %v801 = vld [vmem:[#allocation7 + $0xc88] sm:$0xff]
    %v802 = vld [vmem:[#allocation7 + $0xc90] sm:$0xff]
    %v803 = vld [vmem:[#allocation7 + $0xc98] sm:$0xff]
    %v804 = vld [vmem:[#allocation7 + $0xca0] sm:$0xff]
    %v805 = vld [vmem:[#allocation7 + $0xca8] sm:$0xff]
    %v806 = vld [vmem:[#allocation7 + $0xcb0] sm:$0xff]
    %v807 = vld [vmem:[#allocation7 + $0xcb8] sm:$0xff]
    %v808 = vld [vmem:[#allocation7 + $0xcc0] sm:$0xff]
    %v809 = vld [vmem:[#allocation7 + $0xcc8] sm:$0xff]
    %v810 = vld [vmem:[#allocation7 + $0xcd0] sm:$0xff]
    %v811 = vld [vmem:[#allocation7 + $0xcd8] sm:$0xff]
    %v812 = vld [vmem:[#allocation7 + $0xce0] sm:$0xff]
    %v813 = vld [vmem:[#allocation7 + $0xce8] sm:$0xff]
    %v814 = vld [vmem:[#allocation7 + $0xcf0] sm:$0xff]
    %v815 = vld [vmem:[#allocation7 + $0xcf8] sm:$0xff]
    %v816 = vld [vmem:[#allocation7 + $0xd00] sm:$0xff]
    %v817 = vld [vmem:[#allocation7 + $0xd08] sm:$0xff]
    %v818 = vld [vmem:[#allocation7 + $0xd10] sm:$0xff]
    %v819 = vld [vmem:[#allocation7 + $0xd18] sm:$0xff]
    %v820 = vld [vmem:[#allocation7 + $0xd20] sm:$0xff]
    %v821 = vld [vmem:[#allocation7 + $0xd28] sm:$0xff]
    %v822 = vld [vmem:[#allocation7 + $0xd30] sm:$0xff]
    %v823 = vld [vmem:[#allocation7 + $0xd38] sm:$0xff]
    %v824 = vld [vmem:[#allocation7 + $0xd40] sm:$0xff]
    %v825 = vld [vmem:[#allocation7 + $0xd48] sm:$0xff]
    %v826 = vld [vmem:[#allocation7 + $0xd50] sm:$0xff]
    %v827 = vld [vmem:[#allocation7 + $0xd58] sm:$0xff]
    %v828 = vld [vmem:[#allocation7 + $0xd60] sm:$0xff]
    %v829 = vld [vmem:[#allocation7 + $0xd68] sm:$0xff]
    %v830 = vld [vmem:[#allocation7 + $0xd70] sm:$0xff]
    %v831 = vld [vmem:[#allocation7 + $0xd78] sm:$0xff]
    %v832 = vld [vmem:[#allocation7 + $0xd80] sm:$0xff]
    %v833 = vld [vmem:[#allocation7 + $0xd88] sm:$0xff]
    %v834 = vld [vmem:[#allocation7 + $0xd90] sm:$0xff]
    %v835 = vld [vmem:[#allocation7 + $0xd98] sm:$0xff]
    %v836 = vld [vmem:[#allocation7 + $0xda0] sm:$0xff]
    %v837 = vld [vmem:[#allocation7 + $0xda8] sm:$0xff]
    %v838 = vld [vmem:[#allocation7 + $0xdb0] sm:$0xff]
    %v839 = vld [vmem:[#allocation7 + $0xdb8] sm:$0xff]
    %v840 = vld [vmem:[#allocation7 + $0xdc0] sm:$0xff]
    %v841 = vld [vmem:[#allocation7 + $0xdc8] sm:$0xff]
    %v842 = vld [vmem:[#allocation7 + $0xdd0] sm:$0xff]
    %v843 = vld [vmem:[#allocation7 + $0xdd8] sm:$0xff]
    %v844 = vld [vmem:[#allocation7 + $0xde0] sm:$0xff]
    %v845 = vld [vmem:[#allocation7 + $0xde8] sm:$0xff]
    %v846 = vld [vmem:[#allocation7 + $0xdf0] sm:$0xff]
    %v847 = vld [vmem:[#allocation7 + $0xdf8] sm:$0xff]
    %v848 = vld [vmem:[#allocation7 + $0xe00] sm:$0xff]
    %v849 = vld [vmem:[#allocation7 + $0xe08] sm:$0xff]
    %v850 = vld [vmem:[#allocation7 + $0xe10] sm:$0xff]
    %v851 = vld [vmem:[#allocation7 + $0xe18] sm:$0xff]
    %v852 = vld [vmem:[#allocation7 + $0xe20] sm:$0xff]
    %v853 = vld [vmem:[#allocation7 + $0xe28] sm:$0xff]
    %v854 = vld [vmem:[#allocation7 + $0xe30] sm:$0xff]
    %v855 = vld [vmem:[#allocation7 + $0xe38] sm:$0xff]
    %v856 = vld [vmem:[#allocation7 + $0xe40] sm:$0xff]
    %v857 = vld [vmem:[#allocation7 + $0xe48] sm:$0xff]
    %v858 = vld [vmem:[#allocation7 + $0xe50] sm:$0xff]
    %v859 = vld [vmem:[#allocation7 + $0xe58] sm:$0xff]
    %v860 = vld [vmem:[#allocation7 + $0xe60] sm:$0xff]
    %v861 = vld [vmem:[#allocation7 + $0xe68] sm:$0xff]
    %v862 = vld [vmem:[#allocation7 + $0xe70] sm:$0xff]
    %v863 = vld [vmem:[#allocation7 + $0xe78] sm:$0xff]
    %v864 = vld [vmem:[#allocation7 + $0xe80] sm:$0xff]
    %v865 = vld [vmem:[#allocation7 + $0xe88] sm:$0xff]
    %v866 = vld [vmem:[#allocation7 + $0xe90] sm:$0xff]
    %v867 = vld [vmem:[#allocation7 + $0xe98] sm:$0xff]
    %v868 = vld [vmem:[#allocation7 + $0xea0] sm:$0xff]
    %v869 = vld [vmem:[#allocation7 + $0xea8] sm:$0xff]
    %v870 = vld [vmem:[#allocation7 + $0xeb0] sm:$0xff]
    %v871 = vld [vmem:[#allocation7 + $0xeb8] sm:$0xff]
    %v872 = vld [vmem:[#allocation7 + $0xec0] sm:$0xff]
    %v873 = vld [vmem:[#allocation7 + $0xec8] sm:$0xff]
    %v874 = vld [vmem:[#allocation7 + $0xed0] sm:$0xff]
    %v875 = vld [vmem:[#allocation7 + $0xed8] sm:$0xff]
    %v876 = vld [vmem:[#allocation7 + $0xee0] sm:$0xff]
    %v877 = vld [vmem:[#allocation7 + $0xee8] sm:$0xff]
    %v878 = vld [vmem:[#allocation7 + $0xef0] sm:$0xff]
    %v879 = vld [vmem:[#allocation7 + $0xef8] sm:$0xff]
    %v880 = vld [vmem:[#allocation7 + $0xf00] sm:$0xff]
    %v881 = vld [vmem:[#allocation7 + $0xf08] sm:$0xff]
    %v882 = vld [vmem:[#allocation7 + $0xf10] sm:$0xff]
    %v883 = vld [vmem:[#allocation7 + $0xf18] sm:$0xff]
    %v884 = vld [vmem:[#allocation7 + $0xf20] sm:$0xff]
    %v885 = vld [vmem:[#allocation7 + $0xf28] sm:$0xff]
    %v886 = vld [vmem:[#allocation7 + $0xf30] sm:$0xff]
    %v887 = vld [vmem:[#allocation7 + $0xf38] sm:$0xff]
    %v888 = vld [vmem:[#allocation7 + $0xf40] sm:$0xff]
    %v889 = vld [vmem:[#allocation7 + $0xf48] sm:$0xff]
    %v890 = vld [vmem:[#allocation7 + $0xf50] sm:$0xff]
    %v891 = vld [vmem:[#allocation7 + $0xf58] sm:$0xff]
    %v892 = vld [vmem:[#allocation7 + $0xf60] sm:$0xff]
    %v893 = vld [vmem:[#allocation7 + $0xf68] sm:$0xff]
    %v894 = vld [vmem:[#allocation7 + $0xf70] sm:$0xff]
    %v895 = vld [vmem:[#allocation7 + $0xf78] sm:$0xff]
    %v896 = vld [vmem:[#allocation7 + $0xf80] sm:$0xff]
    %v897 = vld [vmem:[#allocation7 + $0xf88] sm:$0xff]
    %v898 = vld [vmem:[#allocation7 + $0xf90] sm:$0xff]
    %v899 = vld [vmem:[#allocation7 + $0xf98] sm:$0xff]
    %v900 = vld [vmem:[#allocation7 + $0xfa0] sm:$0xff]
    %v901 = vld [vmem:[#allocation7 + $0xfa8] sm:$0xff]
    %v902 = vld [vmem:[#allocation7 + $0xfb0] sm:$0xff]
    %v903 = vld [vmem:[#allocation7 + $0xfb8] sm:$0xff]
    %v904 = vld [vmem:[#allocation7 + $0xfc0] sm:$0xff]
    %v905 = vld [vmem:[#allocation7 + $0xfc8] sm:$0xff]
    %v906 = vld [vmem:[#allocation7 + $0xfd0] sm:$0xff]
    %v907 = vld [vmem:[#allocation7 + $0xfd8] sm:$0xff]
    %v908 = vld [vmem:[#allocation7 + $0xfe0] sm:$0xff]
    %v909 = vld [vmem:[#allocation7 + $0xfe8] sm:$0xff]
    %v910 = vld [vmem:[#allocation7 + $0xff0] sm:$0xff]
    %v911 = vld [vmem:[#allocation7 + $0xff8] sm:$0xff]
    %v912 = vld [vmem:[#allocation7 + $0x1000] sm:$0xff]
    %v913 = vld [vmem:[#allocation7 + $0x1008] sm:$0xff]
    %v914 = vld [vmem:[#allocation7 + $0x1010] sm:$0xff]
    %v915 = vld [vmem:[#allocation7 + $0x1018] sm:$0xff]
    %v916 = vld [vmem:[#allocation7 + $0x1020] sm:$0xff]
    %v917 = vld [vmem:[#allocation7 + $0x1028] sm:$0xff]
    %v918 = vld [vmem:[#allocation7 + $0x1030] sm:$0xff]
    %v919 = vld [vmem:[#allocation7 + $0x1038] sm:$0xff]
    %v920 = vld [vmem:[#allocation7 + $0x1040] sm:$0xff]
    %v921 = vld [vmem:[#allocation7 + $0x1048] sm:$0xff]
    %v922 = vld [vmem:[#allocation7 + $0x1050] sm:$0xff]
    %v923 = vld [vmem:[#allocation7 + $0x1058] sm:$0xff]
    %v924 = vld [vmem:[#allocation7 + $0x1060] sm:$0xff]
    %v925 = vld [vmem:[#allocation7 + $0x1068] sm:$0xff]
    %v926 = vld [vmem:[#allocation7 + $0x1070] sm:$0xff]
    %v927 = vld [vmem:[#allocation7 + $0x1078] sm:$0xff]
    %v928 = vld [vmem:[#allocation7 + $0x1080] sm:$0xff]
    %v929 = vld [vmem:[#allocation7 + $0x1088] sm:$0xff]
    %v930 = vld [vmem:[#allocation7 + $0x1090] sm:$0xff]
    %v931 = vld [vmem:[#allocation7 + $0x1098] sm:$0xff]
    %v932 = vld [vmem:[#allocation7 + $0x10a0] sm:$0xff]
    %v933 = vld [vmem:[#allocation7 + $0x10a8] sm:$0xff]
    %v934 = vld [vmem:[#allocation7 + $0x10b0] sm:$0xff]
    %v935 = vld [vmem:[#allocation7 + $0x10b8] sm:$0xff]
    %v936 = vld [vmem:[#allocation7 + $0x10c0] sm:$0xff]
    %v937 = vld [vmem:[#allocation7 + $0x10c8] sm:$0xff]
    %v938 = vld [vmem:[#allocation7 + $0x10d0] sm:$0xff]
    %v939 = vld [vmem:[#allocation7 + $0x10d8] sm:$0xff]
    %v940 = vld [vmem:[#allocation7 + $0x10e0] sm:$0xff]
    %v941 = vld [vmem:[#allocation7 + $0x10e8] sm:$0xff]
    %v942 = vld [vmem:[#allocation7 + $0x10f0] sm:$0xff]
    %v943 = vld [vmem:[#allocation7 + $0x10f8] sm:$0xff]
    %v944 = vld [vmem:[#allocation7 + $0x1100] sm:$0xff]
    %v945 = vld [vmem:[#allocation7 + $0x1108] sm:$0xff]
    %v946 = vld [vmem:[#allocation7 + $0x1110] sm:$0xff]
    %v947 = vld [vmem:[#allocation7 + $0x1118] sm:$0xff]
    %v948 = vld [vmem:[#allocation7 + $0x1120] sm:$0xff]
    %v949 = vld [vmem:[#allocation7 + $0x1128] sm:$0xff]
    %v950 = vld [vmem:[#allocation7 + $0x1130] sm:$0xff]
    %v951 = vld [vmem:[#allocation7 + $0x1138] sm:$0xff]
    %v952 = vld [vmem:[#allocation7 + $0x1140] sm:$0xff]
    %v953 = vld [vmem:[#allocation7 + $0x1148] sm:$0xff]
    %v954 = vld [vmem:[#allocation7 + $0x1150] sm:$0xff]
    %v955 = vld [vmem:[#allocation7 + $0x1158] sm:$0xff]
    %v956 = vld [vmem:[#allocation7 + $0x1160] sm:$0xff]
    %v957 = vld [vmem:[#allocation7 + $0x1168] sm:$0xff]
    %v958 = vld [vmem:[#allocation7 + $0x1170] sm:$0xff]
    %v959 = vld [vmem:[#allocation7 + $0x1178] sm:$0xff]
    %v960 = vld [vmem:[#allocation7 + $0x1180] sm:$0xff]
    %v961 = vld [vmem:[#allocation7 + $0x1188] sm:$0xff]
    %v962 = vld [vmem:[#allocation7 + $0x1190] sm:$0xff]
    %v963 = vld [vmem:[#allocation7 + $0x1198] sm:$0xff]
    %v964 = vld [vmem:[#allocation7 + $0x11a0] sm:$0xff]
    %v965 = vld [vmem:[#allocation7 + $0x11a8] sm:$0xff]
    %v966 = vld [vmem:[#allocation7 + $0x11b0] sm:$0xff]
    %v967 = vld [vmem:[#allocation7 + $0x11b8] sm:$0xff]
    %v968 = vld [vmem:[#allocation7 + $0x11c0] sm:$0xff]
    %v969 = vld [vmem:[#allocation7 + $0x11c8] sm:$0xff]
    %v970 = vld [vmem:[#allocation7 + $0x11d0] sm:$0xff]
    %v971 = vld [vmem:[#allocation7 + $0x11d8] sm:$0xff]
    %v972 = vld [vmem:[#allocation7 + $0x11e0] sm:$0xff]
    %v973 = vld [vmem:[#allocation7 + $0x11e8] sm:$0xff]
    %v974 = vld [vmem:[#allocation7 + $0x11f0] sm:$0xff]
    %v975 = vld [vmem:[#allocation7 + $0x11f8] sm:$0xff]
    %v976 = vld [vmem:[#allocation7 + $0x1200] sm:$0xff]
    %v977 = vld [vmem:[#allocation7 + $0x1208] sm:$0xff]
    %v978 = vld [vmem:[#allocation7 + $0x1210] sm:$0xff]
    %v979 = vld [vmem:[#allocation7 + $0x1218] sm:$0xff]
    %v980 = vld [vmem:[#allocation7 + $0x1220] sm:$0xff]
    %v981 = vld [vmem:[#allocation7 + $0x1228] sm:$0xff]
    %v982 = vld [vmem:[#allocation7 + $0x1230] sm:$0xff]
    %v983 = vld [vmem:[#allocation7 + $0x1238] sm:$0xff]
    %v984 = vld [vmem:[#allocation7 + $0x1240] sm:$0xff]
    %v985 = vld [vmem:[#allocation7 + $0x1248] sm:$0xff]
    %v986 = vld [vmem:[#allocation7 + $0x1250] sm:$0xff]
    %v987 = vld [vmem:[#allocation7 + $0x1258] sm:$0xff]
    %v988 = vld [vmem:[#allocation7 + $0x1260] sm:$0xff]
    %v989 = vld [vmem:[#allocation7 + $0x1268] sm:$0xff]
    %v990 = vld [vmem:[#allocation7 + $0x1270] sm:$0xff]
    %v991 = vld [vmem:[#allocation7 + $0x1278] sm:$0xff]
    %v992 = vld [vmem:[#allocation7 + $0x1280] sm:$0xff]
    %v993 = vld [vmem:[#allocation7 + $0x1288] sm:$0xff]
    %v994 = vld [vmem:[#allocation7 + $0x1290] sm:$0xff]
    %v995 = vld [vmem:[#allocation7 + $0x1298] sm:$0xff]
    %v996 = vld [vmem:[#allocation7 + $0x12a0] sm:$0xff]
    %v997 = vld [vmem:[#allocation7 + $0x12a8] sm:$0xff]
    %v998 = vld [vmem:[#allocation7 + $0x12b0] sm:$0xff]
    %v999 = vld [vmem:[#allocation7 + $0x12b8] sm:$0xff]
    %v1000 = vld [vmem:[#allocation7 + $0x12c0] sm:$0xff]
    %v1001 = vld [vmem:[#allocation7 + $0x12c8] sm:$0xff]
    %v1002 = vld [vmem:[#allocation7 + $0x12d0] sm:$0xff]
    %v1003 = vld [vmem:[#allocation7 + $0x12d8] sm:$0xff]
    %v1004 = vld [vmem:[#allocation7 + $0x12e0] sm:$0xff]
    %v1005 = vld [vmem:[#allocation7 + $0x12e8] sm:$0xff]
    %v1006 = vld [vmem:[#allocation7 + $0x12f0] sm:$0xff]
    %v1007 = vld [vmem:[#allocation7 + $0x12f8] sm:$0xff]
    %v1008 = vld [vmem:[#allocation7 + $0x1300] sm:$0xff]
    %v1009 = vld [vmem:[#allocation7 + $0x1308] sm:$0xff]
    %v1010 = vld [vmem:[#allocation7 + $0x1310] sm:$0xff]
    %v1011 = vld [vmem:[#allocation7 + $0x1318] sm:$0xff]
    %v1012 = vld [vmem:[#allocation7 + $0x1320] sm:$0xff]
    %v1013 = vld [vmem:[#allocation7 + $0x1328] sm:$0xff]
    %v1014 = vld [vmem:[#allocation7 + $0x1330] sm:$0xff]
    %v1015 = vld [vmem:[#allocation7 + $0x1338] sm:$0xff]
    %v1016 = vld [vmem:[#allocation7 + $0x1340] sm:$0xff]
    %v1017 = vld [vmem:[#allocation7 + $0x1348] sm:$0xff]
    %v1018 = vld [vmem:[#allocation7 + $0x1350] sm:$0xff]
    %v1019 = vld [vmem:[#allocation7 + $0x1358] sm:$0xff]
    %v1020 = vld [vmem:[#allocation7 + $0x1360] sm:$0xff]
    %v1021 = vld [vmem:[#allocation7 + $0x1368] sm:$0xff]
    %v1022 = vld [vmem:[#allocation7 + $0x1370] sm:$0xff]
    %v1023 = vld [vmem:[#allocation7 + $0x1378] sm:$0xff]
    %v1024 = vld [vmem:[#allocation7 + $0x1380] sm:$0xff]
    %v1025 = vld [vmem:[#allocation7 + $0x1388] sm:$0xff]
    %v1026 = vld [vmem:[#allocation7 + $0x1390] sm:$0xff]
    %v1027 = vld [vmem:[#allocation7 + $0x1398] sm:$0xff]
    %v1028 = vld [vmem:[#allocation7 + $0x13a0] sm:$0xff]
    %v1029 = vld [vmem:[#allocation7 + $0x13a8] sm:$0xff]
    %v1030 = vld [vmem:[#allocation7 + $0x13b0] sm:$0xff]
    %v1031 = vld [vmem:[#allocation7 + $0x13b8] sm:$0xff]
    %v1032 = vld [vmem:[#allocation7 + $0x13c0] sm:$0xff]
    %v1033 = vld [vmem:[#allocation7 + $0x13c8] sm:$0xff]
    %v1034 = vld [vmem:[#allocation7 + $0x13d0] sm:$0xff]
    %v1035 = vld [vmem:[#allocation7 + $0x13d8] sm:$0xff]
    %v1036 = vld [vmem:[#allocation7 + $0x13e0] sm:$0xff]
    %v1037 = vld [vmem:[#allocation7 + $0x13e8] sm:$0xff]
    %v1038 = vld [vmem:[#allocation7 + $0x13f0] sm:$0xff]
    %v1039 = vld [vmem:[#allocation7 + $0x13f8] sm:$0xff]
    %v1040 = vld [vmem:[#allocation7 + $0x1400] sm:$0xff]
    %v1041 = vld [vmem:[#allocation7 + $0x1408] sm:$0xff]
    %v1042 = vld [vmem:[#allocation7 + $0x1410] sm:$0xff]
    %v1043 = vld [vmem:[#allocation7 + $0x1418] sm:$0xff]
    %v1044 = vld [vmem:[#allocation7 + $0x1420] sm:$0xff]
    %v1045 = vld [vmem:[#allocation7 + $0x1428] sm:$0xff]
    %v1046 = vld [vmem:[#allocation7 + $0x1430] sm:$0xff]
    %v1047 = vld [vmem:[#allocation7 + $0x1438] sm:$0xff]
    %v1048 = vld [vmem:[#allocation7 + $0x1440] sm:$0xff]
    %v1049 = vld [vmem:[#allocation7 + $0x1448] sm:$0xff]
    %v1050 = vld [vmem:[#allocation7 + $0x1450] sm:$0xff]
    %v1051 = vld [vmem:[#allocation7 + $0x1458] sm:$0xff]
    %v1052 = vld [vmem:[#allocation7 + $0x1460] sm:$0xff]
    %v1053 = vld [vmem:[#allocation7 + $0x1468] sm:$0xff]
    %v1054 = vld [vmem:[#allocation7 + $0x1470] sm:$0xff]
    %v1055 = vld [vmem:[#allocation7 + $0x1478] sm:$0xff]
    %v1056 = vld [vmem:[#allocation7 + $0x1480] sm:$0xff]
    %v1057 = vld [vmem:[#allocation7 + $0x1488] sm:$0xff]
    %v1058 = vld [vmem:[#allocation7 + $0x1490] sm:$0xff]
    %v1059 = vld [vmem:[#allocation7 + $0x1498] sm:$0xff]
    %v1060 = vld [vmem:[#allocation7 + $0x14a0] sm:$0xff]
    %v1061 = vld [vmem:[#allocation7 + $0x14a8] sm:$0xff]
    %v1062 = vld [vmem:[#allocation7 + $0x14b0] sm:$0xff]
    %v1063 = vld [vmem:[#allocation7 + $0x14b8] sm:$0xff]
    %v1064 = vld [vmem:[#allocation7 + $0x14c0] sm:$0xff]
    %v1065 = vld [vmem:[#allocation7 + $0x14c8] sm:$0xff]
    %v1066 = vld [vmem:[#allocation7 + $0x14d0] sm:$0xff]
    %v1067 = vld [vmem:[#allocation7 + $0x14d8] sm:$0xff]
    %v1068 = vld [vmem:[#allocation7 + $0x14e0] sm:$0xff]
    %v1069 = vld [vmem:[#allocation7 + $0x14e8] sm:$0xff]
    %v1070 = vld [vmem:[#allocation7 + $0x14f0] sm:$0xff]
    %v1071 = vld [vmem:[#allocation7 + $0x14f8] sm:$0xff]
    %v1072 = vld [vmem:[#allocation7 + $0x1500] sm:$0xff]
    %v1073 = vld [vmem:[#allocation7 + $0x1508] sm:$0xff]
    %v1074 = vld [vmem:[#allocation7 + $0x1510] sm:$0xff]
    %v1075 = vld [vmem:[#allocation7 + $0x1518] sm:$0xff]
    %v1076 = vld [vmem:[#allocation7 + $0x1520] sm:$0xff]
    %v1077 = vld [vmem:[#allocation7 + $0x1528] sm:$0xff]
    %v1078 = vld [vmem:[#allocation7 + $0x1530] sm:$0xff]
    %v1079 = vld [vmem:[#allocation7 + $0x1538] sm:$0xff]
    %v1080 = vld [vmem:[#allocation7 + $0x1540] sm:$0xff]
    %v1081 = vld [vmem:[#allocation7 + $0x1548] sm:$0xff]
    %v1082 = vld [vmem:[#allocation7 + $0x1550] sm:$0xff]
    %v1083 = vld [vmem:[#allocation7 + $0x1558] sm:$0xff]
    %v1084 = vld [vmem:[#allocation7 + $0x1560] sm:$0xff]
    %v1085 = vld [vmem:[#allocation7 + $0x1568] sm:$0xff]
    %v1086 = vld [vmem:[#allocation7 + $0x1570] sm:$0xff]
    %v1087 = vld [vmem:[#allocation7 + $0x1578] sm:$0xff]
    %v1088 = vld [vmem:[#allocation7 + $0x1580] sm:$0xff]
    %v1089 = vld [vmem:[#allocation7 + $0x1588] sm:$0xff]
    %v1090 = vld [vmem:[#allocation7 + $0x1590] sm:$0xff]
    %v1091 = vld [vmem:[#allocation7 + $0x1598] sm:$0xff]
    %v1092 = vld [vmem:[#allocation7 + $0x15a0] sm:$0xff]
    %v1093 = vld [vmem:[#allocation8] sm:$0xff]
    %v1094 = vld [vmem:[#allocation8 + $0x8] sm:$0x7]
    %v1097 = vlaneseq
    %v1098 = vshrl.u32 %v1097, 7
    %v1099 = vsub.s32 0, %v1098
    %v1100 = vrot.slane %v1093, %v1099
    %v1101 = vlaneseq
    %v1102 = vshrl.u32 %v1101, 7
    %v1103 = vsub.s32 1, %v1102
    %v1104 = vrot.slane %v1093, %v1103
    %v1105 = vlaneseq
    %v1106 = vshrl.u32 %v1105, 7
    %v1107 = vsub.s32 2, %v1106
    %v1108 = vrot.slane %v1093, %v1107
    %v1109 = vlaneseq
    %v1110 = vshrl.u32 %v1109, 7
    %v1111 = vsub.s32 3, %v1110
    %v1112 = vrot.slane %v1093, %v1111
    %v1113 = vlaneseq
    %v1114 = vshrl.u32 %v1113, 7
    %v1115 = vsub.s32 4, %v1114
    %v1116 = vrot.slane %v1093, %v1115
    %v1117 = vlaneseq
    %v1118 = vshrl.u32 %v1117, 7
    %v1119 = vsub.s32 5, %v1118
    %v1120 = vrot.slane %v1093, %v1119
    %v1121 = vlaneseq
    %v1122 = vshrl.u32 %v1121, 7
    %v1123 = vsub.s32 6, %v1122
    %v1124 = vrot.slane %v1093, %v1123
    %v1125 = vlaneseq
    %v1126 = vshrl.u32 %v1125, 7
    %v1127 = vsub.s32 7, %v1126
    %v1128 = vrot.slane %v1093, %v1127
    %v1129 = vlaneseq
    %v1130 = vshrl.u32 %v1129, 7
    %v1131 = vsub.s32 0, %v1130
    %v1132 = vrot.slane %v1094, %v1131
    %v1133 = vlaneseq
    %v1134 = vshrl.u32 %v1133, 7
    %v1135 = vsub.s32 1, %v1134
    %v1136 = vrot.slane %v1094, %v1135
    %v1137 = vlaneseq
    %v1138 = vshrl.u32 %v1137, 7
    %v1139 = vsub.s32 2, %v1138
    %v1140 = vrot.slane %v1094, %v1139
    %vm1152 = vcmask 982016
    %v1154 = vsel %vm1152, %v399, 0
    %1156 = vmatprep.subr.mxu0 %v566
    %1157 = vmatpush1.msra.mxu0 %v565
    %1158 = vmatprep.subr.mxu0 %v555
    %1159 = vmatpush1.msra.mxu0 %v554
    %1160 = vmatprep.subr.mxu0 %v544
    %1161 = vmatpush1.msra.mxu0 %v543
    %1162 = vmatprep.subr.mxu0 %v533
    %1163 = vmatpush1.msra.mxu0 %v532
    %1164 = vmatprep.subr.mxu0 %v522
    %1165 = vmatpush1.msra.mxu0 %v521
    %1166 = vmatprep.subr.mxu0 %v511
    %1167 = vmatpush1.msra.mxu0 %v510
    %1168 = vmatprep.subr.mxu0 %v500
    %1169 = vmatpush1.msra.mxu0 %v499
    %1170 = vmatprep.subr.mxu0 %v489
    %1171 = vmatpush1.msra.mxu0 %v488
    %1172 = vmatprep.subr.mxu0 %v478
    %1173 = vmatpush1.msra.mxu0 %v477
    %1174 = vmatprep.subr.mxu0 %v467
    %1175 = vmatpush1.msra.mxu0 %v466
    %1176 = vmatprep.subr.mxu0 %v456
    %1177 = vmatpush1.msra.mxu0 %v455
    %1178 = vmatprep.subr.mxu0 %v445
    %1179 = vmatpush1.msra.mxu0 %v444
    %1180 = vmatprep.subr.mxu0 %v434
    %1181 = vmatpush1.msra.mxu0 %v433
    %1182 = vmatprep.subr.mxu0 %v423
    %1183 = vmatpush1.msra.mxu0 %v422
    %1184 = vmatprep.subr.mxu0 %v412
    %1185 = vmatpush1.msra.mxu0 %v411
    %1186 = vmatprep.subr.mxu0 %v401
    %1187 = vmatpush1.msra.mxu0 %v400
    %1188 = vmatprep.subr.mxu0 %v742
    %1189 = vmatpush2.msra.mxu0 %v741
    %1190 = vmatprep.subr.mxu0 %v731
    %1191 = vmatpush2.msra.mxu0 %v730
    %1192 = vmatprep.subr.mxu0 %v720
    %1193 = vmatpush2.msra.mxu0 %v719
    %1194 = vmatprep.subr.mxu0 %v709
    %1195 = vmatpush2.msra.mxu0 %v708
    %1196 = vmatprep.subr.mxu0 %v698
    %1197 = vmatpush2.msra.mxu0 %v697
    %1198 = vmatprep.subr.mxu0 %v687
    %1199 = vmatpush2.msra.mxu0 %v686
    %1200 = vmatprep.subr.mxu0 %v676
    %1201 = vmatpush2.msra.mxu0 %v675
    %1202 = vmatprep.subr.mxu0 %v665
    %1203 = vmatpush2.msra.mxu0 %v664
    %1204 = vmatprep.subr.mxu0 %v654
    %1205 = vmatpush2.msra.mxu0 %v653
    %1206 = vmatprep.subr.mxu0 %v643
    %1207 = vmatpush2.msra.mxu0 %v642
    %1208 = vmatprep.subr.mxu0 %v632
    %1209 = vmatpush2.msra.mxu0 %v631
    %1210 = vmatprep.subr.mxu0 %v621
    %1211 = vmatpush2.msra.mxu0 %v620
    %1212 = vmatprep.subr.mxu0 %v610
    %1213 = vmatpush2.msra.mxu0 %v609
    %1214 = vmatprep.subr.mxu0 %v599
    %1215 = vmatpush2.msra.mxu0 %v598
    %1216 = vmatprep.subr.mxu0 %v588
    %1217 = vmatpush2.msra.mxu0 %v587
    %1218 = vmatprep.subr.mxu0 %v577
    %1219 = vmatpush2.msra.mxu0 %v576
    %1220 = vmatprep.mubr.f32.mxu0 %v397
    %1221 = vmatmul.mubr.f32.gmra.mxu0 %v396
    %v1222 = vpop.f32.mrf.mxu0
    %v1223 = vadd.f32 %v1100, %v1222
    %v1224 = vpop.f32.mrf.mxu0
    %v1225 = vadd.f32 %v1104, %v1224
    %1226 = vdwg.mxu0
    %1227 = vmatprep.subr.mxu0 %v918
    %1228 = vmatpush1.msra.mxu0 %v917
    %1229 = vmatprep.subr.mxu0 %v907
    %1230 = vmatpush1.msra.mxu0 %v906
    %1231 = vmatprep.subr.mxu0 %v896
    %1232 = vmatpush1.msra.mxu0 %v895
    %1233 = vmatprep.subr.mxu0 %v885
    %1234 = vmatpush1.msra.mxu0 %v884
    %1235 = vmatprep.subr.mxu0 %v874
    %1236 = vmatpush1.msra.mxu0 %v873
    %1237 = vmatprep.subr.mxu0 %v863
    %1238 = vmatpush1.msra.mxu0 %v862
    %1239 = vmatprep.subr.mxu0 %v852
    %1240 = vmatpush1.msra.mxu0 %v851
    %1241 = vmatprep.subr.mxu0 %v841
    %1242 = vmatpush1.msra.mxu0 %v840
    %1243 = vmatprep.subr.mxu0 %v830
    %1244 = vmatpush1.msra.mxu0 %v829
    %1245 = vmatprep.subr.mxu0 %v819
    %1246 = vmatpush1.msra.mxu0 %v818
    %1247 = vmatprep.subr.mxu0 %v808
    %1248 = vmatpush1.msra.mxu0 %v807
    %1249 = vmatprep.subr.mxu0 %v797
    %1250 = vmatpush1.msra.mxu0 %v796
    %1251 = vmatprep.subr.mxu0 %v786
    %1252 = vmatpush1.msra.mxu0 %v785
    %1253 = vmatprep.subr.mxu0 %v775
    %1254 = vmatpush1.msra.mxu0 %v774
    %1255 = vmatprep.subr.mxu0 %v764
    %1256 = vmatpush1.msra.mxu0 %v763
    %1257 = vmatprep.subr.mxu0 %v753
    %1258 = vmatpush1.msra.mxu0 %v752
    %1259 = vmatprep.subr.mxu0 0.0
    %1260 = vmatpush2.msra.mxu0 0.0
    %1261 = vmatprep.subr.mxu0 %v1083
    %1262 = vmatpush2.msra.mxu0 %v1082
    %1263 = vmatprep.subr.mxu0 %v1072
    %1264 = vmatpush2.msra.mxu0 %v1071
    %1265 = vmatprep.subr.mxu0 %v1061
    %1266 = vmatpush2.msra.mxu0 %v1060
    %1267 = vmatprep.subr.mxu0 %v1050
    %1268 = vmatpush2.msra.mxu0 %v1049
    %1269 = vmatprep.subr.mxu0 %v1039
    %1270 = vmatpush2.msra.mxu0 %v1038
    %1271 = vmatprep.subr.mxu0 %v1028
    %1272 = vmatpush2.msra.mxu0 %v1027
    %1273 = vmatprep.subr.mxu0 %v1017
    %1274 = vmatpush2.msra.mxu0 %v1016
    %1275 = vmatprep.subr.mxu0 %v1006
    %1276 = vmatpush2.msra.mxu0 %v1005
    %1277 = vmatprep.subr.mxu0 %v995
    %1278 = vmatpush2.msra.mxu0 %v994
    %1279 = vmatprep.subr.mxu0 %v984
    %1280 = vmatpush2.msra.mxu0 %v983
    %1281 = vmatprep.subr.mxu0 %v973
    %1282 = vmatpush2.msra.mxu0 %v972
    %1283 = vmatprep.subr.mxu0 %v962
    %1284 = vmatpush2.msra.mxu0 %v961
    %1285 = vmatprep.subr.mxu0 %v951
    %1286 = vmatpush2.msra.mxu0 %v950
    %1287 = vmatprep.subr.mxu0 %v940
    %1288 = vmatpush2.msra.mxu0 %v939
    %1289 = vmatprep.subr.mxu0 %v929
    %1290 = vmatpush2.msra.mxu0 %v928
    %1291 = vmatprep.mubr.f32.mxu0 %v1154
    %1292 = vmatmul.mubr.f32.gmra.mxu0 %v398
    %v1293 = vpop.f32.mrf.mxu0
    %v1294 = vadd.f32 %v1223, %v1293
    %v1295 = vpop.f32.mrf.mxu0
    %v1296 = vadd.f32 %v1225, %v1295
    %1297 = vdwg.mxu0
    %1298 = vmatprep.subr.mxu0 %v568
    %1299 = vmatpush1.msra.mxu0 %v567
    %1300 = vmatprep.subr.mxu0 %v557
    %1301 = vmatpush1.msra.mxu0 %v556
    %1302 = vmatprep.subr.mxu0 %v546
    %1303 = vmatpush1.msra.mxu0 %v545
    %1304 = vmatprep.subr.mxu0 %v535
    %1305 = vmatpush1.msra.mxu0 %v534
    %1306 = vmatprep.subr.mxu0 %v524
    %1307 = vmatpush1.msra.mxu0 %v523
    %1308 = vmatprep.subr.mxu0 %v513
    %1309 = vmatpush1.msra.mxu0 %v512
    %1310 = vmatprep.subr.mxu0 %v502
    %1311 = vmatpush1.msra.mxu0 %v501
    %1312 = vmatprep.subr.mxu0 %v491
    %1313 = vmatpush1.msra.mxu0 %v490
    %1314 = vmatprep.subr.mxu0 %v480
    %1315 = vmatpush1.msra.mxu0 %v479
    %1316 = vmatprep.subr.mxu0 %v469
    %1317 = vmatpush1.msra.mxu0 %v468
    %1318 = vmatprep.subr.mxu0 %v458
    %1319 = vmatpush1.msra.mxu0 %v457
    %1320 = vmatprep.subr.mxu0 %v447
    %1321 = vmatpush1.msra.mxu0 %v446
    %1322 = vmatprep.subr.mxu0 %v436
    %1323 = vmatpush1.msra.mxu0 %v435
    %1324 = vmatprep.subr.mxu0 %v425
    %1325 = vmatpush1.msra.mxu0 %v424
    %1326 = vmatprep.subr.mxu0 %v414
    %1327 = vmatpush1.msra.mxu0 %v413
    %1328 = vmatprep.subr.mxu0 %v403
    %1329 = vmatpush1.msra.mxu0 %v402
    %1330 = vmatprep.subr.mxu0 %v744
    %1331 = vmatpush2.msra.mxu0 %v743
    %1332 = vmatprep.subr.mxu0 %v733
    %1333 = vmatpush2.msra.mxu0 %v732
    %1334 = vmatprep.subr.mxu0 %v722
    %1335 = vmatpush2.msra.mxu0 %v721
    %1336 = vmatprep.subr.mxu0 %v711
    %1337 = vmatpush2.msra.mxu0 %v710
    %1338 = vmatprep.subr.mxu0 %v700
    %1339 = vmatpush2.msra.mxu0 %v699
    %1340 = vmatprep.subr.mxu0 %v689
    %1341 = vmatpush2.msra.mxu0 %v688
    %1342 = vmatprep.subr.mxu0 %v678
    %1343 = vmatpush2.msra.mxu0 %v677
    %1344 = vmatprep.subr.mxu0 %v667
    %1345 = vmatpush2.msra.mxu0 %v666
    %1346 = vmatprep.subr.mxu0 %v656
    %1347 = vmatpush2.msra.mxu0 %v655
    %1348 = vmatprep.subr.mxu0 %v645
    %1349 = vmatpush2.msra.mxu0 %v644
    %1350 = vmatprep.subr.mxu0 %v634
    %1351 = vmatpush2.msra.mxu0 %v633
    %1352 = vmatprep.subr.mxu0 %v623
    %1353 = vmatpush2.msra.mxu0 %v622
    %1354 = vmatprep.subr.mxu0 %v612
    %1355 = vmatpush2.msra.mxu0 %v611
    %1356 = vmatprep.subr.mxu0 %v601
    %1357 = vmatpush2.msra.mxu0 %v600
    %1358 = vmatprep.subr.mxu0 %v590
    %1359 = vmatpush2.msra.mxu0 %v589
    %1360 = vmatprep.subr.mxu0 %v579
    %1361 = vmatpush2.msra.mxu0 %v578
    %1362 = vmatprep.mubr.f32.mxu0 %v397
    %1363 = vmatmul.mubr.f32.gmra.mxu0 %v396
    %v1364 = vpop.f32.mrf.mxu0
    %v1365 = vadd.f32 %v1108, %v1364
    %v1366 = vpop.f32.mrf.mxu0
    %v1367 = vadd.f32 %v1112, %v1366
    %1368 = vdwg.mxu0
    %1369 = vmatprep.subr.mxu0 %v920
    %1370 = vmatpush1.msra.mxu0 %v919
    %1371 = vmatprep.subr.mxu0 %v909
    %1372 = vmatpush1.msra.mxu0 %v908
    %1373 = vmatprep.subr.mxu0 %v898
    %1374 = vmatpush1.msra.mxu0 %v897
    %1375 = vmatprep.subr.mxu0 %v887
    %1376 = vmatpush1.msra.mxu0 %v886
    %1377 = vmatprep.subr.mxu0 %v876
    %1378 = vmatpush1.msra.mxu0 %v875
    %1379 = vmatprep.subr.mxu0 %v865
    %1380 = vmatpush1.msra.mxu0 %v864
    %1381 = vmatprep.subr.mxu0 %v854
    %1382 = vmatpush1.msra.mxu0 %v853
    %1383 = vmatprep.subr.mxu0 %v843
    %1384 = vmatpush1.msra.mxu0 %v842
    %1385 = vmatprep.subr.mxu0 %v832
    %1386 = vmatpush1.msra.mxu0 %v831
    %1387 = vmatprep.subr.mxu0 %v821
    %1388 = vmatpush1.msra.mxu0 %v820
    %1389 = vmatprep.subr.mxu0 %v810
    %1390 = vmatpush1.msra.mxu0 %v809
    %1391 = vmatprep.subr.mxu0 %v799
    %1392 = vmatpush1.msra.mxu0 %v798
    %1393 = vmatprep.subr.mxu0 %v788
    %1394 = vmatpush1.msra.mxu0 %v787
    %1395 = vmatprep.subr.mxu0 %v777
    %1396 = vmatpush1.msra.mxu0 %v776
    %1397 = vmatprep.subr.mxu0 %v766
    %1398 = vmatpush1.msra.mxu0 %v765
    %1399 = vmatprep.subr.mxu0 %v755
    %1400 = vmatpush1.msra.mxu0 %v754
    %1401 = vmatprep.subr.mxu0 0.0
    %1402 = vmatpush2.msra.mxu0 0.0
    %1403 = vmatprep.subr.mxu0 %v1085
    %1404 = vmatpush2.msra.mxu0 %v1084
    %1405 = vmatprep.subr.mxu0 %v1074
    %1406 = vmatpush2.msra.mxu0 %v1073
    %1407 = vmatprep.subr.mxu0 %v1063
    %1408 = vmatpush2.msra.mxu0 %v1062
    %1409 = vmatprep.subr.mxu0 %v1052
    %1410 = vmatpush2.msra.mxu0 %v1051
    %1411 = vmatprep.subr.mxu0 %v1041
    %1412 = vmatpush2.msra.mxu0 %v1040
    %1413 = vmatprep.subr.mxu0 %v1030
    %1414 = vmatpush2.msra.mxu0 %v1029
    %1415 = vmatprep.subr.mxu0 %v1019
    %1416 = vmatpush2.msra.mxu0 %v1018
    %1417 = vmatprep.subr.mxu0 %v1008
    %1418 = vmatpush2.msra.mxu0 %v1007
    %1419 = vmatprep.subr.mxu0 %v997
    %1420 = vmatpush2.msra.mxu0 %v996
    %1421 = vmatprep.subr.mxu0 %v986
    %1422 = vmatpush2.msra.mxu0 %v985
    %1423 = vmatprep.subr.mxu0 %v975
    %1424 = vmatpush2.msra.mxu0 %v974
    %1425 = vmatprep.subr.mxu0 %v964
    %1426 = vmatpush2.msra.mxu0 %v963
    %1427 = vmatprep.subr.mxu0 %v953
    %1428 = vmatpush2.msra.mxu0 %v952
    %1429 = vmatprep.subr.mxu0 %v942
    %1430 = vmatpush2.msra.mxu0 %v941
    %1431 = vmatprep.subr.mxu0 %v931
    %1432 = vmatpush2.msra.mxu0 %v930
    %1433 = vmatprep.mubr.f32.mxu0 %v1154
    %1434 = vmatmul.mubr.f32.gmra.mxu0 %v398
    %v1435 = vpop.f32.mrf.mxu0
    %v1436 = vadd.f32 %v1365, %v1435
    %v1437 = vpop.f32.mrf.mxu0
    %v1438 = vadd.f32 %v1367, %v1437
    %1439 = vdwg.mxu0
    %1440 = vmatprep.subr.mxu0 %v570
    %1441 = vmatpush1.msra.mxu0 %v569
    %1442 = vmatprep.subr.mxu0 %v559
    %1443 = vmatpush1.msra.mxu0 %v558
    %1444 = vmatprep.subr.mxu0 %v548
    %1445 = vmatpush1.msra.mxu0 %v547
    %1446 = vmatprep.subr.mxu0 %v537
    %1447 = vmatpush1.msra.mxu0 %v536
    %1448 = vmatprep.subr.mxu0 %v526
    %1449 = vmatpush1.msra.mxu0 %v525
    %1450 = vmatprep.subr.mxu0 %v515
    %1451 = vmatpush1.msra.mxu0 %v514
    %1452 = vmatprep.subr.mxu0 %v504
    %1453 = vmatpush1.msra.mxu0 %v503
    %1454 = vmatprep.subr.mxu0 %v493
    %1455 = vmatpush1.msra.mxu0 %v492
    %1456 = vmatprep.subr.mxu0 %v482
    %1457 = vmatpush1.msra.mxu0 %v481
    %1458 = vmatprep.subr.mxu0 %v471
    %1459 = vmatpush1.msra.mxu0 %v470
    %1460 = vmatprep.subr.mxu0 %v460
    %1461 = vmatpush1.msra.mxu0 %v459
    %1462 = vmatprep.subr.mxu0 %v449
    %1463 = vmatpush1.msra.mxu0 %v448
    %1464 = vmatprep.subr.mxu0 %v438
    %1465 = vmatpush1.msra.mxu0 %v437
    %1466 = vmatprep.subr.mxu0 %v427
    %1467 = vmatpush1.msra.mxu0 %v426
    %1468 = vmatprep.subr.mxu0 %v416
    %1469 = vmatpush1.msra.mxu0 %v415
    %1470 = vmatprep.subr.mxu0 %v405
    %1471 = vmatpush1.msra.mxu0 %v404
    %1472 = vmatprep.subr.mxu0 %v746
    %1473 = vmatpush2.msra.mxu0 %v745
    %1474 = vmatprep.subr.mxu0 %v735
    %1475 = vmatpush2.msra.mxu0 %v734
    %1476 = vmatprep.subr.mxu0 %v724
    %1477 = vmatpush2.msra.mxu0 %v723
    %1478 = vmatprep.subr.mxu0 %v713
    %1479 = vmatpush2.msra.mxu0 %v712
    %1480 = vmatprep.subr.mxu0 %v702
    %1481 = vmatpush2.msra.mxu0 %v701
    %1482 = vmatprep.subr.mxu0 %v691
    %1483 = vmatpush2.msra.mxu0 %v690
    %1484 = vmatprep.subr.mxu0 %v680
    %1485 = vmatpush2.msra.mxu0 %v679
    %1486 = vmatprep.subr.mxu0 %v669
    %1487 = vmatpush2.msra.mxu0 %v668
    %1488 = vmatprep.subr.mxu0 %v658
    %1489 = vmatpush2.msra.mxu0 %v657
    %1490 = vmatprep.subr.mxu0 %v647
    %1491 = vmatpush2.msra.mxu0 %v646
    %1492 = vmatprep.subr.mxu0 %v636
    %1493 = vmatpush2.msra.mxu0 %v635
    %1494 = vmatprep.subr.mxu0 %v625
    %1495 = vmatpush2.msra.mxu0 %v624
    %1496 = vmatprep.subr.mxu0 %v614
    %1497 = vmatpush2.msra.mxu0 %v613
    %1498 = vmatprep.subr.mxu0 %v603
    %1499 = vmatpush2.msra.mxu0 %v602
    %1500 = vmatprep.subr.mxu0 %v592
    %1501 = vmatpush2.msra.mxu0 %v591
    %1502 = vmatprep.subr.mxu0 %v581
    %1503 = vmatpush2.msra.mxu0 %v580
    %1504 = vmatprep.mubr.f32.mxu0 %v397
    %1505 = vmatmul.mubr.f32.gmra.mxu0 %v396
    %v1506 = vpop.f32.mrf.mxu0
    %v1507 = vadd.f32 %v1116, %v1506
    %v1508 = vpop.f32.mrf.mxu0
    %v1509 = vadd.f32 %v1120, %v1508
    %1510 = vdwg.mxu0
    %1511 = vmatprep.subr.mxu0 %v922
    %1512 = vmatpush1.msra.mxu0 %v921
    %1513 = vmatprep.subr.mxu0 %v911
    %1514 = vmatpush1.msra.mxu0 %v910
    %1515 = vmatprep.subr.mxu0 %v900
    %1516 = vmatpush1.msra.mxu0 %v899
    %1517 = vmatprep.subr.mxu0 %v889
    %1518 = vmatpush1.msra.mxu0 %v888
    %1519 = vmatprep.subr.mxu0 %v878
    %1520 = vmatpush1.msra.mxu0 %v877
    %1521 = vmatprep.subr.mxu0 %v867
    %1522 = vmatpush1.msra.mxu0 %v866
    %1523 = vmatprep.subr.mxu0 %v856
    %1524 = vmatpush1.msra.mxu0 %v855
    %1525 = vmatprep.subr.mxu0 %v845
    %1526 = vmatpush1.msra.mxu0 %v844
    %1527 = vmatprep.subr.mxu0 %v834
    %1528 = vmatpush1.msra.mxu0 %v833
    %1529 = vmatprep.subr.mxu0 %v823
    %1530 = vmatpush1.msra.mxu0 %v822
    %1531 = vmatprep.subr.mxu0 %v812
    %1532 = vmatpush1.msra.mxu0 %v811
    %1533 = vmatprep.subr.mxu0 %v801
    %1534 = vmatpush1.msra.mxu0 %v800
    %1535 = vmatprep.subr.mxu0 %v790
    %1536 = vmatpush1.msra.mxu0 %v789
    %1537 = vmatprep.subr.mxu0 %v779
    %1538 = vmatpush1.msra.mxu0 %v778
    %1539 = vmatprep.subr.mxu0 %v768
    %1540 = vmatpush1.msra.mxu0 %v767
    %1541 = vmatprep.subr.mxu0 %v757
    %1542 = vmatpush1.msra.mxu0 %v756
    %1543 = vmatprep.subr.mxu0 0.0
    %1544 = vmatpush2.msra.mxu0 0.0
    %1545 = vmatprep.subr.mxu0 %v1087
    %1546 = vmatpush2.msra.mxu0 %v1086
    %1547 = vmatprep.subr.mxu0 %v1076
    %1548 = vmatpush2.msra.mxu0 %v1075
    %1549 = vmatprep.subr.mxu0 %v1065
    %1550 = vmatpush2.msra.mxu0 %v1064
    %1551 = vmatprep.subr.mxu0 %v1054
    %1552 = vmatpush2.msra.mxu0 %v1053
    %1553 = vmatprep.subr.mxu0 %v1043
    %1554 = vmatpush2.msra.mxu0 %v1042
    %1555 = vmatprep.subr.mxu0 %v1032
    %1556 = vmatpush2.msra.mxu0 %v1031
    %1557 = vmatprep.subr.mxu0 %v1021
    %1558 = vmatpush2.msra.mxu0 %v1020
    %1559 = vmatprep.subr.mxu0 %v1010
    %1560 = vmatpush2.msra.mxu0 %v1009
    %1561 = vmatprep.subr.mxu0 %v999
    %1562 = vmatpush2.msra.mxu0 %v998
    %1563 = vmatprep.subr.mxu0 %v988
    %1564 = vmatpush2.msra.mxu0 %v987
    %1565 = vmatprep.subr.mxu0 %v977
    %1566 = vmatpush2.msra.mxu0 %v976
    %1567 = vmatprep.subr.mxu0 %v966
    %1568 = vmatpush2.msra.mxu0 %v965
    %1569 = vmatprep.subr.mxu0 %v955
    %1570 = vmatpush2.msra.mxu0 %v954
    %1571 = vmatprep.subr.mxu0 %v944
    %1572 = vmatpush2.msra.mxu0 %v943
    %1573 = vmatprep.subr.mxu0 %v933
    %1574 = vmatpush2.msra.mxu0 %v932
    %1575 = vmatprep.mubr.f32.mxu0 %v1154
    %1576 = vmatmul.mubr.f32.gmra.mxu0 %v398
    %v1577 = vpop.f32.mrf.mxu0
    %v1578 = vadd.f32 %v1507, %v1577
    %v1579 = vpop.f32.mrf.mxu0
    %v1580 = vadd.f32 %v1509, %v1579
    %1581 = vdwg.mxu0
    %1582 = vmatprep.subr.mxu0 %v572
    %1583 = vmatpush1.msra.mxu0 %v571
    %1584 = vmatprep.subr.mxu0 %v561
    %1585 = vmatpush1.msra.mxu0 %v560
    %1586 = vmatprep.subr.mxu0 %v550
    %1587 = vmatpush1.msra.mxu0 %v549
    %1588 = vmatprep.subr.mxu0 %v539
    %1589 = vmatpush1.msra.mxu0 %v538
    %1590 = vmatprep.subr.mxu0 %v528
    %1591 = vmatpush1.msra.mxu0 %v527
    %1592 = vmatprep.subr.mxu0 %v517
    %1593 = vmatpush1.msra.mxu0 %v516
    %1594 = vmatprep.subr.mxu0 %v506
    %1595 = vmatpush1.msra.mxu0 %v505
    %1596 = vmatprep.subr.mxu0 %v495
    %1597 = vmatpush1.msra.mxu0 %v494
    %1598 = vmatprep.subr.mxu0 %v484
    %1599 = vmatpush1.msra.mxu0 %v483
    %1600 = vmatprep.subr.mxu0 %v473
    %1601 = vmatpush1.msra.mxu0 %v472
    %1602 = vmatprep.subr.mxu0 %v462
    %1603 = vmatpush1.msra.mxu0 %v461
    %1604 = vmatprep.subr.mxu0 %v451
    %1605 = vmatpush1.msra.mxu0 %v450
    %1606 = vmatprep.subr.mxu0 %v440
    %1607 = vmatpush1.msra.mxu0 %v439
    %1608 = vmatprep.subr.mxu0 %v429
    %1609 = vmatpush1.msra.mxu0 %v428
    %1610 = vmatprep.subr.mxu0 %v418
    %1611 = vmatpush1.msra.mxu0 %v417
    %1612 = vmatprep.subr.mxu0 %v407
    %1613 = vmatpush1.msra.mxu0 %v406
    %1614 = vmatprep.subr.mxu0 %v748
    %1615 = vmatpush2.msra.mxu0 %v747
    %1616 = vmatprep.subr.mxu0 %v737
    %1617 = vmatpush2.msra.mxu0 %v736
    %1618 = vmatprep.subr.mxu0 %v726
    %1619 = vmatpush2.msra.mxu0 %v725
    %1620 = vmatprep.subr.mxu0 %v715
    %1621 = vmatpush2.msra.mxu0 %v714
    %1622 = vmatprep.subr.mxu0 %v704
    %1623 = vmatpush2.msra.mxu0 %v703
    %1624 = vmatprep.subr.mxu0 %v693
    %1625 = vmatpush2.msra.mxu0 %v692
    %1626 = vmatprep.subr.mxu0 %v682
    %1627 = vmatpush2.msra.mxu0 %v681
    %1628 = vmatprep.subr.mxu0 %v671
    %1629 = vmatpush2.msra.mxu0 %v670
    %1630 = vmatprep.subr.mxu0 %v660
    %1631 = vmatpush2.msra.mxu0 %v659
    %1632 = vmatprep.subr.mxu0 %v649
    %1633 = vmatpush2.msra.mxu0 %v648
    %1634 = vmatprep.subr.mxu0 %v638
    %1635 = vmatpush2.msra.mxu0 %v637
    %1636 = vmatprep.subr.mxu0 %v627
    %1637 = vmatpush2.msra.mxu0 %v626
    %1638 = vmatprep.subr.mxu0 %v616
    %1639 = vmatpush2.msra.mxu0 %v615
    %1640 = vmatprep.subr.mxu0 %v605
    %1641 = vmatpush2.msra.mxu0 %v604
    %1642 = vmatprep.subr.mxu0 %v594
    %1643 = vmatpush2.msra.mxu0 %v593
    %1644 = vmatprep.subr.mxu0 %v583
    %1645 = vmatpush2.msra.mxu0 %v582
    %1646 = vmatprep.mubr.f32.mxu0 %v397
    %1647 = vmatmul.mubr.f32.gmra.mxu0 %v396
    %v1648 = vpop.f32.mrf.mxu0
    %v1649 = vadd.f32 %v1124, %v1648
    %v1650 = vpop.f32.mrf.mxu0
    %v1651 = vadd.f32 %v1128, %v1650
    %1652 = vdwg.mxu0
    %1653 = vmatprep.subr.mxu0 %v924
    %1654 = vmatpush1.msra.mxu0 %v923
    %1655 = vmatprep.subr.mxu0 %v913
    %1656 = vmatpush1.msra.mxu0 %v912
    %1657 = vmatprep.subr.mxu0 %v902
    %1658 = vmatpush1.msra.mxu0 %v901
    %1659 = vmatprep.subr.mxu0 %v891
    %1660 = vmatpush1.msra.mxu0 %v890
    %1661 = vmatprep.subr.mxu0 %v880
    %1662 = vmatpush1.msra.mxu0 %v879
    %1663 = vmatprep.subr.mxu0 %v869
    %1664 = vmatpush1.msra.mxu0 %v868
    %1665 = vmatprep.subr.mxu0 %v858
    %1666 = vmatpush1.msra.mxu0 %v857
    %1667 = vmatprep.subr.mxu0 %v847
    %1668 = vmatpush1.msra.mxu0 %v846
    %1669 = vmatprep.subr.mxu0 %v836
    %1670 = vmatpush1.msra.mxu0 %v835
    %1671 = vmatprep.subr.mxu0 %v825
    %1672 = vmatpush1.msra.mxu0 %v824
    %1673 = vmatprep.subr.mxu0 %v814
    %1674 = vmatpush1.msra.mxu0 %v813
    %1675 = vmatprep.subr.mxu0 %v803
    %1676 = vmatpush1.msra.mxu0 %v802
    %1677 = vmatprep.subr.mxu0 %v792
    %1678 = vmatpush1.msra.mxu0 %v791
    %1679 = vmatprep.subr.mxu0 %v781
    %1680 = vmatpush1.msra.mxu0 %v780
    %1681 = vmatprep.subr.mxu0 %v770
    %1682 = vmatpush1.msra.mxu0 %v769
    %1683 = vmatprep.subr.mxu0 %v759
    %1684 = vmatpush1.msra.mxu0 %v758
    %1685 = vmatprep.subr.mxu0 0.0
    %1686 = vmatpush2.msra.mxu0 0.0
    %1687 = vmatprep.subr.mxu0 %v1089
    %1688 = vmatpush2.msra.mxu0 %v1088
    %1689 = vmatprep.subr.mxu0 %v1078
    %1690 = vmatpush2.msra.mxu0 %v1077
    %1691 = vmatprep.subr.mxu0 %v1067
    %1692 = vmatpush2.msra.mxu0 %v1066
    %1693 = vmatprep.subr.mxu0 %v1056
    %1694 = vmatpush2.msra.mxu0 %v1055
    %1695 = vmatprep.subr.mxu0 %v1045
    %1696 = vmatpush2.msra.mxu0 %v1044
    %1697 = vmatprep.subr.mxu0 %v1034
    %1698 = vmatpush2.msra.mxu0 %v1033
    %1699 = vmatprep.subr.mxu0 %v1023
    %1700 = vmatpush2.msra.mxu0 %v1022
    %1701 = vmatprep.subr.mxu0 %v1012
    %1702 = vmatpush2.msra.mxu0 %v1011
    %1703 = vmatprep.subr.mxu0 %v1001
    %1704 = vmatpush2.msra.mxu0 %v1000
    %1705 = vmatprep.subr.mxu0 %v990
    %1706 = vmatpush2.msra.mxu0 %v989
    %1707 = vmatprep.subr.mxu0 %v979
    %1708 = vmatpush2.msra.mxu0 %v978
    %1709 = vmatprep.subr.mxu0 %v968
    %1710 = vmatpush2.msra.mxu0 %v967
    %1711 = vmatprep.subr.mxu0 %v957
    %1712 = vmatpush2.msra.mxu0 %v956
    %1713 = vmatprep.subr.mxu0 %v946
    %1714 = vmatpush2.msra.mxu0 %v945
    %1715 = vmatprep.subr.mxu0 %v935
    %1716 = vmatpush2.msra.mxu0 %v934
    %1717 = vmatprep.mubr.f32.mxu0 %v1154
    %1718 = vmatmul.mubr.f32.gmra.mxu0 %v398
    %v1719 = vpop.f32.mrf.mxu0
    %v1720 = vadd.f32 %v1649, %v1719
    %v1721 = vpop.f32.mrf.mxu0
    %v1722 = vadd.f32 %v1651, %v1721
    %1723 = vdwg.mxu0
    %1724 = vmatprep.subr.mxu0 %v574
    %1725 = vmatpush1.msra.mxu0 %v573
    %1726 = vmatprep.subr.mxu0 %v563
    %1727 = vmatpush1.msra.mxu0 %v562
    %1728 = vmatprep.subr.mxu0 %v552
    %1729 = vmatpush1.msra.mxu0 %v551
    %1730 = vmatprep.subr.mxu0 %v541
    %1731 = vmatpush1.msra.mxu0 %v540
    %1732 = vmatprep.subr.mxu0 %v530
    %1733 = vmatpush1.msra.mxu0 %v529
    %1734 = vmatprep.subr.mxu0 %v519
    %1735 = vmatpush1.msra.mxu0 %v518
    %1736 = vmatprep.subr.mxu0 %v508
    %1737 = vmatpush1.msra.mxu0 %v507
    %1738 = vmatprep.subr.mxu0 %v497
    %1739 = vmatpush1.msra.mxu0 %v496
    %1740 = vmatprep.subr.mxu0 %v486
    %1741 = vmatpush1.msra.mxu0 %v485
    %1742 = vmatprep.subr.mxu0 %v475
    %1743 = vmatpush1.msra.mxu0 %v474
    %1744 = vmatprep.subr.mxu0 %v464
    %1745 = vmatpush1.msra.mxu0 %v463
    %1746 = vmatprep.subr.mxu0 %v453
    %1747 = vmatpush1.msra.mxu0 %v452
    %1748 = vmatprep.subr.mxu0 %v442
    %1749 = vmatpush1.msra.mxu0 %v441
    %1750 = vmatprep.subr.mxu0 %v431
    %1751 = vmatpush1.msra.mxu0 %v430
    %1752 = vmatprep.subr.mxu0 %v420
    %1753 = vmatpush1.msra.mxu0 %v419
    %1754 = vmatprep.subr.mxu0 %v409
    %1755 = vmatpush1.msra.mxu0 %v408
    %1756 = vmatprep.subr.mxu0 %v750
    %1757 = vmatpush2.msra.mxu0 %v749
    %1758 = vmatprep.subr.mxu0 %v739
    %1759 = vmatpush2.msra.mxu0 %v738
    %1760 = vmatprep.subr.mxu0 %v728
    %1761 = vmatpush2.msra.mxu0 %v727
    %1762 = vmatprep.subr.mxu0 %v717
    %1763 = vmatpush2.msra.mxu0 %v716
    %1764 = vmatprep.subr.mxu0 %v706
    %1765 = vmatpush2.msra.mxu0 %v705
    %1766 = vmatprep.subr.mxu0 %v695
    %1767 = vmatpush2.msra.mxu0 %v694
    %1768 = vmatprep.subr.mxu0 %v684
    %1769 = vmatpush2.msra.mxu0 %v683
    %1770 = vmatprep.subr.mxu0 %v673
    %1771 = vmatpush2.msra.mxu0 %v672
    %1772 = vmatprep.subr.mxu0 %v662
    %1773 = vmatpush2.msra.mxu0 %v661
    %1774 = vmatprep.subr.mxu0 %v651
    %1775 = vmatpush2.msra.mxu0 %v650
    %1776 = vmatprep.subr.mxu0 %v640
    %1777 = vmatpush2.msra.mxu0 %v639
    %1778 = vmatprep.subr.mxu0 %v629
    %1779 = vmatpush2.msra.mxu0 %v628
    %1780 = vmatprep.subr.mxu0 %v618
    %1781 = vmatpush2.msra.mxu0 %v617
    %1782 = vmatprep.subr.mxu0 %v607
    %1783 = vmatpush2.msra.mxu0 %v606
    %1784 = vmatprep.subr.mxu0 %v596
    %1785 = vmatpush2.msra.mxu0 %v595
    %1786 = vmatprep.subr.mxu0 %v585
    %1787 = vmatpush2.msra.mxu0 %v584
    %1788 = vmatprep.mubr.f32.mxu0 %v397
    %1789 = vmatmul.mubr.f32.gmra.mxu0 %v396
    %v1790 = vpop.f32.mrf.mxu0
    %v1791 = vadd.f32 %v1132, %v1790
    %v1792 = vpop.f32.mrf.mxu0
    %v1793 = vadd.f32 %v1136, %v1792
    %1794 = vdwg.mxu0
    %1795 = vmatprep.subr.mxu0 %v926
    %1796 = vmatpush1.msra.mxu0 %v925
    %1797 = vmatprep.subr.mxu0 %v915
    %1798 = vmatpush1.msra.mxu0 %v914
    %1799 = vmatprep.subr.mxu0 %v904
    %1800 = vmatpush1.msra.mxu0 %v903
    %1801 = vmatprep.subr.mxu0 %v893
    %1802 = vmatpush1.msra.mxu0 %v892
    %1803 = vmatprep.subr.mxu0 %v882
    %1804 = vmatpush1.msra.mxu0 %v881
    %1805 = vmatprep.subr.mxu0 %v871
    %1806 = vmatpush1.msra.mxu0 %v870
    %1807 = vmatprep.subr.mxu0 %v860
    %1808 = vmatpush1.msra.mxu0 %v859
    %1809 = vmatprep.subr.mxu0 %v849
    %1810 = vmatpush1.msra.mxu0 %v848
    %1811 = vmatprep.subr.mxu0 %v838
    %1812 = vmatpush1.msra.mxu0 %v837
    %1813 = vmatprep.subr.mxu0 %v827
    %1814 = vmatpush1.msra.mxu0 %v826
    %1815 = vmatprep.subr.mxu0 %v816
    %1816 = vmatpush1.msra.mxu0 %v815
    %1817 = vmatprep.subr.mxu0 %v805
    %1818 = vmatpush1.msra.mxu0 %v804
    %1819 = vmatprep.subr.mxu0 %v794
    %1820 = vmatpush1.msra.mxu0 %v793
    %1821 = vmatprep.subr.mxu0 %v783
    %1822 = vmatpush1.msra.mxu0 %v782
    %1823 = vmatprep.subr.mxu0 %v772
    %1824 = vmatpush1.msra.mxu0 %v771
    %1825 = vmatprep.subr.mxu0 %v761
    %1826 = vmatpush1.msra.mxu0 %v760
    %1827 = vmatprep.subr.mxu0 0.0
    %1828 = vmatpush2.msra.mxu0 0.0
    %1829 = vmatprep.subr.mxu0 %v1091
    %1830 = vmatpush2.msra.mxu0 %v1090
    %1831 = vmatprep.subr.mxu0 %v1080
    %1832 = vmatpush2.msra.mxu0 %v1079
    %1833 = vmatprep.subr.mxu0 %v1069
    %1834 = vmatpush2.msra.mxu0 %v1068
    %1835 = vmatprep.subr.mxu0 %v1058
    %1836 = vmatpush2.msra.mxu0 %v1057
    %1837 = vmatprep.subr.mxu0 %v1047
    %1838 = vmatpush2.msra.mxu0 %v1046
    %1839 = vmatprep.subr.mxu0 %v1036
    %1840 = vmatpush2.msra.mxu0 %v1035
    %1841 = vmatprep.subr.mxu0 %v1025
    %1842 = vmatpush2.msra.mxu0 %v1024
    %1843 = vmatprep.subr.mxu0 %v1014
    %1844 = vmatpush2.msra.mxu0 %v1013
    %1845 = vmatprep.subr.mxu0 %v1003
    %1846 = vmatpush2.msra.mxu0 %v1002
    %1847 = vmatprep.subr.mxu0 %v992
    %1848 = vmatpush2.msra.mxu0 %v991
    %1849 = vmatprep.subr.mxu0 %v981
    %1850 = vmatpush2.msra.mxu0 %v980
    %1851 = vmatprep.subr.mxu0 %v970
    %1852 = vmatpush2.msra.mxu0 %v969
    %1853 = vmatprep.subr.mxu0 %v959
    %1854 = vmatpush2.msra.mxu0 %v958
    %1855 = vmatprep.subr.mxu0 %v948
    %1856 = vmatpush2.msra.mxu0 %v947
    %1857 = vmatprep.subr.mxu0 %v937
    %1858 = vmatpush2.msra.mxu0 %v936
    %1859 = vmatprep.mubr.f32.mxu0 %v1154
    %1860 = vmatmul.mubr.f32.gmra.mxu0 %v398
    %v1861 = vpop.f32.mrf.mxu0
    %v1862 = vadd.f32 %v1791, %v1861
    %v1863 = vpop.f32.mrf.mxu0
    %v1864 = vadd.f32 %v1793, %v1863
    %1865 = vdwg.mxu0
    %1866 = vmatprep.subr.mxu0 0.0
    %1867 = vmatpush1.msra.mxu0 %v575
    %1868 = vmatprep.subr.mxu0 0.0
    %1869 = vmatpush1.msra.mxu0 %v564
    %1870 = vmatprep.subr.mxu0 0.0
    %1871 = vmatpush1.msra.mxu0 %v553
    %1872 = vmatprep.subr.mxu0 0.0
    %1873 = vmatpush1.msra.mxu0 %v542
    %1874 = vmatprep.subr.mxu0 0.0
    %1875 = vmatpush1.msra.mxu0 %v531
    %1876 = vmatprep.subr.mxu0 0.0
    %1877 = vmatpush1.msra.mxu0 %v520
    %1878 = vmatprep.subr.mxu0 0.0
    %1879 = vmatpush1.msra.mxu0 %v509
    %1880 = vmatprep.subr.mxu0 0.0
    %1881 = vmatpush1.msra.mxu0 %v498
    %1882 = vmatprep.subr.mxu0 0.0
    %1883 = vmatpush1.msra.mxu0 %v487
    %1884 = vmatprep.subr.mxu0 0.0
    %1885 = vmatpush1.msra.mxu0 %v476
    %1886 = vmatprep.subr.mxu0 0.0
    %1887 = vmatpush1.msra.mxu0 %v465
    %1888 = vmatprep.subr.mxu0 0.0
    %1889 = vmatpush1.msra.mxu0 %v454
    %1890 = vmatprep.subr.mxu0 0.0
    %1891 = vmatpush1.msra.mxu0 %v443
    %1892 = vmatprep.subr.mxu0 0.0
    %1893 = vmatpush1.msra.mxu0 %v432
    %1894 = vmatprep.subr.mxu0 0.0
    %1895 = vmatpush1.msra.mxu0 %v421
    %1896 = vmatprep.subr.mxu0 0.0
    %1897 = vmatpush1.msra.mxu0 %v410
    %1898 = vmatprep.subr.mxu0 0.0
    %1899 = vmatpush2.msra.mxu0 %v751
    %1900 = vmatprep.subr.mxu0 0.0
    %1901 = vmatpush2.msra.mxu0 %v740
    %1902 = vmatprep.subr.mxu0 0.0
    %1903 = vmatpush2.msra.mxu0 %v729
    %1904 = vmatprep.subr.mxu0 0.0
    %1905 = vmatpush2.msra.mxu0 %v718
    %1906 = vmatprep.subr.mxu0 0.0
    %1907 = vmatpush2.msra.mxu0 %v707
    %1908 = vmatprep.subr.mxu0 0.0
    %1909 = vmatpush2.msra.mxu0 %v696
    %1910 = vmatprep.subr.mxu0 0.0
    %1911 = vmatpush2.msra.mxu0 %v685
    %1912 = vmatprep.subr.mxu0 0.0
    %1913 = vmatpush2.msra.mxu0 %v674
    %1914 = vmatprep.subr.mxu0 0.0
    %1915 = vmatpush2.msra.mxu0 %v663
    %1916 = vmatprep.subr.mxu0 0.0
    %1917 = vmatpush2.msra.mxu0 %v652
    %1918 = vmatprep.subr.mxu0 0.0
    %1919 = vmatpush2.msra.mxu0 %v641
    %1920 = vmatprep.subr.mxu0 0.0
    %1921 = vmatpush2.msra.mxu0 %v630
    %1922 = vmatprep.subr.mxu0 0.0
    %1923 = vmatpush2.msra.mxu0 %v619
    %1924 = vmatprep.subr.mxu0 0.0
    %1925 = vmatpush2.msra.mxu0 %v608
    %1926 = vmatprep.subr.mxu0 0.0
    %1927 = vmatpush2.msra.mxu0 %v597
    %1928 = vmatprep.subr.mxu0 0.0
    %1929 = vmatpush2.msra.mxu0 %v586
    %1930 = vmatprep.mubr.f32.mxu0 %v397
    %1931 = vmatmul.mubr.f32.gmra.mxu0 %v396
    %v1932 = vpop.f32.mrf.mxu0
    %v1933 = vadd.f32 %v1140, %v1932
    %v1934 = vpop.f32.mrf.mxu0
    %1935 = vdwg.mxu0
    %1936 = vmatprep.subr.mxu0 0.0
    %1937 = vmatpush1.msra.mxu0 %v927
    %1938 = vmatprep.subr.mxu0 0.0
    %1939 = vmatpush1.msra.mxu0 %v916
    %1940 = vmatprep.subr.mxu0 0.0
    %1941 = vmatpush1.msra.mxu0 %v905
    %1942 = vmatprep.subr.mxu0 0.0
    %1943 = vmatpush1.msra.mxu0 %v894
    %1944 = vmatprep.subr.mxu0 0.0
    %1945 = vmatpush1.msra.mxu0 %v883
    %1946 = vmatprep.subr.mxu0 0.0
    %1947 = vmatpush1.msra.mxu0 %v872
    %1948 = vmatprep.subr.mxu0 0.0
    %1949 = vmatpush1.msra.mxu0 %v861
    %1950 = vmatprep.subr.mxu0 0.0
    %1951 = vmatpush1.msra.mxu0 %v850
    %1952 = vmatprep.subr.mxu0 0.0
    %1953 = vmatpush1.msra.mxu0 %v839
    %1954 = vmatprep.subr.mxu0 0.0
    %1955 = vmatpush1.msra.mxu0 %v828
    %1956 = vmatprep.subr.mxu0 0.0
    %1957 = vmatpush1.msra.mxu0 %v817
    %1958 = vmatprep.subr.mxu0 0.0
    %1959 = vmatpush1.msra.mxu0 %v806
    %1960 = vmatprep.subr.mxu0 0.0
    %1961 = vmatpush1.msra.mxu0 %v795
    %1962 = vmatprep.subr.mxu0 0.0
    %1963 = vmatpush1.msra.mxu0 %v784
    %1964 = vmatprep.subr.mxu0 0.0
    %1965 = vmatpush1.msra.mxu0 %v773
    %1966 = vmatprep.subr.mxu0 0.0
    %1967 = vmatpush1.msra.mxu0 %v762
    %1968 = vmatprep.subr.mxu0 0.0
    %1969 = vmatpush2.msra.mxu0 0.0
    %1970 = vmatprep.subr.mxu0 0.0
    %1971 = vmatpush2.msra.mxu0 %v1092
    %1972 = vmatprep.subr.mxu0 0.0
    %1973 = vmatpush2.msra.mxu0 %v1081
    %1974 = vmatprep.subr.mxu0 0.0
    %1975 = vmatpush2.msra.mxu0 %v1070
    %1976 = vmatprep.subr.mxu0 0.0
    %1977 = vmatpush2.msra.mxu0 %v1059
    %1978 = vmatprep.subr.mxu0 0.0
    %1979 = vmatpush2.msra.mxu0 %v1048
    %1980 = vmatprep.subr.mxu0 0.0
    %1981 = vmatpush2.msra.mxu0 %v1037
    %1982 = vmatprep.subr.mxu0 0.0
    %1983 = vmatpush2.msra.mxu0 %v1026
    %1984 = vmatprep.subr.mxu0 0.0
    %1985 = vmatpush2.msra.mxu0 %v1015
    %1986 = vmatprep.subr.mxu0 0.0
    %1987 = vmatpush2.msra.mxu0 %v1004
    %1988 = vmatprep.subr.mxu0 0.0
    %1989 = vmatpush2.msra.mxu0 %v993
    %1990 = vmatprep.subr.mxu0 0.0
    %1991 = vmatpush2.msra.mxu0 %v982
    %1992 = vmatprep.subr.mxu0 0.0
    %1993 = vmatpush2.msra.mxu0 %v971
    %1994 = vmatprep.subr.mxu0 0.0
    %1995 = vmatpush2.msra.mxu0 %v960
    %1996 = vmatprep.subr.mxu0 0.0
    %1997 = vmatpush2.msra.mxu0 %v949
    %1998 = vmatprep.subr.mxu0 0.0
    %1999 = vmatpush2.msra.mxu0 %v938
    %2000 = vmatprep.mubr.f32.mxu0 %v1154
    %2001 = vmatmul.mubr.f32.gmra.mxu0 %v398
    %v2002 = vpop.f32.mrf.mxu0
    %v2003 = vadd.f32 %v1933, %v2002
    %v2004 = vpop.f32.mrf.mxu0
    %2005 = vdwg.mxu0
    %v2006 = vmax.f32 %v1294, 0.0
    %v2007 = vmax.f32 %v1296, 0.0
    %v2008 = vmax.f32 %v1436, 0.0
    %v2009 = vmax.f32 %v1438, 0.0
    %v2010 = vmax.f32 %v1578, 0.0
    %v2011 = vmax.f32 %v1580, 0.0
    %v2012 = vmax.f32 %v1720, 0.0
    %v2013 = vmax.f32 %v1722, 0.0
    %v2014 = vmax.f32 %v1862, 0.0
    %v2015 = vmax.f32 %v1864, 0.0
    %v2016 = vmax.f32 %v2003, 0.0
    %v2017 = vld [vmem:[#allocation10] sm:$0xff]
    %v2018 = vld [vmem:[#allocation10 + $0x8] sm:$0xff]
    %v2019 = vld [vmem:[#allocation10 + $0x10] sm:$0xff]
    %v2020 = vld [vmem:[#allocation10 + $0x18] sm:$0xff]
    %v2021 = vld [vmem:[#allocation10 + $0x20] sm:$0xff]
    %v2022 = vld [vmem:[#allocation10 + $0x28] sm:$0xff]
    %v2023 = vld [vmem:[#allocation10 + $0x30] sm:$0xff]
    %v2024 = vld [vmem:[#allocation10 + $0x38] sm:$0xff]
    %v2025 = vld [vmem:[#allocation10 + $0x40] sm:$0xff]
    %v2026 = vld [vmem:[#allocation10 + $0x48] sm:$0xff]
    %v2027 = vld [vmem:[#allocation10 + $0x50] sm:$0xff]
    %v2028 = vld [vmem:[#allocation10 + $0x58] sm:$0xff]
    %v2029 = vld [vmem:[#allocation10 + $0x60] sm:$0xff]
    %v2030 = vld [vmem:[#allocation10 + $0x68] sm:$0xff]
    %v2031 = vld [vmem:[#allocation10 + $0x70] sm:$0xff]
    %v2032 = vld [vmem:[#allocation10 + $0x78] sm:$0xff]
    %v2033 = vld [vmem:[#allocation10 + $0x80] sm:$0xff]
    %v2034 = vld [vmem:[#allocation10 + $0x88] sm:$0xff]
    %v2035 = vld [vmem:[#allocation10 + $0x90] sm:$0xff]
    %v2036 = vld [vmem:[#allocation10 + $0x98] sm:$0xff]
    %v2037 = vld [vmem:[#allocation10 + $0xa0] sm:$0xff]
    %v2038 = vld [vmem:[#allocation10 + $0xa8] sm:$0xff]
    %v2039 = vld [vmem:[#allocation10 + $0xb0] sm:$0xff]
    %v2040 = vld [vmem:[#allocation10 + $0xb8] sm:$0xff]
    %v2041 = vld [vmem:[#allocation10 + $0xc0] sm:$0xff]
    %v2042 = vld [vmem:[#allocation10 + $0xc8] sm:$0xff]
    %v2043 = vld [vmem:[#allocation10 + $0xd0] sm:$0xff]
    %v2044 = vld [vmem:[#allocation10 + $0xd8] sm:$0xff]
    %v2045 = vld [vmem:[#allocation10 + $0xe0] sm:$0xff]
    %v2046 = vld [vmem:[#allocation10 + $0xe8] sm:$0xff]
    %v2047 = vld [vmem:[#allocation10 + $0xf0] sm:$0xff]
    %v2048 = vld [vmem:[#allocation10 + $0xf8] sm:$0xff]
    %v2049 = vld [vmem:[#allocation10 + $0x100] sm:$0xff]
    %v2050 = vld [vmem:[#allocation10 + $0x108] sm:$0xff]
    %v2051 = vld [vmem:[#allocation10 + $0x110] sm:$0xff]
    %v2052 = vld [vmem:[#allocation10 + $0x118] sm:$0xff]
    %v2053 = vld [vmem:[#allocation10 + $0x120] sm:$0xff]
    %v2054 = vld [vmem:[#allocation10 + $0x128] sm:$0xff]
    %v2055 = vld [vmem:[#allocation10 + $0x130] sm:$0xff]
    %v2056 = vld [vmem:[#allocation10 + $0x138] sm:$0xff]
    %v2057 = vld [vmem:[#allocation10 + $0x140] sm:$0xff]
    %v2058 = vld [vmem:[#allocation10 + $0x148] sm:$0xff]
    %v2059 = vld [vmem:[#allocation10 + $0x150] sm:$0xff]
    %v2060 = vld [vmem:[#allocation10 + $0x158] sm:$0xff]
    %v2061 = vld [vmem:[#allocation10 + $0x160] sm:$0xff]
    %v2062 = vld [vmem:[#allocation10 + $0x168] sm:$0xff]
    %v2063 = vld [vmem:[#allocation10 + $0x170] sm:$0xff]
    %v2064 = vld [vmem:[#allocation10 + $0x178] sm:$0xff]
    %v2065 = vld [vmem:[#allocation10 + $0x180] sm:$0xff]
    %v2066 = vld [vmem:[#allocation10 + $0x188] sm:$0xff]
    %v2067 = vld [vmem:[#allocation10 + $0x190] sm:$0xff]
    %v2068 = vld [vmem:[#allocation10 + $0x198] sm:$0xff]
    %v2069 = vld [vmem:[#allocation10 + $0x1a0] sm:$0xff]
    %v2070 = vld [vmem:[#allocation10 + $0x1a8] sm:$0xff]
    %v2071 = vld [vmem:[#allocation10 + $0x1b0] sm:$0xff]
    %v2072 = vld [vmem:[#allocation10 + $0x1b8] sm:$0xff]
    %v2073 = vld [vmem:[#allocation10 + $0x1c0] sm:$0xff]
    %v2074 = vld [vmem:[#allocation10 + $0x1c8] sm:$0xff]
    %v2075 = vld [vmem:[#allocation10 + $0x1d0] sm:$0xff]
    %v2076 = vld [vmem:[#allocation10 + $0x1d8] sm:$0xff]
    %v2077 = vld [vmem:[#allocation10 + $0x1e0] sm:$0xff]
    %v2078 = vld [vmem:[#allocation10 + $0x1e8] sm:$0xff]
    %v2079 = vld [vmem:[#allocation10 + $0x1f0] sm:$0xff]
    %v2080 = vld [vmem:[#allocation10 + $0x1f8] sm:$0xff]
    %v2081 = vld [vmem:[#allocation10 + $0x200] sm:$0xff]
    %v2082 = vld [vmem:[#allocation10 + $0x208] sm:$0xff]
    %v2083 = vld [vmem:[#allocation10 + $0x210] sm:$0xff]
    %v2084 = vld [vmem:[#allocation10 + $0x218] sm:$0xff]
    %v2085 = vld [vmem:[#allocation10 + $0x220] sm:$0xff]
    %v2086 = vld [vmem:[#allocation10 + $0x228] sm:$0xff]
    %v2087 = vld [vmem:[#allocation10 + $0x230] sm:$0xff]
    %v2088 = vld [vmem:[#allocation10 + $0x238] sm:$0xff]
    %v2089 = vld [vmem:[#allocation10 + $0x240] sm:$0xff]
    %v2090 = vld [vmem:[#allocation10 + $0x248] sm:$0xff]
    %v2091 = vld [vmem:[#allocation10 + $0x250] sm:$0xff]
    %v2092 = vld [vmem:[#allocation10 + $0x258] sm:$0xff]
    %v2093 = vld [vmem:[#allocation10 + $0x260] sm:$0xff]
    %v2094 = vld [vmem:[#allocation10 + $0x268] sm:$0xff]
    %v2095 = vld [vmem:[#allocation10 + $0x270] sm:$0xff]
    %v2096 = vld [vmem:[#allocation10 + $0x278] sm:$0xff]
    %v2097 = vld [vmem:[#allocation10 + $0x280] sm:$0xff]
    %v2098 = vld [vmem:[#allocation10 + $0x288] sm:$0xff]
    %v2099 = vld [vmem:[#allocation10 + $0x290] sm:$0xff]
    %v2100 = vld [vmem:[#allocation10 + $0x298] sm:$0xff]
    %v2101 = vld [vmem:[#allocation10 + $0x2a0] sm:$0xff]
    %v2102 = vld [vmem:[#allocation10 + $0x2a8] sm:$0xff]
    %v2103 = vld [vmem:[#allocation10 + $0x2b0] sm:$0xff]
    %v2104 = vld [vmem:[#allocation10 + $0x2b8] sm:$0xff]
    %v2105 = vld [vmem:[#allocation10 + $0x2c0] sm:$0xff]
    %v2106 = vld [vmem:[#allocation10 + $0x2c8] sm:$0xff]
    %v2107 = vld [vmem:[#allocation10 + $0x2d0] sm:$0xff]
    %v2108 = vld [vmem:[#allocation10 + $0x2d8] sm:$0xff]
    %v2109 = vld [vmem:[#allocation10 + $0x2e0] sm:$0xff]
    %v2110 = vld [vmem:[#allocation10 + $0x2e8] sm:$0xff]
    %v2111 = vld [vmem:[#allocation10 + $0x2f0] sm:$0xff]
    %v2112 = vld [vmem:[#allocation10 + $0x2f8] sm:$0xff]
    %v2113 = vld [vmem:[#allocation10 + $0x300] sm:$0xff]
    %v2114 = vld [vmem:[#allocation10 + $0x308] sm:$0xff]
    %v2115 = vld [vmem:[#allocation10 + $0x310] sm:$0xff]
    %v2116 = vld [vmem:[#allocation10 + $0x318] sm:$0xff]
    %v2117 = vld [vmem:[#allocation10 + $0x320] sm:$0xff]
    %v2118 = vld [vmem:[#allocation10 + $0x328] sm:$0xff]
    %v2119 = vld [vmem:[#allocation10 + $0x330] sm:$0xff]
    %v2120 = vld [vmem:[#allocation10 + $0x338] sm:$0xff]
    %v2121 = vld [vmem:[#allocation10 + $0x340] sm:$0xff]
    %v2122 = vld [vmem:[#allocation10 + $0x348] sm:$0xff]
    %v2123 = vld [vmem:[#allocation10 + $0x350] sm:$0xff]
    %v2124 = vld [vmem:[#allocation10 + $0x358] sm:$0xff]
    %v2125 = vld [vmem:[#allocation10 + $0x360] sm:$0xff]
    %v2126 = vld [vmem:[#allocation10 + $0x368] sm:$0xff]
    %v2127 = vld [vmem:[#allocation10 + $0x370] sm:$0xff]
    %v2128 = vld [vmem:[#allocation10 + $0x378] sm:$0xff]
    %v2129 = vld [vmem:[#allocation10 + $0x380] sm:$0xff]
    %v2130 = vld [vmem:[#allocation10 + $0x388] sm:$0xff]
    %v2131 = vld [vmem:[#allocation10 + $0x390] sm:$0xff]
    %v2132 = vld [vmem:[#allocation10 + $0x398] sm:$0xff]
    %v2133 = vld [vmem:[#allocation10 + $0x3a0] sm:$0xff]
    %v2134 = vld [vmem:[#allocation10 + $0x3a8] sm:$0xff]
    %v2135 = vld [vmem:[#allocation10 + $0x3b0] sm:$0xff]
    %v2136 = vld [vmem:[#allocation10 + $0x3b8] sm:$0xff]
    %v2137 = vld [vmem:[#allocation10 + $0x3c0] sm:$0xff]
    %v2138 = vld [vmem:[#allocation10 + $0x3c8] sm:$0xff]
    %v2139 = vld [vmem:[#allocation10 + $0x3d0] sm:$0xff]
    %v2140 = vld [vmem:[#allocation10 + $0x3d8] sm:$0xff]
    %v2141 = vld [vmem:[#allocation10 + $0x3e0] sm:$0xff]
    %v2142 = vld [vmem:[#allocation10 + $0x3e8] sm:$0xff]
    %v2143 = vld [vmem:[#allocation10 + $0x3f0] sm:$0xff]
    %v2144 = vld [vmem:[#allocation10 + $0x3f8] sm:$0xff]
    %v2145 = vld [vmem:[#allocation10 + $0x400] sm:$0xff]
    %v2146 = vld [vmem:[#allocation10 + $0x408] sm:$0xff]
    %v2147 = vld [vmem:[#allocation10 + $0x410] sm:$0xff]
    %v2148 = vld [vmem:[#allocation10 + $0x418] sm:$0xff]
    %v2149 = vld [vmem:[#allocation10 + $0x420] sm:$0xff]
    %v2150 = vld [vmem:[#allocation10 + $0x428] sm:$0xff]
    %v2151 = vld [vmem:[#allocation10 + $0x430] sm:$0xff]
    %v2152 = vld [vmem:[#allocation10 + $0x438] sm:$0xff]
    %v2153 = vld [vmem:[#allocation10 + $0x440] sm:$0xff]
    %v2154 = vld [vmem:[#allocation10 + $0x448] sm:$0xff]
    %v2155 = vld [vmem:[#allocation10 + $0x450] sm:$0xff]
    %v2156 = vld [vmem:[#allocation10 + $0x458] sm:$0xff]
    %v2157 = vld [vmem:[#allocation10 + $0x460] sm:$0xff]
    %v2158 = vld [vmem:[#allocation10 + $0x468] sm:$0xff]
    %v2159 = vld [vmem:[#allocation10 + $0x470] sm:$0xff]
    %v2160 = vld [vmem:[#allocation10 + $0x478] sm:$0xff]
    %v2161 = vld [vmem:[#allocation10 + $0x480] sm:$0xff]
    %v2162 = vld [vmem:[#allocation10 + $0x488] sm:$0xff]
    %v2163 = vld [vmem:[#allocation10 + $0x490] sm:$0xff]
    %v2164 = vld [vmem:[#allocation10 + $0x498] sm:$0xff]
    %v2165 = vld [vmem:[#allocation10 + $0x4a0] sm:$0xff]
    %v2166 = vld [vmem:[#allocation10 + $0x4a8] sm:$0xff]
    %v2167 = vld [vmem:[#allocation10 + $0x4b0] sm:$0xff]
    %v2168 = vld [vmem:[#allocation10 + $0x4b8] sm:$0xff]
    %v2169 = vld [vmem:[#allocation10 + $0x4c0] sm:$0xff]
    %v2170 = vld [vmem:[#allocation10 + $0x4c8] sm:$0xff]
    %v2171 = vld [vmem:[#allocation10 + $0x4d0] sm:$0xff]
    %v2172 = vld [vmem:[#allocation10 + $0x4d8] sm:$0xff]
    %v2173 = vld [vmem:[#allocation10 + $0x4e0] sm:$0xff]
    %v2174 = vld [vmem:[#allocation10 + $0x4e8] sm:$0xff]
    %v2175 = vld [vmem:[#allocation10 + $0x4f0] sm:$0xff]
    %v2176 = vld [vmem:[#allocation10 + $0x4f8] sm:$0xff]
    %v2177 = vld [vmem:[#allocation10 + $0x500] sm:$0xff]
    %v2178 = vld [vmem:[#allocation10 + $0x508] sm:$0xff]
    %v2179 = vld [vmem:[#allocation10 + $0x510] sm:$0xff]
    %v2180 = vld [vmem:[#allocation10 + $0x518] sm:$0xff]
    %v2181 = vld [vmem:[#allocation10 + $0x520] sm:$0xff]
    %v2182 = vld [vmem:[#allocation10 + $0x528] sm:$0xff]
    %v2183 = vld [vmem:[#allocation10 + $0x530] sm:$0xff]
    %v2184 = vld [vmem:[#allocation10 + $0x538] sm:$0xff]
    %v2185 = vld [vmem:[#allocation11] sm:$0x1]
    %v2187 = vlaneseq
    %v2188 = vshrl.u32 %v2187, 7
    %v2189 = vsub.s32 0, %v2188
    %v2190 = vrot.slane %v2185, %v2189
    %vm2192 = vcmask 523264
    %v2194 = vsel %vm2192, %v2016, 0
    %2196 = vmatprep.subr.mxu0 0.0
    %2197 = vmatpush1.msra.mxu0 %v2032
    %2198 = vmatprep.subr.mxu0 0.0
    %2199 = vmatpush1.msra.mxu0 %v2031
    %2200 = vmatprep.subr.mxu0 0.0
    %2201 = vmatpush1.msra.mxu0 %v2030
    %2202 = vmatprep.subr.mxu0 0.0
    %2203 = vmatpush1.msra.mxu0 %v2029
    %2204 = vmatprep.subr.mxu0 0.0
    %2205 = vmatpush1.msra.mxu0 %v2028
    %2206 = vmatprep.subr.mxu0 0.0
    %2207 = vmatpush1.msra.mxu0 %v2027
    %2208 = vmatprep.subr.mxu0 0.0
    %2209 = vmatpush1.msra.mxu0 %v2026
    %2210 = vmatprep.subr.mxu0 0.0
    %2211 = vmatpush1.msra.mxu0 %v2025
    %2212 = vmatprep.subr.mxu0 0.0
    %2213 = vmatpush1.msra.mxu0 %v2024
    %2214 = vmatprep.subr.mxu0 0.0
    %2215 = vmatpush1.msra.mxu0 %v2023
    %2216 = vmatprep.subr.mxu0 0.0
    %2217 = vmatpush1.msra.mxu0 %v2022
    %2218 = vmatprep.subr.mxu0 0.0
    %2219 = vmatpush1.msra.mxu0 %v2021
    %2220 = vmatprep.subr.mxu0 0.0
    %2221 = vmatpush1.msra.mxu0 %v2020
    %2222 = vmatprep.subr.mxu0 0.0
    %2223 = vmatpush1.msra.mxu0 %v2019
    %2224 = vmatprep.subr.mxu0 0.0
    %2225 = vmatpush1.msra.mxu0 %v2018
    %2226 = vmatprep.subr.mxu0 0.0
    %2227 = vmatpush1.msra.mxu0 %v2017
    %2228 = vmatprep.subr.mxu0 0.0
    %2229 = vmatpush2.msra.mxu0 %v2048
    %2230 = vmatprep.subr.mxu0 0.0
    %2231 = vmatpush2.msra.mxu0 %v2047
    %2232 = vmatprep.subr.mxu0 0.0
    %2233 = vmatpush2.msra.mxu0 %v2046
    %2234 = vmatprep.subr.mxu0 0.0
    %2235 = vmatpush2.msra.mxu0 %v2045
    %2236 = vmatprep.subr.mxu0 0.0
    %2237 = vmatpush2.msra.mxu0 %v2044
    %2238 = vmatprep.subr.mxu0 0.0
    %2239 = vmatpush2.msra.mxu0 %v2043
    %2240 = vmatprep.subr.mxu0 0.0
    %2241 = vmatpush2.msra.mxu0 %v2042
    %2242 = vmatprep.subr.mxu0 0.0
    %2243 = vmatpush2.msra.mxu0 %v2041
    %2244 = vmatprep.subr.mxu0 0.0
    %2245 = vmatpush2.msra.mxu0 %v2040
    %2246 = vmatprep.subr.mxu0 0.0
    %2247 = vmatpush2.msra.mxu0 %v2039
    %2248 = vmatprep.subr.mxu0 0.0
    %2249 = vmatpush2.msra.mxu0 %v2038
    %2250 = vmatprep.subr.mxu0 0.0
    %2251 = vmatpush2.msra.mxu0 %v2037
    %2252 = vmatprep.subr.mxu0 0.0
    %2253 = vmatpush2.msra.mxu0 %v2036
    %2254 = vmatprep.subr.mxu0 0.0
    %2255 = vmatpush2.msra.mxu0 %v2035
    %2256 = vmatprep.subr.mxu0 0.0
    %2257 = vmatpush2.msra.mxu0 %v2034
    %2258 = vmatprep.subr.mxu0 0.0
    %2259 = vmatpush2.msra.mxu0 %v2033
    %2260 = vmatprep.mubr.f32.mxu0 %v2007
    %2261 = vmatmul.mubr.f32.gmra.mxu0 %v2006
    %v2262 = vpop.f32.mrf.mxu0
    %v2263 = vadd.f32 %v2190, %v2262
    %v2264 = vpop.f32.mrf.mxu0
    %2265 = vdwg.mxu0
    %2266 = vmatprep.subr.mxu0 0.0
    %2267 = vmatpush1.msra.mxu0 %v2064
    %2268 = vmatprep.subr.mxu0 0.0
    %2269 = vmatpush1.msra.mxu0 %v2063
    %2270 = vmatprep.subr.mxu0 0.0
    %2271 = vmatpush1.msra.mxu0 %v2062
    %2272 = vmatprep.subr.mxu0 0.0
    %2273 = vmatpush1.msra.mxu0 %v2061
    %2274 = vmatprep.subr.mxu0 0.0
    %2275 = vmatpush1.msra.mxu0 %v2060
    %2276 = vmatprep.subr.mxu0 0.0
    %2277 = vmatpush1.msra.mxu0 %v2059
    %2278 = vmatprep.subr.mxu0 0.0
    %2279 = vmatpush1.msra.mxu0 %v2058
    %2280 = vmatprep.subr.mxu0 0.0
    %2281 = vmatpush1.msra.mxu0 %v2057
    %2282 = vmatprep.subr.mxu0 0.0
    %2283 = vmatpush1.msra.mxu0 %v2056
    %2284 = vmatprep.subr.mxu0 0.0
    %2285 = vmatpush1.msra.mxu0 %v2055
    %2286 = vmatprep.subr.mxu0 0.0
    %2287 = vmatpush1.msra.mxu0 %v2054
    %2288 = vmatprep.subr.mxu0 0.0
    %2289 = vmatpush1.msra.mxu0 %v2053
    %2290 = vmatprep.subr.mxu0 0.0
    %2291 = vmatpush1.msra.mxu0 %v2052
    %2292 = vmatprep.subr.mxu0 0.0
    %2293 = vmatpush1.msra.mxu0 %v2051
    %2294 = vmatprep.subr.mxu0 0.0
    %2295 = vmatpush1.msra.mxu0 %v2050
    %2296 = vmatprep.subr.mxu0 0.0
    %2297 = vmatpush1.msra.mxu0 %v2049
    %2298 = vmatprep.subr.mxu0 0.0
    %2299 = vmatpush2.msra.mxu0 %v2080
    %2300 = vmatprep.subr.mxu0 0.0
    %2301 = vmatpush2.msra.mxu0 %v2079
    %2302 = vmatprep.subr.mxu0 0.0
    %2303 = vmatpush2.msra.mxu0 %v2078
    %2304 = vmatprep.subr.mxu0 0.0
    %2305 = vmatpush2.msra.mxu0 %v2077
    %2306 = vmatprep.subr.mxu0 0.0
    %2307 = vmatpush2.msra.mxu0 %v2076
    %2308 = vmatprep.subr.mxu0 0.0
    %2309 = vmatpush2.msra.mxu0 %v2075
    %2310 = vmatprep.subr.mxu0 0.0
    %2311 = vmatpush2.msra.mxu0 %v2074
    %2312 = vmatprep.subr.mxu0 0.0
    %2313 = vmatpush2.msra.mxu0 %v2073
    %2314 = vmatprep.subr.mxu0 0.0
    %2315 = vmatpush2.msra.mxu0 %v2072
    %2316 = vmatprep.subr.mxu0 0.0
    %2317 = vmatpush2.msra.mxu0 %v2071
    %2318 = vmatprep.subr.mxu0 0.0
    %2319 = vmatpush2.msra.mxu0 %v2070
    %2320 = vmatprep.subr.mxu0 0.0
    %2321 = vmatpush2.msra.mxu0 %v2069
    %2322 = vmatprep.subr.mxu0 0.0
    %2323 = vmatpush2.msra.mxu0 %v2068
    %2324 = vmatprep.subr.mxu0 0.0
    %2325 = vmatpush2.msra.mxu0 %v2067
    %2326 = vmatprep.subr.mxu0 0.0
    %2327 = vmatpush2.msra.mxu0 %v2066
    %2328 = vmatprep.subr.mxu0 0.0
    %2329 = vmatpush2.msra.mxu0 %v2065
    %2330 = vmatprep.mubr.f32.mxu0 %v2009
    %2331 = vmatmul.mubr.f32.gmra.mxu0 %v2008
    %v2332 = vpop.f32.mrf.mxu0
    %v2333 = vadd.f32 %v2263, %v2332
    %v2334 = vpop.f32.mrf.mxu0
    %2335 = vdwg.mxu0
    %2336 = vmatprep.subr.mxu0 0.0
    %2337 = vmatpush1.msra.mxu0 %v2096
    %2338 = vmatprep.subr.mxu0 0.0
    %2339 = vmatpush1.msra.mxu0 %v2095
    %2340 = vmatprep.subr.mxu0 0.0
    %2341 = vmatpush1.msra.mxu0 %v2094
    %2342 = vmatprep.subr.mxu0 0.0
    %2343 = vmatpush1.msra.mxu0 %v2093
    %2344 = vmatprep.subr.mxu0 0.0
    %2345 = vmatpush1.msra.mxu0 %v2092
    %2346 = vmatprep.subr.mxu0 0.0
    %2347 = vmatpush1.msra.mxu0 %v2091
    %2348 = vmatprep.subr.mxu0 0.0
    %2349 = vmatpush1.msra.mxu0 %v2090
    %2350 = vmatprep.subr.mxu0 0.0
    %2351 = vmatpush1.msra.mxu0 %v2089
    %2352 = vmatprep.subr.mxu0 0.0
    %2353 = vmatpush1.msra.mxu0 %v2088
    %2354 = vmatprep.subr.mxu0 0.0
    %2355 = vmatpush1.msra.mxu0 %v2087
    %2356 = vmatprep.subr.mxu0 0.0
    %2357 = vmatpush1.msra.mxu0 %v2086
    %2358 = vmatprep.subr.mxu0 0.0
    %2359 = vmatpush1.msra.mxu0 %v2085
    %2360 = vmatprep.subr.mxu0 0.0
    %2361 = vmatpush1.msra.mxu0 %v2084
    %2362 = vmatprep.subr.mxu0 0.0
    %2363 = vmatpush1.msra.mxu0 %v2083
    %2364 = vmatprep.subr.mxu0 0.0
    %2365 = vmatpush1.msra.mxu0 %v2082
    %2366 = vmatprep.subr.mxu0 0.0
    %2367 = vmatpush1.msra.mxu0 %v2081
    %2368 = vmatprep.subr.mxu0 0.0
    %2369 = vmatpush2.msra.mxu0 %v2112
    %2370 = vmatprep.subr.mxu0 0.0
    %2371 = vmatpush2.msra.mxu0 %v2111
    %2372 = vmatprep.subr.mxu0 0.0
    %2373 = vmatpush2.msra.mxu0 %v2110
    %2374 = vmatprep.subr.mxu0 0.0
    %2375 = vmatpush2.msra.mxu0 %v2109
    %2376 = vmatprep.subr.mxu0 0.0
    %2377 = vmatpush2.msra.mxu0 %v2108
    %2378 = vmatprep.subr.mxu0 0.0
    %2379 = vmatpush2.msra.mxu0 %v2107
    %2380 = vmatprep.subr.mxu0 0.0
    %2381 = vmatpush2.msra.mxu0 %v2106
    %2382 = vmatprep.subr.mxu0 0.0
    %2383 = vmatpush2.msra.mxu0 %v2105
    %2384 = vmatprep.subr.mxu0 0.0
    %2385 = vmatpush2.msra.mxu0 %v2104
    %2386 = vmatprep.subr.mxu0 0.0
    %2387 = vmatpush2.msra.mxu0 %v2103
    %2388 = vmatprep.subr.mxu0 0.0
    %2389 = vmatpush2.msra.mxu0 %v2102
    %2390 = vmatprep.subr.mxu0 0.0
    %2391 = vmatpush2.msra.mxu0 %v2101
    %2392 = vmatprep.subr.mxu0 0.0
    %2393 = vmatpush2.msra.mxu0 %v2100
    %2394 = vmatprep.subr.mxu0 0.0
    %2395 = vmatpush2.msra.mxu0 %v2099
    %2396 = vmatprep.subr.mxu0 0.0
    %2397 = vmatpush2.msra.mxu0 %v2098
    %2398 = vmatprep.subr.mxu0 0.0
    %2399 = vmatpush2.msra.mxu0 %v2097
    %2400 = vmatprep.mubr.f32.mxu0 %v2011
    %2401 = vmatmul.mubr.f32.gmra.mxu0 %v2010
    %v2402 = vpop.f32.mrf.mxu0
    %v2403 = vadd.f32 %v2333, %v2402
    %v2404 = vpop.f32.mrf.mxu0
    %2405 = vdwg.mxu0
    %2406 = vmatprep.subr.mxu0 0.0
    %2407 = vmatpush1.msra.mxu0 %v2128
    %2408 = vmatprep.subr.mxu0 0.0
    %2409 = vmatpush1.msra.mxu0 %v2127
    %2410 = vmatprep.subr.mxu0 0.0
    %2411 = vmatpush1.msra.mxu0 %v2126
    %2412 = vmatprep.subr.mxu0 0.0
    %2413 = vmatpush1.msra.mxu0 %v2125
    %2414 = vmatprep.subr.mxu0 0.0
    %2415 = vmatpush1.msra.mxu0 %v2124
    %2416 = vmatprep.subr.mxu0 0.0
    %2417 = vmatpush1.msra.mxu0 %v2123
    %2418 = vmatprep.subr.mxu0 0.0
    %2419 = vmatpush1.msra.mxu0 %v2122
    %2420 = vmatprep.subr.mxu0 0.0
    %2421 = vmatpush1.msra.mxu0 %v2121
    %2422 = vmatprep.subr.mxu0 0.0
    %2423 = vmatpush1.msra.mxu0 %v2120
    %2424 = vmatprep.subr.mxu0 0.0
    %2425 = vmatpush1.msra.mxu0 %v2119
    %2426 = vmatprep.subr.mxu0 0.0
    %2427 = vmatpush1.msra.mxu0 %v2118
    %2428 = vmatprep.subr.mxu0 0.0
    %2429 = vmatpush1.msra.mxu0 %v2117
    %2430 = vmatprep.subr.mxu0 0.0
    %2431 = vmatpush1.msra.mxu0 %v2116
    %2432 = vmatprep.subr.mxu0 0.0
    %2433 = vmatpush1.msra.mxu0 %v2115
    %2434 = vmatprep.subr.mxu0 0.0
    %2435 = vmatpush1.msra.mxu0 %v2114
    %2436 = vmatprep.subr.mxu0 0.0
    %2437 = vmatpush1.msra.mxu0 %v2113
    %2438 = vmatprep.subr.mxu0 0.0
    %2439 = vmatpush2.msra.mxu0 %v2144
    %2440 = vmatprep.subr.mxu0 0.0
    %2441 = vmatpush2.msra.mxu0 %v2143
    %2442 = vmatprep.subr.mxu0 0.0
    %2443 = vmatpush2.msra.mxu0 %v2142
    %2444 = vmatprep.subr.mxu0 0.0
    %2445 = vmatpush2.msra.mxu0 %v2141
    %2446 = vmatprep.subr.mxu0 0.0
    %2447 = vmatpush2.msra.mxu0 %v2140
    %2448 = vmatprep.subr.mxu0 0.0
    %2449 = vmatpush2.msra.mxu0 %v2139
    %2450 = vmatprep.subr.mxu0 0.0
    %2451 = vmatpush2.msra.mxu0 %v2138
    %2452 = vmatprep.subr.mxu0 0.0
    %2453 = vmatpush2.msra.mxu0 %v2137
    %2454 = vmatprep.subr.mxu0 0.0
    %2455 = vmatpush2.msra.mxu0 %v2136
    %2456 = vmatprep.subr.mxu0 0.0
    %2457 = vmatpush2.msra.mxu0 %v2135
    %2458 = vmatprep.subr.mxu0 0.0
    %2459 = vmatpush2.msra.mxu0 %v2134
    %2460 = vmatprep.subr.mxu0 0.0
    %2461 = vmatpush2.msra.mxu0 %v2133
    %2462 = vmatprep.subr.mxu0 0.0
    %2463 = vmatpush2.msra.mxu0 %v2132
    %2464 = vmatprep.subr.mxu0 0.0
    %2465 = vmatpush2.msra.mxu0 %v2131
    %2466 = vmatprep.subr.mxu0 0.0
    %2467 = vmatpush2.msra.mxu0 %v2130
    %2468 = vmatprep.subr.mxu0 0.0
    %2469 = vmatpush2.msra.mxu0 %v2129
    %2470 = vmatprep.mubr.f32.mxu0 %v2013
    %2471 = vmatmul.mubr.f32.gmra.mxu0 %v2012
    %v2472 = vpop.f32.mrf.mxu0
    %v2473 = vadd.f32 %v2403, %v2472
    %v2474 = vpop.f32.mrf.mxu0
    %2475 = vdwg.mxu0
    %2476 = vmatprep.subr.mxu0 0.0
    %2477 = vmatpush1.msra.mxu0 %v2160
    %2478 = vmatprep.subr.mxu0 0.0
    %2479 = vmatpush1.msra.mxu0 %v2159
    %2480 = vmatprep.subr.mxu0 0.0
    %2481 = vmatpush1.msra.mxu0 %v2158
    %2482 = vmatprep.subr.mxu0 0.0
    %2483 = vmatpush1.msra.mxu0 %v2157
    %2484 = vmatprep.subr.mxu0 0.0
    %2485 = vmatpush1.msra.mxu0 %v2156
    %2486 = vmatprep.subr.mxu0 0.0
    %2487 = vmatpush1.msra.mxu0 %v2155
    %2488 = vmatprep.subr.mxu0 0.0
    %2489 = vmatpush1.msra.mxu0 %v2154
    %2490 = vmatprep.subr.mxu0 0.0
    %2491 = vmatpush1.msra.mxu0 %v2153
    %2492 = vmatprep.subr.mxu0 0.0
    %2493 = vmatpush1.msra.mxu0 %v2152
    %2494 = vmatprep.subr.mxu0 0.0
    %2495 = vmatpush1.msra.mxu0 %v2151
    %2496 = vmatprep.subr.mxu0 0.0
    %2497 = vmatpush1.msra.mxu0 %v2150
    %2498 = vmatprep.subr.mxu0 0.0
    %2499 = vmatpush1.msra.mxu0 %v2149
    %2500 = vmatprep.subr.mxu0 0.0
    %2501 = vmatpush1.msra.mxu0 %v2148
    %2502 = vmatprep.subr.mxu0 0.0
    %2503 = vmatpush1.msra.mxu0 %v2147
    %2504 = vmatprep.subr.mxu0 0.0
    %2505 = vmatpush1.msra.mxu0 %v2146
    %2506 = vmatprep.subr.mxu0 0.0
    %2507 = vmatpush1.msra.mxu0 %v2145
    %2508 = vmatprep.subr.mxu0 0.0
    %2509 = vmatpush2.msra.mxu0 %v2176
    %2510 = vmatprep.subr.mxu0 0.0
    %2511 = vmatpush2.msra.mxu0 %v2175
    %2512 = vmatprep.subr.mxu0 0.0
    %2513 = vmatpush2.msra.mxu0 %v2174
    %2514 = vmatprep.subr.mxu0 0.0
    %2515 = vmatpush2.msra.mxu0 %v2173
    %2516 = vmatprep.subr.mxu0 0.0
    %2517 = vmatpush2.msra.mxu0 %v2172
    %2518 = vmatprep.subr.mxu0 0.0
    %2519 = vmatpush2.msra.mxu0 %v2171
    %2520 = vmatprep.subr.mxu0 0.0
    %2521 = vmatpush2.msra.mxu0 %v2170
    %2522 = vmatprep.subr.mxu0 0.0
    %2523 = vmatpush2.msra.mxu0 %v2169
    %2524 = vmatprep.subr.mxu0 0.0
    %2525 = vmatpush2.msra.mxu0 %v2168
    %2526 = vmatprep.subr.mxu0 0.0
    %2527 = vmatpush2.msra.mxu0 %v2167
    %2528 = vmatprep.subr.mxu0 0.0
    %2529 = vmatpush2.msra.mxu0 %v2166
    %2530 = vmatprep.subr.mxu0 0.0
    %2531 = vmatpush2.msra.mxu0 %v2165
    %2532 = vmatprep.subr.mxu0 0.0
    %2533 = vmatpush2.msra.mxu0 %v2164
    %2534 = vmatprep.subr.mxu0 0.0
    %2535 = vmatpush2.msra.mxu0 %v2163
    %2536 = vmatprep.subr.mxu0 0.0
    %2537 = vmatpush2.msra.mxu0 %v2162
    %2538 = vmatprep.subr.mxu0 0.0
    %2539 = vmatpush2.msra.mxu0 %v2161
    %2540 = vmatprep.mubr.f32.mxu0 %v2015
    %2541 = vmatmul.mubr.f32.gmra.mxu0 %v2014
    %v2542 = vpop.f32.mrf.mxu0
    %v2543 = vadd.f32 %v2473, %v2542
    %v2544 = vpop.f32.mrf.mxu0
    %2545 = vdwg.mxu0
    %2546 = vmatprep.subr.mxu0 0.0
    %2547 = vmatpush1.msra.mxu0 0.0
    %2548 = vmatprep.subr.mxu0 0.0
    %2549 = vmatpush1.msra.mxu0 0.0
    %2550 = vmatprep.subr.mxu0 0.0
    %2551 = vmatpush1.msra.mxu0 0.0
    %2552 = vmatprep.subr.mxu0 0.0
    %2553 = vmatpush1.msra.mxu0 0.0
    %2554 = vmatprep.subr.mxu0 0.0
    %2555 = vmatpush1.msra.mxu0 0.0
    %2556 = vmatprep.subr.mxu0 0.0
    %2557 = vmatpush1.msra.mxu0 0.0
    %2558 = vmatprep.subr.mxu0 0.0
    %2559 = vmatpush1.msra.mxu0 0.0
    %2560 = vmatprep.subr.mxu0 0.0
    %2561 = vmatpush1.msra.mxu0 0.0
    %2562 = vmatprep.subr.mxu0 0.0
    %2563 = vmatpush1.msra.mxu0 %v2184
    %2564 = vmatprep.subr.mxu0 0.0
    %2565 = vmatpush1.msra.mxu0 %v2183
    %2566 = vmatprep.subr.mxu0 0.0
    %2567 = vmatpush1.msra.mxu0 %v2182
    %2568 = vmatprep.subr.mxu0 0.0
    %2569 = vmatpush1.msra.mxu0 %v2181
    %2570 = vmatprep.subr.mxu0 0.0
    %2571 = vmatpush1.msra.mxu0 %v2180
    %2572 = vmatprep.subr.mxu0 0.0
    %2573 = vmatpush1.msra.mxu0 %v2179
    %2574 = vmatprep.subr.mxu0 0.0
    %2575 = vmatpush1.msra.mxu0 %v2178
    %2576 = vmatprep.subr.mxu0 0.0
    %2577 = vmatpush1.msra.mxu0 %v2177
    %2578 = vmatprep.subr.mxu0 0.0
    %2579 = vmatpush2.msra.mxu0 0.0
    %2580 = vmatprep.subr.mxu0 0.0
    %2581 = vmatpush2.msra.mxu0 0.0
    %2582 = vmatprep.subr.mxu0 0.0
    %2583 = vmatpush2.msra.mxu0 0.0
    %2584 = vmatprep.subr.mxu0 0.0
    %2585 = vmatpush2.msra.mxu0 0.0
    %2586 = vmatprep.subr.mxu0 0.0
    %2587 = vmatpush2.msra.mxu0 0.0
    %2588 = vmatprep.subr.mxu0 0.0
    %2589 = vmatpush2.msra.mxu0 0.0
    %2590 = vmatprep.subr.mxu0 0.0
    %2591 = vmatpush2.msra.mxu0 0.0
    %2592 = vmatprep.subr.mxu0 0.0
    %2593 = vmatpush2.msra.mxu0 0.0
    %2594 = vmatprep.subr.mxu0 0.0
    %2595 = vmatpush2.msra.mxu0 0.0
    %2596 = vmatprep.subr.mxu0 0.0
    %2597 = vmatpush2.msra.mxu0 0.0
    %2598 = vmatprep.subr.mxu0 0.0
    %2599 = vmatpush2.msra.mxu0 0.0
    %2600 = vmatprep.subr.mxu0 0.0
    %2601 = vmatpush2.msra.mxu0 0.0
    %2602 = vmatprep.subr.mxu0 0.0
    %2603 = vmatpush2.msra.mxu0 0.0
    %2604 = vmatprep.subr.mxu0 0.0
    %2605 = vmatpush2.msra.mxu0 0.0
    %2606 = vmatprep.subr.mxu0 0.0
    %2607 = vmatpush2.msra.mxu0 0.0
    %2608 = vmatprep.subr.mxu0 0.0
    %2609 = vmatpush2.msra.mxu0 0.0
    %2610 = vmatprep.mubr.f32.mxu0 0.0
    %2611 = vmatmul.mubr.f32.gmra.mxu0 %v2194
    %v2612 = vpop.f32.mrf.mxu0
    %v2613 = vadd.f32 %v2543, %v2612
    %v2614 = vpop.f32.mrf.mxu0
    %2615 = vdwg.mxu0
    %v2616 = vmax.f32 %v2613, 0.0
    %v2617 = vld [vmem:[#allocation13] sm:$0xff]
    %v2618 = vld [vmem:[#allocation13 + $0x8] sm:$0xff]
    %v2619 = vld [vmem:[#allocation13 + $0x10] sm:$0xff]
    %v2620 = vld [vmem:[#allocation13 + $0x18] sm:$0xff]
    %v2621 = vld [vmem:[#allocation13 + $0x20] sm:$0xff]
    %v2622 = vld [vmem:[#allocation13 + $0x28] sm:$0xff]
    %v2623 = vld [vmem:[#allocation13 + $0x30] sm:$0xff]
    %v2624 = vld [vmem:[#allocation13 + $0x38] sm:$0xff]
    %v2625 = vld [vmem:[#allocation13 + $0x40] sm:$0xff]
    %v2626 = vld [vmem:[#allocation13 + $0x48] sm:$0xff]
    %v2627 = vld [vmem:[#allocation13 + $0x50] sm:$0xff]
    %v2628 = vld [vmem:[#allocation13 + $0x58] sm:$0xff]
    %v2629 = vld [vmem:[#allocation13 + $0x60] sm:$0xff]
    %v2630 = vld [vmem:[#allocation13 + $0x68] sm:$0xff]
    %v2631 = vld [vmem:[#allocation13 + $0x70] sm:$0xff]
    %v2632 = vld [vmem:[#allocation13 + $0x78] sm:$0xff]
    %v2633 = vld [vmem:[#allocation14] sm:$0x1]
    %v2635 = vlaneseq
    %v2636 = vshrl.u32 %v2635, 7
    %v2637 = vsub.s32 0, %v2636
    %v2638 = vrot.slane %v2633, %v2637
    %2640 = vmatprep.subr.mxu0 0.0
    %2641 = vmatpush1.msra.mxu0 %v2632
    %2642 = vmatprep.subr.mxu0 0.0
    %2643 = vmatpush1.msra.mxu0 %v2631
    %2644 = vmatprep.subr.mxu0 0.0
    %2645 = vmatpush1.msra.mxu0 %v2630
    %2646 = vmatprep.subr.mxu0 0.0
    %2647 = vmatpush1.msra.mxu0 %v2629
    %2648 = vmatprep.subr.mxu0 0.0
    %2649 = vmatpush1.msra.mxu0 %v2628
    %2650 = vmatprep.subr.mxu0 0.0
    %2651 = vmatpush1.msra.mxu0 %v2627
    %2652 = vmatprep.subr.mxu0 0.0
    %2653 = vmatpush1.msra.mxu0 %v2626
    %2654 = vmatprep.subr.mxu0 0.0
    %2655 = vmatpush1.msra.mxu0 %v2625
    %2656 = vmatprep.subr.mxu0 0.0
    %2657 = vmatpush1.msra.mxu0 %v2624
    %2658 = vmatprep.subr.mxu0 0.0
    %2659 = vmatpush1.msra.mxu0 %v2623
    %2660 = vmatprep.subr.mxu0 0.0
    %2661 = vmatpush1.msra.mxu0 %v2622
    %2662 = vmatprep.subr.mxu0 0.0
    %2663 = vmatpush1.msra.mxu0 %v2621
    %2664 = vmatprep.subr.mxu0 0.0
    %2665 = vmatpush1.msra.mxu0 %v2620
    %2666 = vmatprep.subr.mxu0 0.0
    %2667 = vmatpush1.msra.mxu0 %v2619
    %2668 = vmatprep.subr.mxu0 0.0
    %2669 = vmatpush1.msra.mxu0 %v2618
    %2670 = vmatprep.subr.mxu0 0.0
    %2671 = vmatpush1.msra.mxu0 %v2617
    %2672 = vmatprep.subr.mxu0 0.0
    %2673 = vmatpush2.msra.mxu0 0.0
    %2674 = vmatprep.subr.mxu0 0.0
    %2675 = vmatpush2.msra.mxu0 0.0
    %2676 = vmatprep.subr.mxu0 0.0
    %2677 = vmatpush2.msra.mxu0 0.0
    %2678 = vmatprep.subr.mxu0 0.0
    %2679 = vmatpush2.msra.mxu0 0.0
    %2680 = vmatprep.subr.mxu0 0.0
    %2681 = vmatpush2.msra.mxu0 0.0
    %2682 = vmatprep.subr.mxu0 0.0
    %2683 = vmatpush2.msra.mxu0 0.0
    %2684 = vmatprep.subr.mxu0 0.0
    %2685 = vmatpush2.msra.mxu0 0.0
    %2686 = vmatprep.subr.mxu0 0.0
    %2687 = vmatpush2.msra.mxu0 0.0
    %2688 = vmatprep.subr.mxu0 0.0
    %2689 = vmatpush2.msra.mxu0 0.0
    %2690 = vmatprep.subr.mxu0 0.0
    %2691 = vmatpush2.msra.mxu0 0.0
    %2692 = vmatprep.subr.mxu0 0.0
    %2693 = vmatpush2.msra.mxu0 0.0
    %2694 = vmatprep.subr.mxu0 0.0
    %2695 = vmatpush2.msra.mxu0 0.0
    %2696 = vmatprep.subr.mxu0 0.0
    %2697 = vmatpush2.msra.mxu0 0.0
    %2698 = vmatprep.subr.mxu0 0.0
    %2699 = vmatpush2.msra.mxu0 0.0
    %2700 = vmatprep.subr.mxu0 0.0
    %2701 = vmatpush2.msra.mxu0 0.0
    %2702 = vmatprep.subr.mxu0 0.0
    %2703 = vmatpush2.msra.mxu0 0.0
    %2704 = vmatprep.mubr.f32.mxu0 0.0
    %2705 = vmatmul.mubr.f32.gmra.mxu0 %v2616
    %v2706 = vpop.f32.mrf.mxu0
    %v2707 = vadd.f32 %v2638, %v2706
    %v2708 = vpop.f32.mrf.mxu0
    %2709 = vdwg.mxu0
    %vm2710 = vcmask 214016
    %v2711 = vsel %vm2710, %v2707, -inf
    %2712 = vmax.xlane.f32.xlu0 %v2711
    %v2713 = vpop.xlane.xlu0 %2712
    %v2714 = vsub.f32 %v2707, %v2713
    %v2715 = vmul.f32 %v2714, 1.442695
    %v2716 = vpow.pop %v2715
    %v2717 = vsel %vm2710, %v2716, 0.0
    %2718 = vadd.xlane.f32.xlu0 %v2717
    %v2719 = vpop.xlane.xlu0 %2718
    %v2720 = vrcp.pop %v2719
    %v2721 = vmul.f32 %v2719, %v2720
    %v2722 = vsub.f32 2.0, %v2721
    %v2723 = vmul.f32 %v2720, %v2722
    %v2724 = vmul.f32 %v2716, %v2723
    %2725 = vst.msk [vmem:[#allocation16] sm:$0x3] %vm2710, %v2724
    // Predicated region
    $region70: #{_lambda_.1} parent=1 // pred_check
      _
    $region71: #{_lambda_.1} parent=1 // pred_check_branch
      %2727 = sbr.rel (0) target = $region73
    $region72: #{_lambda_.1} parent=1 // pred_region
      %s2729 = ssub.s32 32, 32
      %2730 = vsyncadd [#allocation4], %s2729
      %s2732 = sshll.u32 [#allocation16], 4
      %s2733 = int_to_ptr.vmem [resolvable:$true] %s2732
      %2735 = dma.vmem_to_hbm [thread:$0]  %s2733, 32, %s9, [#allocation4]
    $region73: #{_lambda_.1} parent=1 // pred_fallthru
      _
    // Predicated region
    $region74: #{_lambda_.1} parent=1 // pred_check
      _
    $region75: #{_lambda_.1} parent=1 // pred_check_branch
      %2737 = sbr.rel (0) target = $region77
    $region76: #{_lambda_.1} parent=1 // pred_region
      %2738 = dma.done [#allocation4], 32
    $region77: #{_lambda_.1} parent=1 // pred_fallthru
      _
    %2739 = vsyncpa [#allocation3], 1
    %2740 = vsyncpa [#allocation6], 1
    %2741 = vsyncpa [#allocation9], 1
    %2742 = vsyncpa [#allocation12], 1
    %2743 = vsyncpa [#allocation15], 1
    %2744 = vsyncpa [#allocation4], 1

</llo_original>
